<compile_context>
chip_gen: v7x
topology: tpu7x:2x2x1
jax: 0.10.0
libtpu: 0.0.40
codegen_flags: <defaults>
</compile_context>

<pallas_src>
import functools

import jax
import jax.numpy as jnp
from jax.experimental import pallas as pl
from jax.experimental.pallas import tpu as pltpu

_LANE = 128
_SUB = 8


# ----------------------------------------------------------------------------
# Pallas kernel: per grid step, compute the SSD positive-prior mask for
# `bt` batch rows.  priors_ref is (4, R, 128) point-form (dense tiles),
# truths are flat f32 scalars in SMEM, nvalid is a scalar-prefetch (B,) int32.
# ----------------------------------------------------------------------------
def _pos_kernel(nvalid_ref, truths_ref, priors_ref, pos_ref, *, nobj, bt, threshold):
    step = pl.program_id(0)

    # Prior areas are loop-invariant; compute once per grid step.
    # TODO(synk): if a bundle dump shows this spilling across the truth loop,
    # stash it in a (R,128) VMEM scratch and reload per truth instead.
    prior_area = (priors_ref[2] - priors_ref[0]) * (priors_ref[3] - priors_ref[1])  # (R,128)

    def one_row(bi):
        b = step * bt + bi
        base = b * (nobj * 4)
        nv = nvalid_ref[b]  # number of real (non-padded) ground-truth objects

        acc = None  # boolean accumulator; convert to int32 only at the store
        # Static unroll over truths with validity masking: the LLO scheduler can
        # overlap truth t+1's VALU/EUP work under truth t's XLU max.
        for t in range(nobj):
            off = base + t * 4
            tx1 = truths_ref[off]
            ty1 = truths_ref[off + 1]
            tx2 = truths_ref[off + 2]
            ty2 = truths_ref[off + 3]

            # Re-load coord planes from VMEM inside the loop (vld slots have
            # slack; keeps the persistent vreg live-set small).
            px1 = priors_ref[0]
            py1 = priors_ref[1]
            px2 = priors_ref[2]
            py2 = priors_ref[3]

            iw = jnp.maximum(jnp.minimum(px2, tx2) - jnp.maximum(px1, tx1), 0.0)
            ih = jnp.maximum(jnp.minimum(py2, ty2) - jnp.maximum(py1, ty1), 0.0)
            inter = iw * ih                                   # (R,128)
            t_area = (tx2 - tx1) * (ty2 - ty1)                # scalar
            union = t_area + prior_area - inter               # > 0 for valid truths

            # EUP approx reciprocal + one Newton step (threshold and forcing
            # both use these same values, so the test stays self-consistent).
            r = pl.reciprocal(union, approx=True)
            r = r * (2.0 - union * r)
            iou = inter * r

            # Fused threshold/forced compare:
            #   hit = iou >= min(threshold, max_iou)
            # guarded so a no-overlap truth (max_iou == 0) falls back to the
            # plain threshold test (never forces every tied-at-zero prior), and
            # invalid (padded) truth rows get cut = +inf so they contribute
            # nothing (NaNs from degenerate rows also compare False).
            max_iou = jnp.max(iou)                            # scalar (XLU reduce)
            cut = jnp.where(max_iou > 0.0, jnp.minimum(threshold, max_iou), threshold)
            cut = jnp.where(t < nv, cut, jnp.inf)
            hit = iou >= cut
            # NOTE: when several priors tie at a truth's (positive) max IoU, all
            # of them are forced (torch argmax forces only the first) --
            # acceptable for the pos mask.
            acc = hit if acc is None else (acc | hit)

        pos_ref[bi] = acc.astype(jnp.int32)

    if bt <= 4:
        # Small static unroll over the batch rows of this step.
        for bi in range(bt):
            one_row(bi)
    else:
        # Fat steps: loop boundary bounds vreg live ranges / code size.
        @pl.loop(0, bt)
        def _(bi):
            one_row(bi)


# ----------------------------------------------------------------------------
# Prior preprocessing (static per model -- call once and cache the result).
# ----------------------------------------------------------------------------
def prepare_priors(priors_center_size):
    """(P, 4) [cx,cy,w,h] -> ((4, R, 128) point-form dense tiles, P)."""
    P = priors_center_size.shape[0]
    cx, cy, w, h = (priors_center_size[:, i].astype(jnp.float32) for i in range(4))
    priors_pt = jnp.stack(
        [cx - w / 2.0, cy - h / 2.0, cx + w / 2.0, cy + h / 2.0], axis=0
    )  # (4, P) point form

    # Pad the prior axis to a multiple of 8*128 so each coordinate plane is a
    # fully dense (R, 128) tile with R a multiple of 8 (full vregs on the VPU).
    Pp = ((P + _SUB * _LANE - 1) // (_SUB * _LANE)) * (_SUB * _LANE)
    if Pp != P:
        pad = jnp.full((4, Pp - P), -4.0, jnp.float32)  # degenerate far-away priors -> IoU 0
        priors_pt = jnp.concatenate([priors_pt, pad], axis=1)
    R = Pp // _LANE
    return priors_pt.reshape(4, R, _LANE), P


def _default_batch_tile(B):
    if B < 2:
        return max(B, 1)
    # Fattest tiling that keeps >= 2 grid steps: both v7x TensorCores get work,
    # while single-TC v5e/v6e only pay 2x the per-step overhead.
    for d in range(B // 2, 0, -1):
        if B % d == 0:
            return d
    return 1


# ----------------------------------------------------------------------------
# Wrapper (POSdata.forward with mode='pos')
# ----------------------------------------------------------------------------
def posdata_forward_pos(targets, priors, num_valid=None, *, threshold=0.5,
                        batch_tile=None, return_dense=False):
    """targets: (B, NOBJ, 5) [x1,y1,x2,y2,label];
    priors: (P, 4) [cx,cy,w,h] center-size form OR the cached prepare_priors(...)
    tuple; num_valid: (B,) int number of real objects per image (padding rows
    trail).  Returns pos mask (B, P) bool, matching `conf_t > 0`
    (or the lane-dense (B, R, 128) int32 slab if return_dense=True)."""
    if isinstance(priors, tuple):
        priors_dense, P = priors
    else:
        priors_dense, P = prepare_priors(priors)
    R = priors_dense.shape[1]
    Pp = R * _LANE

    B, NOBJ, _ = targets.shape
    if batch_tile is None:
        batch_tile = _default_batch_tile(B)
    assert B % batch_tile == 0, "batch must be divisible by batch_tile"

    truths = targets[..., :4].astype(jnp.float32)
    if num_valid is None:
        valid = (truths[..., 2] > truths[..., 0]) & (truths[..., 3] > truths[..., 1])
        num_valid = valid.sum(axis=-1)
    num_valid = num_valid.astype(jnp.int32)

    truths_flat = truths.reshape(-1)  # (B*NOBJ*4,) -> 1-D SMEM (avoid 2-D SMEM padding)

    kernel = functools.partial(_pos_kernel, nobj=NOBJ, bt=batch_tile,
                               threshold=float(threshold))

    pos_i32 = pl.pallas_call(
        kernel,
        out_shape=jax.ShapeDtypeStruct((B, R, _LANE), jnp.int32),
        grid_spec=pltpu.PrefetchScalarGridSpec(
            num_scalar_prefetch=1,            # num_valid -> SMEM, read as scalars
            grid=(B // batch_tile,),
            in_specs=[
                pl.BlockSpec(memory_space=pltpu.MemorySpace.SMEM),       # truths (scalar reads)
                pl.BlockSpec((4, R, _LANE), lambda i, nv: (0, 0, 0)),    # priors, resident
            ],
            out_specs=pl.BlockSpec((batch_tile, R, _LANE), lambda i, nv: (i, 0, 0)),
        ),
        compiler_params=pltpu.CompilerParams(
            dimension_semantics=("parallel",)   # batch steps shard across TCs (v7x)
        ),
    )(num_valid, truths_flat, priors_dense)

    if return_dense:
        return pos_i32                                   # (B, R, 128) int32, lane-dense
    return pos_i32.reshape(B, Pp)[:, :P].astype(jnp.bool_)


# ----------------------------------------------------------------------------
# Pure-JAX reference reproducing the PyTorch `match` -> pos semantics
# (only the first num_valid truth rows per image are real objects).
# ----------------------------------------------------------------------------
def ref_pos(targets, priors_center_size, num_valid, threshold=0.5):
    truths = targets[..., :4].astype(jnp.float32)
    cx, cy, w, h = (priors_center_size[:, i].astype(jnp.float32) for i in range(4))
    pp = jnp.stack([cx - w / 2, cy - h / 2, cx + w / 2, cy + h / 2], axis=1)  # (P,4)

    def one(tr, nv):  # tr: (NOBJ, 4)
        ix1 = jnp.maximum(tr[:, None, 0], pp[None, :, 0])
        iy1 = jnp.maximum(tr[:, None, 1], pp[None, :, 1])
        ix2 = jnp.minimum(tr[:, None, 2], pp[None, :, 2])
        iy2 = jnp.minimum(tr[:, None, 3], pp[None, :, 3])
        inter = jnp.maximum(ix2 - ix1, 0.0) * jnp.maximum(iy2 - iy1, 0.0)
        area_t = ((tr[:, 2] - tr[:, 0]) * (tr[:, 3] - tr[:, 1]))[:, None]
        area_p = ((pp[:, 2] - pp[:, 0]) * (pp[:, 3] - pp[:, 1]))[None, :]
        ov = inter / (area_t + area_p - inter)                 # (NOBJ, P)
        valid = jnp.arange(tr.shape[0]) < nv
        ov = jnp.where(valid[:, None], ov, -1.0)
        best_truth_overlap = ov.max(axis=0)                    # (P,)
        best_prior_idx = ov.argmax(axis=1)                     # (NOBJ,)
        force = jnp.where(valid, 2.0, -1.0)                    # only valid truths force
        best_truth_overlap = best_truth_overlap.at[best_prior_idx].max(force)
        return best_truth_overlap >= threshold

    return jax.vmap(one)(truths, num_valid)


if __name__ == "__main__":
    B, NOBJ, P = 8, 8, 896  # P not a multiple of 1024 -> exercises the dense-tile padding
    key = jax.random.PRNGKey(0)
    k_c, k_wh, k_lab, k_pc, k_ps = jax.random.split(key, 5)

    # synthetic ground truth: (B, NOBJ, 5) = [x1, y1, x2, y2, label]
    centers = jax.random.uniform(k_c, (B, NOBJ, 2))
    wh = jax.random.uniform(k_wh, (B, NOBJ, 2), minval=0.05, maxval=0.4)
    x1y1 = jnp.clip(centers - wh / 2.0, 0.0, 1.0)
    x2y2 = jnp.clip(centers + wh / 2.0, 0.0, 1.0)
    labels = jax.random.randint(k_lab, (B, NOBJ, 1), 0, 5).astype(jnp.float32)
    targets = jnp.concatenate([x1y1, x2y2, labels], axis=-1)

    # per-image valid-object counts (one fully-padded image); zero padded rows
    # like a dataloader would.
    num_valid = jnp.array([NOBJ, 5, NOBJ, 3, 0, 7, 1, 6], dtype=jnp.int32)
    row_valid = jnp.arange(NOBJ)[None, :] < num_valid[:, None]
    targets = targets * row_valid[..., None].astype(targets.dtype)

    # synthetic priors (center-size form, like cfg prior boxes): (P, 4)
    pc = jax.random.uniform(k_pc, (P, 2))
    ps = jax.random.uniform(k_ps, (P, 2), minval=0.05, maxval=0.5)
    priors = jnp.concatenate([pc, ps], axis=-1)

    # Hoisted, cacheable prior preprocessing (static per model).
    priors_prep = prepare_priors(priors)
    expected = ref_pos(targets, priors, num_valid, threshold=0.5)

    # Default tiling: >= 2 parallel grid steps, static per-row unroll.
    pos = posdata_forward_pos(targets, priors_prep, num_valid, threshold=0.5)
    pos = jax.block_until_ready(pos)
    assert pos.shape == (B, P) and pos.dtype == jnp.bool_
    assert bool(jnp.all(pos == expected)), "Pallas pos mask mismatch vs reference (default tile)"

    # One fat step (v5e/v6e-style amortization): exercises the pl.loop row path.
    pos2 = posdata_forward_pos(targets, priors_prep, num_valid, threshold=0.5, batch_tile=B)
    pos2 = jax.block_until_ready(pos2)
    assert bool(jnp.all(pos2 == expected)), "Pallas pos mask mismatch vs reference (batch_tile=B)"

    print("KERNEL_OK")
</pallas_src>

<mosaic_0001>
module attributes {stable_mosaic.version = 11 : i64} {
  func.func @_pos_kernel(%arg0: i32, %arg1: memref<8xi32, #tpu.memory_space<smem>>, %arg2: memref<256xf32, #tpu.memory_space<smem>>, %arg3: memref<4x8x128xf32, #tpu.memory_space<vmem>>, %arg4: memref<4x8x128xi32, #tpu.memory_space<vmem>>) attributes {dimension_semantics = [#tpu.dimension_semantics<parallel>], iteration_bounds = array<i64: 2>, scalar_prefetch = 1 : i64, scratch_operands = 0 : i64, tpu.core_type = #tpu.core_type<tc>, window_params = [{transform_indices = @transform_0, window_bounds = array<i64: 256>}, {pipeline_mode = #tpu.pipeline_mode<synchronous>, transform_indices = @transform_1, window_bounds = array<i64: 4, 8, 128>}, {transform_indices = @transform_2, window_bounds = array<i64: 4, 8, 128>}]} {
    %c2 = arith.constant 2 : index
    %c0 = arith.constant 0 : index
    %c0_0 = arith.constant 0 : index
    %0 = vector.load %arg3[%c2, %c0, %c0_0] : memref<4x8x128xf32, #tpu.memory_space<vmem>>, vector<1x8x128xf32>
    %1 = vector.shape_cast %0 : vector<1x8x128xf32> to vector<8x128xf32>
    %c0_1 = arith.constant 0 : index
    %c0_2 = arith.constant 0 : index
    %c0_3 = arith.constant 0 : index
    %2 = vector.load %arg3[%c0_1, %c0_2, %c0_3] : memref<4x8x128xf32, #tpu.memory_space<vmem>>, vector<1x8x128xf32>
    %3 = vector.shape_cast %2 : vector<1x8x128xf32> to vector<8x128xf32>
    %4 = arith.subf %1, %3 : vector<8x128xf32>
    %c3 = arith.constant 3 : index
    %c0_4 = arith.constant 0 : index
    %c0_5 = arith.constant 0 : index
    %5 = vector.load %arg3[%c3, %c0_4, %c0_5] : memref<4x8x128xf32, #tpu.memory_space<vmem>>, vector<1x8x128xf32>
    %6 = vector.shape_cast %5 : vector<1x8x128xf32> to vector<8x128xf32>
    %c1 = arith.constant 1 : index
    %c0_6 = arith.constant 0 : index
    %c0_7 = arith.constant 0 : index
    %7 = vector.load %arg3[%c1, %c0_6, %c0_7] : memref<4x8x128xf32, #tpu.memory_space<vmem>>, vector<1x8x128xf32>
    %8 = vector.shape_cast %7 : vector<1x8x128xf32> to vector<8x128xf32>
    %9 = arith.subf %6, %8 : vector<8x128xf32>
    %10 = arith.mulf %4, %9 : vector<8x128xf32>
    %c4_i32 = arith.constant 4 : i32
    %11 = arith.muli %arg0, %c4_i32 : i32
    %c0_i32 = arith.constant 0 : i32
    %12 = arith.addi %11, %c0_i32 : i32
    %c32_i32 = arith.constant 32 : i32
    %13 = arith.muli %12, %c32_i32 : i32
    %14 = arith.index_cast %12 : i32 to index
    %15 = memref.load %arg1[%14] : memref<8xi32, #tpu.memory_space<smem>>
    %c0_i32_8 = arith.constant 0 : i32
    %16 = arith.addi %13, %c0_i32_8 : i32
    %17 = arith.index_cast %16 : i32 to index
    %18 = memref.load %arg2[%17] : memref<256xf32, #tpu.memory_space<smem>>
    %c1_i32 = arith.constant 1 : i32
    %19 = arith.addi %16, %c1_i32 : i32
    %20 = arith.index_cast %19 : i32 to index
    %21 = memref.load %arg2[%20] : memref<256xf32, #tpu.memory_space<smem>>
    %c2_i32 = arith.constant 2 : i32
    %22 = arith.addi %16, %c2_i32 : i32
    %23 = arith.index_cast %22 : i32 to index
    %24 = memref.load %arg2[%23] : memref<256xf32, #tpu.memory_space<smem>>
    %c3_i32 = arith.constant 3 : i32
    %25 = arith.addi %16, %c3_i32 : i32
    %26 = arith.index_cast %25 : i32 to index
    %27 = memref.load %arg2[%26] : memref<256xf32, #tpu.memory_space<smem>>
    %c0_9 = arith.constant 0 : index
    %c0_10 = arith.constant 0 : index
    %c0_11 = arith.constant 0 : index
    %28 = vector.load %arg3[%c0_9, %c0_10, %c0_11] : memref<4x8x128xf32, #tpu.memory_space<vmem>>, vector<1x8x128xf32>
    %29 = vector.shape_cast %28 : vector<1x8x128xf32> to vector<8x128xf32>
    %c1_12 = arith.constant 1 : index
    %c0_13 = arith.constant 0 : index
    %c0_14 = arith.constant 0 : index
    %30 = vector.load %arg3[%c1_12, %c0_13, %c0_14] : memref<4x8x128xf32, #tpu.memory_space<vmem>>, vector<1x8x128xf32>
    %31 = vector.shape_cast %30 : vector<1x8x128xf32> to vector<8x128xf32>
    %c2_15 = arith.constant 2 : index
    %c0_16 = arith.constant 0 : index
    %c0_17 = arith.constant 0 : index
    %32 = vector.load %arg3[%c2_15, %c0_16, %c0_17] : memref<4x8x128xf32, #tpu.memory_space<vmem>>, vector<1x8x128xf32>
    %33 = vector.shape_cast %32 : vector<1x8x128xf32> to vector<8x128xf32>
    %c3_18 = arith.constant 3 : index
    %c0_19 = arith.constant 0 : index
    %c0_20 = arith.constant 0 : index
    %34 = vector.load %arg3[%c3_18, %c0_19, %c0_20] : memref<4x8x128xf32, #tpu.memory_space<vmem>>, vector<1x8x128xf32>
    %35 = vector.shape_cast %34 : vector<1x8x128xf32> to vector<8x128xf32>
    %36 = vector.broadcast %24 : f32 to vector<8x128xf32>
    %37 = arith.minimumf %33, %36 : vector<8x128xf32>
    %38 = vector.broadcast %18 : f32 to vector<8x128xf32>
    %39 = arith.maximumf %29, %38 : vector<8x128xf32>
    %40 = arith.subf %37, %39 : vector<8x128xf32>
    %cst = arith.constant 0.000000e+00 : f32
    %41 = vector.broadcast %cst : f32 to vector<8x128xf32>
    %42 = arith.maximumf %40, %41 : vector<8x128xf32>
    %43 = vector.broadcast %27 : f32 to vector<8x128xf32>
    %44 = arith.minimumf %35, %43 : vector<8x128xf32>
    %45 = vector.broadcast %21 : f32 to vector<8x128xf32>
    %46 = arith.maximumf %31, %45 : vector<8x128xf32>
    %47 = arith.subf %44, %46 : vector<8x128xf32>
    %cst_21 = arith.constant 0.000000e+00 : f32
    %48 = vector.broadcast %cst_21 : f32 to vector<8x128xf32>
    %49 = arith.maximumf %47, %48 : vector<8x128xf32>
    %50 = arith.mulf %42, %49 : vector<8x128xf32>
    %51 = arith.subf %24, %18 : f32
    %52 = arith.subf %27, %21 : f32
    %53 = arith.mulf %51, %52 : f32
    %54 = vector.broadcast %53 : f32 to vector<8x128xf32>
    %55 = arith.addf %54, %10 : vector<8x128xf32>
    %56 = arith.subf %55, %50 : vector<8x128xf32>
    %57 = tpu.reciprocal %56 {approx = true} : vector<8x128xf32> -> vector<8x128xf32>
    %58 = arith.mulf %56, %57 : vector<8x128xf32>
    %cst_22 = arith.constant 2.000000e+00 : f32
    %59 = vector.broadcast %cst_22 : f32 to vector<8x128xf32>
    %60 = arith.subf %59, %58 : vector<8x128xf32>
    %61 = arith.mulf %57, %60 : vector<8x128xf32>
    %62 = arith.mulf %50, %61 : vector<8x128xf32>
    %63 = vector.shape_cast %62 : vector<8x128xf32> to vector<1x8x128xf32>
    %cst_23 = arith.constant dense<0xFF800000> : vector<1xf32>
    %64 = vector.multi_reduction <maximumf>, %63, %cst_23 [1, 2] : vector<1x8x128xf32> to vector<1xf32>
    %65 = vector.shape_cast %64 : vector<1xf32> to vector<1x1x1xf32>
    %66 = vector.extract %65[0, 0, 0] : f32 from vector<1x1x1xf32>
    %cst_24 = arith.constant 0.000000e+00 : f32
    %67 = arith.cmpf ogt, %66, %cst_24 : f32
    %cst_25 = arith.constant 5.000000e-01 : f32
    %68 = arith.minimumf %cst_25, %66 : f32
    %cst_26 = arith.constant 5.000000e-01 : f32
    %69 = arith.select %67, %68, %cst_26 : f32
    %c0_i32_27 = arith.constant 0 : i32
    %70 = arith.cmpi sgt, %15, %c0_i32_27 : i32
    %cst_28 = arith.constant 0x7F800000 : f32
    %71 = arith.select %70, %69, %cst_28 : f32
    %72 = vector.broadcast %71 : f32 to vector<8x128xf32>
    %73 = arith.cmpf oge, %62, %72 : vector<8x128xf32>
    %c4_i32_29 = arith.constant 4 : i32
    %74 = arith.addi %13, %c4_i32_29 : i32
    %75 = arith.index_cast %74 : i32 to index
    %76 = memref.load %arg2[%75] : memref<256xf32, #tpu.memory_space<smem>>
    %c1_i32_30 = arith.constant 1 : i32
    %77 = arith.addi %74, %c1_i32_30 : i32
    %78 = arith.index_cast %77 : i32 to index
    %79 = memref.load %arg2[%78] : memref<256xf32, #tpu.memory_space<smem>>
    %c2_i32_31 = arith.constant 2 : i32
    %80 = arith.addi %74, %c2_i32_31 : i32
    %81 = arith.index_cast %80 : i32 to index
    %82 = memref.load %arg2[%81] : memref<256xf32, #tpu.memory_space<smem>>
    %c3_i32_32 = arith.constant 3 : i32
    %83 = arith.addi %74, %c3_i32_32 : i32
    %84 = arith.index_cast %83 : i32 to index
    %85 = memref.load %arg2[%84] : memref<256xf32, #tpu.memory_space<smem>>
    %c0_33 = arith.constant 0 : index
    %c0_34 = arith.constant 0 : index
    %c0_35 = arith.constant 0 : index
    %86 = vector.load %arg3[%c0_33, %c0_34, %c0_35] : memref<4x8x128xf32, #tpu.memory_space<vmem>>, vector<1x8x128xf32>
    %87 = vector.shape_cast %86 : vector<1x8x128xf32> to vector<8x128xf32>
    %c1_36 = arith.constant 1 : index
    %c0_37 = arith.constant 0 : index
    %c0_38 = arith.constant 0 : index
    %88 = vector.load %arg3[%c1_36, %c0_37, %c0_38] : memref<4x8x128xf32, #tpu.memory_space<vmem>>, vector<1x8x128xf32>
    %89 = vector.shape_cast %88 : vector<1x8x128xf32> to vector<8x128xf32>
    %c2_39 = arith.constant 2 : index
    %c0_40 = arith.constant 0 : index
    %c0_41 = arith.constant 0 : index
    %90 = vector.load %arg3[%c2_39, %c0_40, %c0_41] : memref<4x8x128xf32, #tpu.memory_space<vmem>>, vector<1x8x128xf32>
    %91 = vector.shape_cast %90 : vector<1x8x128xf32> to vector<8x128xf32>
    %c3_42 = arith.constant 3 : index
    %c0_43 = arith.constant 0 : index
    %c0_44 = arith.constant 0 : index
    %92 = vector.load %arg3[%c3_42, %c0_43, %c0_44] : memref<4x8x128xf32, #tpu.memory_space<vmem>>, vector<1x8x128xf32>
    %93 = vector.shape_cast %92 : vector<1x8x128xf32> to vector<8x128xf32>
    %94 = vector.broadcast %82 : f32 to vector<8x128xf32>
    %95 = arith.minimumf %91, %94 : vector<8x128xf32>
    %96 = vector.broadcast %76 : f32 to vector<8x128xf32>
    %97 = arith.maximumf %87, %96 : vector<8x128xf32>
    %98 = arith.subf %95, %97 : vector<8x128xf32>
    %cst_45 = arith.constant 0.000000e+00 : f32
    %99 = vector.broadcast %cst_45 : f32 to vector<8x128xf32>
    %100 = arith.maximumf %98, %99 : vector<8x128xf32>
    %101 = vector.broadcast %85 : f32 to vector<8x128xf32>
    %102 = arith.minimumf %93, %101 : vector<8x128xf32>
    %103 = vector.broadcast %79 : f32 to vector<8x128xf32>
    %104 = arith.maximumf %89, %103 : vector<8x128xf32>
    %105 = arith.subf %102, %104 : vector<8x128xf32>
    %cst_46 = arith.constant 0.000000e+00 : f32
    %106 = vector.broadcast %cst_46 : f32 to vector<8x128xf32>
    %107 = arith.maximumf %105, %106 : vector<8x128xf32>
    %108 = arith.mulf %100, %107 : vector<8x128xf32>
    %109 = arith.subf %82, %76 : f32
    %110 = arith.subf %85, %79 : f32
    %111 = arith.mulf %109, %110 : f32
    %112 = vector.broadcast %111 : f32 to vector<8x128xf32>
    %113 = arith.addf %112, %10 : vector<8x128xf32>
    %114 = arith.subf %113, %108 : vector<8x128xf32>
    %115 = tpu.reciprocal %114 {approx = true} : vector<8x128xf32> -> vector<8x128xf32>
    %116 = arith.mulf %114, %115 : vector<8x128xf32>
    %cst_47 = arith.constant 2.000000e+00 : f32
    %117 = vector.broadcast %cst_47 : f32 to vector<8x128xf32>
    %118 = arith.subf %117, %116 : vector<8x128xf32>
    %119 = arith.mulf %115, %118 : vector<8x128xf32>
    %120 = arith.mulf %108, %119 : vector<8x128xf32>
    %121 = vector.shape_cast %120 : vector<8x128xf32> to vector<1x8x128xf32>
    %cst_48 = arith.constant dense<0xFF800000> : vector<1xf32>
    %122 = vector.multi_reduction <maximumf>, %121, %cst_48 [1, 2] : vector<1x8x128xf32> to vector<1xf32>
    %123 = vector.shape_cast %122 : vector<1xf32> to vector<1x1x1xf32>
    %124 = vector.extract %123[0, 0, 0] : f32 from vector<1x1x1xf32>
    %cst_49 = arith.constant 0.000000e+00 : f32
    %125 = arith.cmpf ogt, %124, %cst_49 : f32
    %cst_50 = arith.constant 5.000000e-01 : f32
    %126 = arith.minimumf %cst_50, %124 : f32
    %cst_51 = arith.constant 5.000000e-01 : f32
    %127 = arith.select %125, %126, %cst_51 : f32
    %c1_i32_52 = arith.constant 1 : i32
    %128 = arith.cmpi sgt, %15, %c1_i32_52 : i32
    %cst_53 = arith.constant 0x7F800000 : f32
    %129 = arith.select %128, %127, %cst_53 : f32
    %130 = vector.broadcast %129 : f32 to vector<8x128xf32>
    %131 = arith.cmpf oge, %120, %130 : vector<8x128xf32>
    %132 = arith.ori %73, %131 : vector<8x128xi1>
    %c8_i32 = arith.constant 8 : i32
    %133 = arith.addi %13, %c8_i32 : i32
    %134 = arith.index_cast %133 : i32 to index
    %135 = memref.load %arg2[%134] : memref<256xf32, #tpu.memory_space<smem>>
    %c1_i32_54 = arith.constant 1 : i32
    %136 = arith.addi %133, %c1_i32_54 : i32
    %137 = arith.index_cast %136 : i32 to index
    %138 = memref.load %arg2[%137] : memref<256xf32, #tpu.memory_space<smem>>
    %c2_i32_55 = arith.constant 2 : i32
    %139 = arith.addi %133, %c2_i32_55 : i32
    %140 = arith.index_cast %139 : i32 to index
    %141 = memref.load %arg2[%140] : memref<256xf32, #tpu.memory_space<smem>>
    %c3_i32_56 = arith.constant 3 : i32
    %142 = arith.addi %133, %c3_i32_56 : i32
    %143 = arith.index_cast %142 : i32 to index
    %144 = memref.load %arg2[%143] : memref<256xf32, #tpu.memory_space<smem>>
    %c0_57 = arith.constant 0 : index
    %c0_58 = arith.constant 0 : index
    %c0_59 = arith.constant 0 : index
    %145 = vector.load %arg3[%c0_57, %c0_58, %c0_59] : memref<4x8x128xf32, #tpu.memory_space<vmem>>, vector<1x8x128xf32>
    %146 = vector.shape_cast %145 : vector<1x8x128xf32> to vector<8x128xf32>
    %c1_60 = arith.constant 1 : index
    %c0_61 = arith.constant 0 : index
    %c0_62 = arith.constant 0 : index
    %147 = vector.load %arg3[%c1_60, %c0_61, %c0_62] : memref<4x8x128xf32, #tpu.memory_space<vmem>>, vector<1x8x128xf32>
    %148 = vector.shape_cast %147 : vector<1x8x128xf32> to vector<8x128xf32>
    %c2_63 = arith.constant 2 : index
    %c0_64 = arith.constant 0 : index
    %c0_65 = arith.constant 0 : index
    %149 = vector.load %arg3[%c2_63, %c0_64, %c0_65] : memref<4x8x128xf32, #tpu.memory_space<vmem>>, vector<1x8x128xf32>
    %150 = vector.shape_cast %149 : vector<1x8x128xf32> to vector<8x128xf32>
    %c3_66 = arith.constant 3 : index
    %c0_67 = arith.constant 0 : index
    %c0_68 = arith.constant 0 : index
    %151 = vector.load %arg3[%c3_66, %c0_67, %c0_68] : memref<4x8x128xf32, #tpu.memory_space<vmem>>, vector<1x8x128xf32>
    %152 = vector.shape_cast %151 : vector<1x8x128xf32> to vector<8x128xf32>
    %153 = vector.broadcast %141 : f32 to vector<8x128xf32>
    %154 = arith.minimumf %150, %153 : vector<8x128xf32>
    %155 = vector.broadcast %135 : f32 to vector<8x128xf32>
    %156 = arith.maximumf %146, %155 : vector<8x128xf32>
    %157 = arith.subf %154, %156 : vector<8x128xf32>
    %cst_69 = arith.constant 0.000000e+00 : f32
    %158 = vector.broadcast %cst_69 : f32 to vector<8x128xf32>
    %159 = arith.maximumf %157, %158 : vector<8x128xf32>
    %160 = vector.broadcast %144 : f32 to vector<8x128xf32>
    %161 = arith.minimumf %152, %160 : vector<8x128xf32>
    %162 = vector.broadcast %138 : f32 to vector<8x128xf32>
    %163 = arith.maximumf %148, %162 : vector<8x128xf32>
    %164 = arith.subf %161, %163 : vector<8x128xf32>
    %cst_70 = arith.constant 0.000000e+00 : f32
    %165 = vector.broadcast %cst_70 : f32 to vector<8x128xf32>
    %166 = arith.maximumf %164, %165 : vector<8x128xf32>
    %167 = arith.mulf %159, %166 : vector<8x128xf32>
    %168 = arith.subf %141, %135 : f32
    %169 = arith.subf %144, %138 : f32
    %170 = arith.mulf %168, %169 : f32
    %171 = vector.broadcast %170 : f32 to vector<8x128xf32>
    %172 = arith.addf %171, %10 : vector<8x128xf32>
    %173 = arith.subf %172, %167 : vector<8x128xf32>
    %174 = tpu.reciprocal %173 {approx = true} : vector<8x128xf32> -> vector<8x128xf32>
    %175 = arith.mulf %173, %174 : vector<8x128xf32>
    %cst_71 = arith.constant 2.000000e+00 : f32
    %176 = vector.broadcast %cst_71 : f32 to vector<8x128xf32>
    %177 = arith.subf %176, %175 : vector<8x128xf32>
    %178 = arith.mulf %174, %177 : vector<8x128xf32>
    %179 = arith.mulf %167, %178 : vector<8x128xf32>
    %180 = vector.shape_cast %179 : vector<8x128xf32> to vector<1x8x128xf32>
    %cst_72 = arith.constant dense<0xFF800000> : vector<1xf32>
    %181 = vector.multi_reduction <maximumf>, %180, %cst_72 [1, 2] : vector<1x8x128xf32> to vector<1xf32>
    %182 = vector.shape_cast %181 : vector<1xf32> to vector<1x1x1xf32>
    %183 = vector.extract %182[0, 0, 0] : f32 from vector<1x1x1xf32>
    %cst_73 = arith.constant 0.000000e+00 : f32
    %184 = arith.cmpf ogt, %183, %cst_73 : f32
    %cst_74 = arith.constant 5.000000e-01 : f32
    %185 = arith.minimumf %cst_74, %183 : f32
    %cst_75 = arith.constant 5.000000e-01 : f32
    %186 = arith.select %184, %185, %cst_75 : f32
    %c2_i32_76 = arith.constant 2 : i32
    %187 = arith.cmpi sgt, %15, %c2_i32_76 : i32
    %cst_77 = arith.constant 0x7F800000 : f32
    %188 = arith.select %187, %186, %cst_77 : f32
    %189 = vector.broadcast %188 : f32 to vector<8x128xf32>
    %190 = arith.cmpf oge, %179, %189 : vector<8x128xf32>
    %191 = arith.ori %132, %190 : vector<8x128xi1>
    %c12_i32 = arith.constant 12 : i32
    %192 = arith.addi %13, %c12_i32 : i32
    %193 = arith.index_cast %192 : i32 to index
    %194 = memref.load %arg2[%193] : memref<256xf32, #tpu.memory_space<smem>>
    %c1_i32_78 = arith.constant 1 : i32
    %195 = arith.addi %192, %c1_i32_78 : i32
    %196 = arith.index_cast %195 : i32 to index
    %197 = memref.load %arg2[%196] : memref<256xf32, #tpu.memory_space<smem>>
    %c2_i32_79 = arith.constant 2 : i32
    %198 = arith.addi %192, %c2_i32_79 : i32
    %199 = arith.index_cast %198 : i32 to index
    %200 = memref.load %arg2[%199] : memref<256xf32, #tpu.memory_space<smem>>
    %c3_i32_80 = arith.constant 3 : i32
    %201 = arith.addi %192, %c3_i32_80 : i32
    %202 = arith.index_cast %201 : i32 to index
    %203 = memref.load %arg2[%202] : memref<256xf32, #tpu.memory_space<smem>>
    %c0_81 = arith.constant 0 : index
    %c0_82 = arith.constant 0 : index
    %c0_83 = arith.constant 0 : index
    %204 = vector.load %arg3[%c0_81, %c0_82, %c0_83] : memref<4x8x128xf32, #tpu.memory_space<vmem>>, vector<1x8x128xf32>
    %205 = vector.shape_cast %204 : vector<1x8x128xf32> to vector<8x128xf32>
    %c1_84 = arith.constant 1 : index
    %c0_85 = arith.constant 0 : index
    %c0_86 = arith.constant 0 : index
    %206 = vector.load %arg3[%c1_84, %c0_85, %c0_86] : memref<4x8x128xf32, #tpu.memory_space<vmem>>, vector<1x8x128xf32>
    %207 = vector.shape_cast %206 : vector<1x8x128xf32> to vector<8x128xf32>
    %c2_87 = arith.constant 2 : index
    %c0_88 = arith.constant 0 : index
    %c0_89 = arith.constant 0 : index
    %208 = vector.load %arg3[%c2_87, %c0_88, %c0_89] : memref<4x8x128xf32, #tpu.memory_space<vmem>>, vector<1x8x128xf32>
    %209 = vector.shape_cast %208 : vector<1x8x128xf32> to vector<8x128xf32>
    %c3_90 = arith.constant 3 : index
    %c0_91 = arith.constant 0 : index
    %c0_92 = arith.constant 0 : index
    %210 = vector.load %arg3[%c3_90, %c0_91, %c0_92] : memref<4x8x128xf32, #tpu.memory_space<vmem>>, vector<1x8x128xf32>
    %211 = vector.shape_cast %210 : vector<1x8x128xf32> to vector<8x128xf32>
    %212 = vector.broadcast %200 : f32 to vector<8x128xf32>
    %213 = arith.minimumf %209, %212 : vector<8x128xf32>
    %214 = vector.broadcast %194 : f32 to vector<8x128xf32>
    %215 = arith.maximumf %205, %214 : vector<8x128xf32>
    %216 = arith.subf %213, %215 : vector<8x128xf32>
    %cst_93 = arith.constant 0.000000e+00 : f32
    %217 = vector.broadcast %cst_93 : f32 to vector<8x128xf32>
    %218 = arith.maximumf %216, %217 : vector<8x128xf32>
    %219 = vector.broadcast %203 : f32 to vector<8x128xf32>
    %220 = arith.minimumf %211, %219 : vector<8x128xf32>
    %221 = vector.broadcast %197 : f32 to vector<8x128xf32>
    %222 = arith.maximumf %207, %221 : vector<8x128xf32>
    %223 = arith.subf %220, %222 : vector<8x128xf32>
    %cst_94 = arith.constant 0.000000e+00 : f32
    %224 = vector.broadcast %cst_94 : f32 to vector<8x128xf32>
    %225 = arith.maximumf %223, %224 : vector<8x128xf32>
    %226 = arith.mulf %218, %225 : vector<8x128xf32>
    %227 = arith.subf %200, %194 : f32
    %228 = arith.subf %203, %197 : f32
    %229 = arith.mulf %227, %228 : f32
    %230 = vector.broadcast %229 : f32 to vector<8x128xf32>
    %231 = arith.addf %230, %10 : vector<8x128xf32>
    %232 = arith.subf %231, %226 : vector<8x128xf32>
    %233 = tpu.reciprocal %232 {approx = true} : vector<8x128xf32> -> vector<8x128xf32>
    %234 = arith.mulf %232, %233 : vector<8x128xf32>
    %cst_95 = arith.constant 2.000000e+00 : f32
    %235 = vector.broadcast %cst_95 : f32 to vector<8x128xf32>
    %236 = arith.subf %235, %234 : vector<8x128xf32>
    %237 = arith.mulf %233, %236 : vector<8x128xf32>
    %238 = arith.mulf %226, %237 : vector<8x128xf32>
    %239 = vector.shape_cast %238 : vector<8x128xf32> to vector<1x8x128xf32>
    %cst_96 = arith.constant dense<0xFF800000> : vector<1xf32>
    %240 = vector.multi_reduction <maximumf>, %239, %cst_96 [1, 2] : vector<1x8x128xf32> to vector<1xf32>
    %241 = vector.shape_cast %240 : vector<1xf32> to vector<1x1x1xf32>
    %242 = vector.extract %241[0, 0, 0] : f32 from vector<1x1x1xf32>
    %cst_97 = arith.constant 0.000000e+00 : f32
    %243 = arith.cmpf ogt, %242, %cst_97 : f32
    %cst_98 = arith.constant 5.000000e-01 : f32
    %244 = arith.minimumf %cst_98, %242 : f32
    %cst_99 = arith.constant 5.000000e-01 : f32
    %245 = arith.select %243, %244, %cst_99 : f32
    %c3_i32_100 = arith.constant 3 : i32
    %246 = arith.cmpi sgt, %15, %c3_i32_100 : i32
    %cst_101 = arith.constant 0x7F800000 : f32
    %247 = arith.select %246, %245, %cst_101 : f32
    %248 = vector.broadcast %247 : f32 to vector<8x128xf32>
    %249 = arith.cmpf oge, %238, %248 : vector<8x128xf32>
    %250 = arith.ori %191, %249 : vector<8x128xi1>
    %c16_i32 = arith.constant 16 : i32
    %251 = arith.addi %13, %c16_i32 : i32
    %252 = arith.index_cast %251 : i32 to index
    %253 = memref.load %arg2[%252] : memref<256xf32, #tpu.memory_space<smem>>
    %c1_i32_102 = arith.constant 1 : i32
    %254 = arith.addi %251, %c1_i32_102 : i32
    %255 = arith.index_cast %254 : i32 to index
    %256 = memref.load %arg2[%255] : memref<256xf32, #tpu.memory_space<smem>>
    %c2_i32_103 = arith.constant 2 : i32
    %257 = arith.addi %251, %c2_i32_103 : i32
    %258 = arith.index_cast %257 : i32 to index
    %259 = memref.load %arg2[%258] : memref<256xf32, #tpu.memory_space<smem>>
    %c3_i32_104 = arith.constant 3 : i32
    %260 = arith.addi %251, %c3_i32_104 : i32
    %261 = arith.index_cast %260 : i32 to index
    %262 = memref.load %arg2[%261] : memref<256xf32, #tpu.memory_space<smem>>
    %c0_105 = arith.constant 0 : index
    %c0_106 = arith.constant 0 : index
    %c0_107 = arith.constant 0 : index
    %263 = vector.load %arg3[%c0_105, %c0_106, %c0_107] : memref<4x8x128xf32, #tpu.memory_space<vmem>>, vector<1x8x128xf32>
    %264 = vector.shape_cast %263 : vector<1x8x128xf32> to vector<8x128xf32>
    %c1_108 = arith.constant 1 : index
    %c0_109 = arith.constant 0 : index
    %c0_110 = arith.constant 0 : index
    %265 = vector.load %arg3[%c1_108, %c0_109, %c0_110] : memref<4x8x128xf32, #tpu.memory_space<vmem>>, vector<1x8x128xf32>
    %266 = vector.shape_cast %265 : vector<1x8x128xf32> to vector<8x128xf32>
    %c2_111 = arith.constant 2 : index
    %c0_112 = arith.constant 0 : index
    %c0_113 = arith.constant 0 : index
    %267 = vector.load %arg3[%c2_111, %c0_112, %c0_113] : memref<4x8x128xf32, #tpu.memory_space<vmem>>, vector<1x8x128xf32>
    %268 = vector.shape_cast %267 : vector<1x8x128xf32> to vector<8x128xf32>
    %c3_114 = arith.constant 3 : index
    %c0_115 = arith.constant 0 : index
    %c0_116 = arith.constant 0 : index
    %269 = vector.load %arg3[%c3_114, %c0_115, %c0_116] : memref<4x8x128xf32, #tpu.memory_space<vmem>>, vector<1x8x128xf32>
    %270 = vector.shape_cast %269 : vector<1x8x128xf32> to vector<8x128xf32>
    %271 = vector.broadcast %259 : f32 to vector<8x128xf32>
    %272 = arith.minimumf %268, %271 : vector<8x128xf32>
    %273 = vector.broadcast %253 : f32 to vector<8x128xf32>
    %274 = arith.maximumf %264, %273 : vector<8x128xf32>
    %275 = arith.subf %272, %274 : vector<8x128xf32>
    %cst_117 = arith.constant 0.000000e+00 : f32
    %276 = vector.broadcast %cst_117 : f32 to vector<8x128xf32>
    %277 = arith.maximumf %275, %276 : vector<8x128xf32>
    %278 = vector.broadcast %262 : f32 to vector<8x128xf32>
    %279 = arith.minimumf %270, %278 : vector<8x128xf32>
    %280 = vector.broadcast %256 : f32 to vector<8x128xf32>
    %281 = arith.maximumf %266, %280 : vector<8x128xf32>
    %282 = arith.subf %279, %281 : vector<8x128xf32>
    %cst_118 = arith.constant 0.000000e+00 : f32
    %283 = vector.broadcast %cst_118 : f32 to vector<8x128xf32>
    %284 = arith.maximumf %282, %283 : vector<8x128xf32>
    %285 = arith.mulf %277, %284 : vector<8x128xf32>
    %286 = arith.subf %259, %253 : f32
    %287 = arith.subf %262, %256 : f32
    %288 = arith.mulf %286, %287 : f32
    %289 = vector.broadcast %288 : f32 to vector<8x128xf32>
    %290 = arith.addf %289, %10 : vector<8x128xf32>
    %291 = arith.subf %290, %285 : vector<8x128xf32>
    %292 = tpu.reciprocal %291 {approx = true} : vector<8x128xf32> -> vector<8x128xf32>
    %293 = arith.mulf %291, %292 : vector<8x128xf32>
    %cst_119 = arith.constant 2.000000e+00 : f32
    %294 = vector.broadcast %cst_119 : f32 to vector<8x128xf32>
    %295 = arith.subf %294, %293 : vector<8x128xf32>
    %296 = arith.mulf %292, %295 : vector<8x128xf32>
    %297 = arith.mulf %285, %296 : vector<8x128xf32>
    %298 = vector.shape_cast %297 : vector<8x128xf32> to vector<1x8x128xf32>
    %cst_120 = arith.constant dense<0xFF800000> : vector<1xf32>
    %299 = vector.multi_reduction <maximumf>, %298, %cst_120 [1, 2] : vector<1x8x128xf32> to vector<1xf32>
    %300 = vector.shape_cast %299 : vector<1xf32> to vector<1x1x1xf32>
    %301 = vector.extract %300[0, 0, 0] : f32 from vector<1x1x1xf32>
    %cst_121 = arith.constant 0.000000e+00 : f32
    %302 = arith.cmpf ogt, %301, %cst_121 : f32
    %cst_122 = arith.constant 5.000000e-01 : f32
    %303 = arith.minimumf %cst_122, %301 : f32
    %cst_123 = arith.constant 5.000000e-01 : f32
    %304 = arith.select %302, %303, %cst_123 : f32
    %c4_i32_124 = arith.constant 4 : i32
    %305 = arith.cmpi sgt, %15, %c4_i32_124 : i32
    %cst_125 = arith.constant 0x7F800000 : f32
    %306 = arith.select %305, %304, %cst_125 : f32
    %307 = vector.broadcast %306 : f32 to vector<8x128xf32>
    %308 = arith.cmpf oge, %297, %307 : vector<8x128xf32>
    %309 = arith.ori %250, %308 : vector<8x128xi1>
    %c20_i32 = arith.constant 20 : i32
    %310 = arith.addi %13, %c20_i32 : i32
    %311 = arith.index_cast %310 : i32 to index
    %312 = memref.load %arg2[%311] : memref<256xf32, #tpu.memory_space<smem>>
    %c1_i32_126 = arith.constant 1 : i32
    %313 = arith.addi %310, %c1_i32_126 : i32
    %314 = arith.index_cast %313 : i32 to index
    %315 = memref.load %arg2[%314] : memref<256xf32, #tpu.memory_space<smem>>
    %c2_i32_127 = arith.constant 2 : i32
    %316 = arith.addi %310, %c2_i32_127 : i32
    %317 = arith.index_cast %316 : i32 to index
    %318 = memref.load %arg2[%317] : memref<256xf32, #tpu.memory_space<smem>>
    %c3_i32_128 = arith.constant 3 : i32
    %319 = arith.addi %310, %c3_i32_128 : i32
    %320 = arith.index_cast %319 : i32 to index
    %321 = memref.load %arg2[%320] : memref<256xf32, #tpu.memory_space<smem>>
    %c0_129 = arith.constant 0 : index
    %c0_130 = arith.constant 0 : index
    %c0_131 = arith.constant 0 : index
    %322 = vector.load %arg3[%c0_129, %c0_130, %c0_131] : memref<4x8x128xf32, #tpu.memory_space<vmem>>, vector<1x8x128xf32>
    %323 = vector.shape_cast %322 : vector<1x8x128xf32> to vector<8x128xf32>
    %c1_132 = arith.constant 1 : index
    %c0_133 = arith.constant 0 : index
    %c0_134 = arith.constant 0 : index
    %324 = vector.load %arg3[%c1_132, %c0_133, %c0_134] : memref<4x8x128xf32, #tpu.memory_space<vmem>>, vector<1x8x128xf32>
    %325 = vector.shape_cast %324 : vector<1x8x128xf32> to vector<8x128xf32>
    %c2_135 = arith.constant 2 : index
    %c0_136 = arith.constant 0 : index
    %c0_137 = arith.constant 0 : index
    %326 = vector.load %arg3[%c2_135, %c0_136, %c0_137] : memref<4x8x128xf32, #tpu.memory_space<vmem>>, vector<1x8x128xf32>
    %327 = vector.shape_cast %326 : vector<1x8x128xf32> to vector<8x128xf32>
    %c3_138 = arith.constant 3 : index
    %c0_139 = arith.constant 0 : index
    %c0_140 = arith.constant 0 : index
    %328 = vector.load %arg3[%c3_138, %c0_139, %c0_140] : memref<4x8x128xf32, #tpu.memory_space<vmem>>, vector<1x8x128xf32>
    %329 = vector.shape_cast %328 : vector<1x8x128xf32> to vector<8x128xf32>
    %330 = vector.broadcast %318 : f32 to vector<8x128xf32>
    %331 = arith.minimumf %327, %330 : vector<8x128xf32>
    %332 = vector.broadcast %312 : f32 to vector<8x128xf32>
    %333 = arith.maximumf %323, %332 : vector<8x128xf32>
    %334 = arith.subf %331, %333 : vector<8x128xf32>
    %cst_141 = arith.constant 0.000000e+00 : f32
    %335 = vector.broadcast %cst_141 : f32 to vector<8x128xf32>
    %336 = arith.maximumf %334, %335 : vector<8x128xf32>
    %337 = vector.broadcast %321 : f32 to vector<8x128xf32>
    %338 = arith.minimumf %329, %337 : vector<8x128xf32>
    %339 = vector.broadcast %315 : f32 to vector<8x128xf32>
    %340 = arith.maximumf %325, %339 : vector<8x128xf32>
    %341 = arith.subf %338, %340 : vector<8x128xf32>
    %cst_142 = arith.constant 0.000000e+00 : f32
    %342 = vector.broadcast %cst_142 : f32 to vector<8x128xf32>
    %343 = arith.maximumf %341, %342 : vector<8x128xf32>
    %344 = arith.mulf %336, %343 : vector<8x128xf32>
    %345 = arith.subf %318, %312 : f32
    %346 = arith.subf %321, %315 : f32
    %347 = arith.mulf %345, %346 : f32
    %348 = vector.broadcast %347 : f32 to vector<8x128xf32>
    %349 = arith.addf %348, %10 : vector<8x128xf32>
    %350 = arith.subf %349, %344 : vector<8x128xf32>
    %351 = tpu.reciprocal %350 {approx = true} : vector<8x128xf32> -> vector<8x128xf32>
    %352 = arith.mulf %350, %351 : vector<8x128xf32>
    %cst_143 = arith.constant 2.000000e+00 : f32
    %353 = vector.broadcast %cst_143 : f32 to vector<8x128xf32>
    %354 = arith.subf %353, %352 : vector<8x128xf32>
    %355 = arith.mulf %351, %354 : vector<8x128xf32>
    %356 = arith.mulf %344, %355 : vector<8x128xf32>
    %357 = vector.shape_cast %356 : vector<8x128xf32> to vector<1x8x128xf32>
    %cst_144 = arith.constant dense<0xFF800000> : vector<1xf32>
    %358 = vector.multi_reduction <maximumf>, %357, %cst_144 [1, 2] : vector<1x8x128xf32> to vector<1xf32>
    %359 = vector.shape_cast %358 : vector<1xf32> to vector<1x1x1xf32>
    %360 = vector.extract %359[0, 0, 0] : f32 from vector<1x1x1xf32>
    %cst_145 = arith.constant 0.000000e+00 : f32
    %361 = arith.cmpf ogt, %360, %cst_145 : f32
    %cst_146 = arith.constant 5.000000e-01 : f32
    %362 = arith.minimumf %cst_146, %360 : f32
    %cst_147 = arith.constant 5.000000e-01 : f32
    %363 = arith.select %361, %362, %cst_147 : f32
    %c5_i32 = arith.constant 5 : i32
    %364 = arith.cmpi sgt, %15, %c5_i32 : i32
    %cst_148 = arith.constant 0x7F800000 : f32
    %365 = arith.select %364, %363, %cst_148 : f32
    %366 = vector.broadcast %365 : f32 to vector<8x128xf32>
    %367 = arith.cmpf oge, %356, %366 : vector<8x128xf32>
    %368 = arith.ori %309, %367 : vector<8x128xi1>
    %c24_i32 = arith.constant 24 : i32
    %369 = arith.addi %13, %c24_i32 : i32
    %370 = arith.index_cast %369 : i32 to index
    %371 = memref.load %arg2[%370] : memref<256xf32, #tpu.memory_space<smem>>
    %c1_i32_149 = arith.constant 1 : i32
    %372 = arith.addi %369, %c1_i32_149 : i32
    %373 = arith.index_cast %372 : i32 to index
    %374 = memref.load %arg2[%373] : memref<256xf32, #tpu.memory_space<smem>>
    %c2_i32_150 = arith.constant 2 : i32
    %375 = arith.addi %369, %c2_i32_150 : i32
    %376 = arith.index_cast %375 : i32 to index
    %377 = memref.load %arg2[%376] : memref<256xf32, #tpu.memory_space<smem>>
    %c3_i32_151 = arith.constant 3 : i32
    %378 = arith.addi %369, %c3_i32_151 : i32
    %379 = arith.index_cast %378 : i32 to index
    %380 = memref.load %arg2[%379] : memref<256xf32, #tpu.memory_space<smem>>
    %c0_152 = arith.constant 0 : index
    %c0_153 = arith.constant 0 : index
    %c0_154 = arith.constant 0 : index
    %381 = vector.load %arg3[%c0_152, %c0_153, %c0_154] : memref<4x8x128xf32, #tpu.memory_space<vmem>>, vector<1x8x128xf32>
    %382 = vector.shape_cast %381 : vector<1x8x128xf32> to vector<8x128xf32>
    %c1_155 = arith.constant 1 : index
    %c0_156 = arith.constant 0 : index
    %c0_157 = arith.constant 0 : index
    %383 = vector.load %arg3[%c1_155, %c0_156, %c0_157] : memref<4x8x128xf32, #tpu.memory_space<vmem>>, vector<1x8x128xf32>
    %384 = vector.shape_cast %383 : vector<1x8x128xf32> to vector<8x128xf32>
    %c2_158 = arith.constant 2 : index
    %c0_159 = arith.constant 0 : index
    %c0_160 = arith.constant 0 : index
    %385 = vector.load %arg3[%c2_158, %c0_159, %c0_160] : memref<4x8x128xf32, #tpu.memory_space<vmem>>, vector<1x8x128xf32>
    %386 = vector.shape_cast %385 : vector<1x8x128xf32> to vector<8x128xf32>
    %c3_161 = arith.constant 3 : index
    %c0_162 = arith.constant 0 : index
    %c0_163 = arith.constant 0 : index
    %387 = vector.load %arg3[%c3_161, %c0_162, %c0_163] : memref<4x8x128xf32, #tpu.memory_space<vmem>>, vector<1x8x128xf32>
    %388 = vector.shape_cast %387 : vector<1x8x128xf32> to vector<8x128xf32>
    %389 = vector.broadcast %377 : f32 to vector<8x128xf32>
    %390 = arith.minimumf %386, %389 : vector<8x128xf32>
    %391 = vector.broadcast %371 : f32 to vector<8x128xf32>
    %392 = arith.maximumf %382, %391 : vector<8x128xf32>
    %393 = arith.subf %390, %392 : vector<8x128xf32>
    %cst_164 = arith.constant 0.000000e+00 : f32
    %394 = vector.broadcast %cst_164 : f32 to vector<8x128xf32>
    %395 = arith.maximumf %393, %394 : vector<8x128xf32>
    %396 = vector.broadcast %380 : f32 to vector<8x128xf32>
    %397 = arith.minimumf %388, %396 : vector<8x128xf32>
    %398 = vector.broadcast %374 : f32 to vector<8x128xf32>
    %399 = arith.maximumf %384, %398 : vector<8x128xf32>
    %400 = arith.subf %397, %399 : vector<8x128xf32>
    %cst_165 = arith.constant 0.000000e+00 : f32
    %401 = vector.broadcast %cst_165 : f32 to vector<8x128xf32>
    %402 = arith.maximumf %400, %401 : vector<8x128xf32>
    %403 = arith.mulf %395, %402 : vector<8x128xf32>
    %404 = arith.subf %377, %371 : f32
    %405 = arith.subf %380, %374 : f32
    %406 = arith.mulf %404, %405 : f32
    %407 = vector.broadcast %406 : f32 to vector<8x128xf32>
    %408 = arith.addf %407, %10 : vector<8x128xf32>
    %409 = arith.subf %408, %403 : vector<8x128xf32>
    %410 = tpu.reciprocal %409 {approx = true} : vector<8x128xf32> -> vector<8x128xf32>
    %411 = arith.mulf %409, %410 : vector<8x128xf32>
    %cst_166 = arith.constant 2.000000e+00 : f32
    %412 = vector.broadcast %cst_166 : f32 to vector<8x128xf32>
    %413 = arith.subf %412, %411 : vector<8x128xf32>
    %414 = arith.mulf %410, %413 : vector<8x128xf32>
    %415 = arith.mulf %403, %414 : vector<8x128xf32>
    %416 = vector.shape_cast %415 : vector<8x128xf32> to vector<1x8x128xf32>
    %cst_167 = arith.constant dense<0xFF800000> : vector<1xf32>
    %417 = vector.multi_reduction <maximumf>, %416, %cst_167 [1, 2] : vector<1x8x128xf32> to vector<1xf32>
    %418 = vector.shape_cast %417 : vector<1xf32> to vector<1x1x1xf32>
    %419 = vector.extract %418[0, 0, 0] : f32 from vector<1x1x1xf32>
    %cst_168 = arith.constant 0.000000e+00 : f32
    %420 = arith.cmpf ogt, %419, %cst_168 : f32
    %cst_169 = arith.constant 5.000000e-01 : f32
    %421 = arith.minimumf %cst_169, %419 : f32
    %cst_170 = arith.constant 5.000000e-01 : f32
    %422 = arith.select %420, %421, %cst_170 : f32
    %c6_i32 = arith.constant 6 : i32
    %423 = arith.cmpi sgt, %15, %c6_i32 : i32
    %cst_171 = arith.constant 0x7F800000 : f32
    %424 = arith.select %423, %422, %cst_171 : f32
    %425 = vector.broadcast %424 : f32 to vector<8x128xf32>
    %426 = arith.cmpf oge, %415, %425 : vector<8x128xf32>
    %427 = arith.ori %368, %426 : vector<8x128xi1>
    %c28_i32 = arith.constant 28 : i32
    %428 = arith.addi %13, %c28_i32 : i32
    %429 = arith.index_cast %428 : i32 to index
    %430 = memref.load %arg2[%429] : memref<256xf32, #tpu.memory_space<smem>>
    %c1_i32_172 = arith.constant 1 : i32
    %431 = arith.addi %428, %c1_i32_172 : i32
    %432 = arith.index_cast %431 : i32 to index
    %433 = memref.load %arg2[%432] : memref<256xf32, #tpu.memory_space<smem>>
    %c2_i32_173 = arith.constant 2 : i32
    %434 = arith.addi %428, %c2_i32_173 : i32
    %435 = arith.index_cast %434 : i32 to index
    %436 = memref.load %arg2[%435] : memref<256xf32, #tpu.memory_space<smem>>
    %c3_i32_174 = arith.constant 3 : i32
    %437 = arith.addi %428, %c3_i32_174 : i32
    %438 = arith.index_cast %437 : i32 to index
    %439 = memref.load %arg2[%438] : memref<256xf32, #tpu.memory_space<smem>>
    %c0_175 = arith.constant 0 : index
    %c0_176 = arith.constant 0 : index
    %c0_177 = arith.constant 0 : index
    %440 = vector.load %arg3[%c0_175, %c0_176, %c0_177] : memref<4x8x128xf32, #tpu.memory_space<vmem>>, vector<1x8x128xf32>
    %441 = vector.shape_cast %440 : vector<1x8x128xf32> to vector<8x128xf32>
    %c1_178 = arith.constant 1 : index
    %c0_179 = arith.constant 0 : index
    %c0_180 = arith.constant 0 : index
    %442 = vector.load %arg3[%c1_178, %c0_179, %c0_180] : memref<4x8x128xf32, #tpu.memory_space<vmem>>, vector<1x8x128xf32>
    %443 = vector.shape_cast %442 : vector<1x8x128xf32> to vector<8x128xf32>
    %c2_181 = arith.constant 2 : index
    %c0_182 = arith.constant 0 : index
    %c0_183 = arith.constant 0 : index
    %444 = vector.load %arg3[%c2_181, %c0_182, %c0_183] : memref<4x8x128xf32, #tpu.memory_space<vmem>>, vector<1x8x128xf32>
    %445 = vector.shape_cast %444 : vector<1x8x128xf32> to vector<8x128xf32>
    %c3_184 = arith.constant 3 : index
    %c0_185 = arith.constant 0 : index
    %c0_186 = arith.constant 0 : index
    %446 = vector.load %arg3[%c3_184, %c0_185, %c0_186] : memref<4x8x128xf32, #tpu.memory_space<vmem>>, vector<1x8x128xf32>
    %447 = vector.shape_cast %446 : vector<1x8x128xf32> to vector<8x128xf32>
    %448 = vector.broadcast %436 : f32 to vector<8x128xf32>
    %449 = arith.minimumf %445, %448 : vector<8x128xf32>
    %450 = vector.broadcast %430 : f32 to vector<8x128xf32>
    %451 = arith.maximumf %441, %450 : vector<8x128xf32>
    %452 = arith.subf %449, %451 : vector<8x128xf32>
    %cst_187 = arith.constant 0.000000e+00 : f32
    %453 = vector.broadcast %cst_187 : f32 to vector<8x128xf32>
    %454 = arith.maximumf %452, %453 : vector<8x128xf32>
    %455 = vector.broadcast %439 : f32 to vector<8x128xf32>
    %456 = arith.minimumf %447, %455 : vector<8x128xf32>
    %457 = vector.broadcast %433 : f32 to vector<8x128xf32>
    %458 = arith.maximumf %443, %457 : vector<8x128xf32>
    %459 = arith.subf %456, %458 : vector<8x128xf32>
    %cst_188 = arith.constant 0.000000e+00 : f32
    %460 = vector.broadcast %cst_188 : f32 to vector<8x128xf32>
    %461 = arith.maximumf %459, %460 : vector<8x128xf32>
    %462 = arith.mulf %454, %461 : vector<8x128xf32>
    %463 = arith.subf %436, %430 : f32
    %464 = arith.subf %439, %433 : f32
    %465 = arith.mulf %463, %464 : f32
    %466 = vector.broadcast %465 : f32 to vector<8x128xf32>
    %467 = arith.addf %466, %10 : vector<8x128xf32>
    %468 = arith.subf %467, %462 : vector<8x128xf32>
    %469 = tpu.reciprocal %468 {approx = true} : vector<8x128xf32> -> vector<8x128xf32>
    %470 = arith.mulf %468, %469 : vector<8x128xf32>
    %cst_189 = arith.constant 2.000000e+00 : f32
    %471 = vector.broadcast %cst_189 : f32 to vector<8x128xf32>
    %472 = arith.subf %471, %470 : vector<8x128xf32>
    %473 = arith.mulf %469, %472 : vector<8x128xf32>
    %474 = arith.mulf %462, %473 : vector<8x128xf32>
    %475 = vector.shape_cast %474 : vector<8x128xf32> to vector<1x8x128xf32>
    %cst_190 = arith.constant dense<0xFF800000> : vector<1xf32>
    %476 = vector.multi_reduction <maximumf>, %475, %cst_190 [1, 2] : vector<1x8x128xf32> to vector<1xf32>
    %477 = vector.shape_cast %476 : vector<1xf32> to vector<1x1x1xf32>
    %478 = vector.extract %477[0, 0, 0] : f32 from vector<1x1x1xf32>
    %cst_191 = arith.constant 0.000000e+00 : f32
    %479 = arith.cmpf ogt, %478, %cst_191 : f32
    %cst_192 = arith.constant 5.000000e-01 : f32
    %480 = arith.minimumf %cst_192, %478 : f32
    %cst_193 = arith.constant 5.000000e-01 : f32
    %481 = arith.select %479, %480, %cst_193 : f32
    %c7_i32 = arith.constant 7 : i32
    %482 = arith.cmpi sgt, %15, %c7_i32 : i32
    %cst_194 = arith.constant 0x7F800000 : f32
    %483 = arith.select %482, %481, %cst_194 : f32
    %484 = vector.broadcast %483 : f32 to vector<8x128xf32>
    %485 = arith.cmpf oge, %474, %484 : vector<8x128xf32>
    %486 = arith.ori %427, %485 : vector<8x128xi1>
    %487 = arith.extui %486 : vector<8x128xi1> to vector<8x128xi32>
    %c0_195 = arith.constant 0 : index
    %c0_196 = arith.constant 0 : index
    %c0_197 = arith.constant 0 : index
    %488 = vector.load %arg4[%c0_195, %c0_196, %c0_197] : memref<4x8x128xi32, #tpu.memory_space<vmem>>, vector<1x8x128xi32>
    %489 = vector.shape_cast %488 : vector<1x8x128xi32> to vector<8x128xi32>
    %490 = vector.shape_cast %487 : vector<8x128xi32> to vector<1x8x128xi32>
    tpu.vector_store %arg4[%c0_195, %c0_196, %c0_197], %490 {strides = array<i32>} : memref<4x8x128xi32, #tpu.memory_space<vmem>>, vector<1x8x128xi32>,
    %c4_i32_198 = arith.constant 4 : i32
    %491 = arith.muli %arg0, %c4_i32_198 : i32
    %c1_i32_199 = arith.constant 1 : i32
    %492 = arith.addi %491, %c1_i32_199 : i32
    %c32_i32_200 = arith.constant 32 : i32
    %493 = arith.muli %492, %c32_i32_200 : i32
    %494 = arith.index_cast %492 : i32 to index
    %495 = memref.load %arg1[%494] : memref<8xi32, #tpu.memory_space<smem>>
    %c0_i32_201 = arith.constant 0 : i32
    %496 = arith.addi %493, %c0_i32_201 : i32
    %497 = arith.index_cast %496 : i32 to index
    %498 = memref.load %arg2[%497] : memref<256xf32, #tpu.memory_space<smem>>
    %c1_i32_202 = arith.constant 1 : i32
    %499 = arith.addi %496, %c1_i32_202 : i32
    %500 = arith.index_cast %499 : i32 to index
    %501 = memref.load %arg2[%500] : memref<256xf32, #tpu.memory_space<smem>>
    %c2_i32_203 = arith.constant 2 : i32
    %502 = arith.addi %496, %c2_i32_203 : i32
    %503 = arith.index_cast %502 : i32 to index
    %504 = memref.load %arg2[%503] : memref<256xf32, #tpu.memory_space<smem>>
    %c3_i32_204 = arith.constant 3 : i32
    %505 = arith.addi %496, %c3_i32_204 : i32
    %506 = arith.index_cast %505 : i32 to index
    %507 = memref.load %arg2[%506] : memref<256xf32, #tpu.memory_space<smem>>
    %c0_205 = arith.constant 0 : index
    %c0_206 = arith.constant 0 : index
    %c0_207 = arith.constant 0 : index
    %508 = vector.load %arg3[%c0_205, %c0_206, %c0_207] : memref<4x8x128xf32, #tpu.memory_space<vmem>>, vector<1x8x128xf32>
    %509 = vector.shape_cast %508 : vector<1x8x128xf32> to vector<8x128xf32>
    %c1_208 = arith.constant 1 : index
    %c0_209 = arith.constant 0 : index
    %c0_210 = arith.constant 0 : index
    %510 = vector.load %arg3[%c1_208, %c0_209, %c0_210] : memref<4x8x128xf32, #tpu.memory_space<vmem>>, vector<1x8x128xf32>
    %511 = vector.shape_cast %510 : vector<1x8x128xf32> to vector<8x128xf32>
    %c2_211 = arith.constant 2 : index
    %c0_212 = arith.constant 0 : index
    %c0_213 = arith.constant 0 : index
    %512 = vector.load %arg3[%c2_211, %c0_212, %c0_213] : memref<4x8x128xf32, #tpu.memory_space<vmem>>, vector<1x8x128xf32>
    %513 = vector.shape_cast %512 : vector<1x8x128xf32> to vector<8x128xf32>
    %c3_214 = arith.constant 3 : index
    %c0_215 = arith.constant 0 : index
    %c0_216 = arith.constant 0 : index
    %514 = vector.load %arg3[%c3_214, %c0_215, %c0_216] : memref<4x8x128xf32, #tpu.memory_space<vmem>>, vector<1x8x128xf32>
    %515 = vector.shape_cast %514 : vector<1x8x128xf32> to vector<8x128xf32>
    %516 = vector.broadcast %504 : f32 to vector<8x128xf32>
    %517 = arith.minimumf %513, %516 : vector<8x128xf32>
    %518 = vector.broadcast %498 : f32 to vector<8x128xf32>
    %519 = arith.maximumf %509, %518 : vector<8x128xf32>
    %520 = arith.subf %517, %519 : vector<8x128xf32>
    %cst_217 = arith.constant 0.000000e+00 : f32
    %521 = vector.broadcast %cst_217 : f32 to vector<8x128xf32>
    %522 = arith.maximumf %520, %521 : vector<8x128xf32>
    %523 = vector.broadcast %507 : f32 to vector<8x128xf32>
    %524 = arith.minimumf %515, %523 : vector<8x128xf32>
    %525 = vector.broadcast %501 : f32 to vector<8x128xf32>
    %526 = arith.maximumf %511, %525 : vector<8x128xf32>
    %527 = arith.subf %524, %526 : vector<8x128xf32>
    %cst_218 = arith.constant 0.000000e+00 : f32
    %528 = vector.broadcast %cst_218 : f32 to vector<8x128xf32>
    %529 = arith.maximumf %527, %528 : vector<8x128xf32>
    %530 = arith.mulf %522, %529 : vector<8x128xf32>
    %531 = arith.subf %504, %498 : f32
    %532 = arith.subf %507, %501 : f32
    %533 = arith.mulf %531, %532 : f32
    %534 = vector.broadcast %533 : f32 to vector<8x128xf32>
    %535 = arith.addf %534, %10 : vector<8x128xf32>
    %536 = arith.subf %535, %530 : vector<8x128xf32>
    %537 = tpu.reciprocal %536 {approx = true} : vector<8x128xf32> -> vector<8x128xf32>
    %538 = arith.mulf %536, %537 : vector<8x128xf32>
    %cst_219 = arith.constant 2.000000e+00 : f32
    %539 = vector.broadcast %cst_219 : f32 to vector<8x128xf32>
    %540 = arith.subf %539, %538 : vector<8x128xf32>
    %541 = arith.mulf %537, %540 : vector<8x128xf32>
    %542 = arith.mulf %530, %541 : vector<8x128xf32>
    %543 = vector.shape_cast %542 : vector<8x128xf32> to vector<1x8x128xf32>
    %cst_220 = arith.constant dense<0xFF800000> : vector<1xf32>
    %544 = vector.multi_reduction <maximumf>, %543, %cst_220 [1, 2] : vector<1x8x128xf32> to vector<1xf32>
    %545 = vector.shape_cast %544 : vector<1xf32> to vector<1x1x1xf32>
    %546 = vector.extract %545[0, 0, 0] : f32 from vector<1x1x1xf32>
    %cst_221 = arith.constant 0.000000e+00 : f32
    %547 = arith.cmpf ogt, %546, %cst_221 : f32
    %cst_222 = arith.constant 5.000000e-01 : f32
    %548 = arith.minimumf %cst_222, %546 : f32
    %cst_223 = arith.constant 5.000000e-01 : f32
    %549 = arith.select %547, %548, %cst_223 : f32
    %c0_i32_224 = arith.constant 0 : i32
    %550 = arith.cmpi sgt, %495, %c0_i32_224 : i32
    %cst_225 = arith.constant 0x7F800000 : f32
    %551 = arith.select %550, %549, %cst_225 : f32
    %552 = vector.broadcast %551 : f32 to vector<8x128xf32>
    %553 = arith.cmpf oge, %542, %552 : vector<8x128xf32>
    %c4_i32_226 = arith.constant 4 : i32
    %554 = arith.addi %493, %c4_i32_226 : i32
    %555 = arith.index_cast %554 : i32 to index
    %556 = memref.load %arg2[%555] : memref<256xf32, #tpu.memory_space<smem>>
    %c1_i32_227 = arith.constant 1 : i32
    %557 = arith.addi %554, %c1_i32_227 : i32
    %558 = arith.index_cast %557 : i32 to index
    %559 = memref.load %arg2[%558] : memref<256xf32, #tpu.memory_space<smem>>
    %c2_i32_228 = arith.constant 2 : i32
    %560 = arith.addi %554, %c2_i32_228 : i32
    %561 = arith.index_cast %560 : i32 to index
    %562 = memref.load %arg2[%561] : memref<256xf32, #tpu.memory_space<smem>>
    %c3_i32_229 = arith.constant 3 : i32
    %563 = arith.addi %554, %c3_i32_229 : i32
    %564 = arith.index_cast %563 : i32 to index
    %565 = memref.load %arg2[%564] : memref<256xf32, #tpu.memory_space<smem>>
    %c0_230 = arith.constant 0 : index
    %c0_231 = arith.constant 0 : index
    %c0_232 = arith.constant 0 : index
    %566 = vector.load %arg3[%c0_230, %c0_231, %c0_232] : memref<4x8x128xf32, #tpu.memory_space<vmem>>, vector<1x8x128xf32>
    %567 = vector.shape_cast %566 : vector<1x8x128xf32> to vector<8x128xf32>
    %c1_233 = arith.constant 1 : index
    %c0_234 = arith.constant 0 : index
    %c0_235 = arith.constant 0 : index
    %568 = vector.load %arg3[%c1_233, %c0_234, %c0_235] : memref<4x8x128xf32, #tpu.memory_space<vmem>>, vector<1x8x128xf32>
    %569 = vector.shape_cast %568 : vector<1x8x128xf32> to vector<8x128xf32>
    %c2_236 = arith.constant 2 : index
    %c0_237 = arith.constant 0 : index
    %c0_238 = arith.constant 0 : index
    %570 = vector.load %arg3[%c2_236, %c0_237, %c0_238] : memref<4x8x128xf32, #tpu.memory_space<vmem>>, vector<1x8x128xf32>
    %571 = vector.shape_cast %570 : vector<1x8x128xf32> to vector<8x128xf32>
    %c3_239 = arith.constant 3 : index
    %c0_240 = arith.constant 0 : index
    %c0_241 = arith.constant 0 : index
    %572 = vector.load %arg3[%c3_239, %c0_240, %c0_241] : memref<4x8x128xf32, #tpu.memory_space<vmem>>, vector<1x8x128xf32>
    %573 = vector.shape_cast %572 : vector<1x8x128xf32> to vector<8x128xf32>
    %574 = vector.broadcast %562 : f32 to vector<8x128xf32>
    %575 = arith.minimumf %571, %574 : vector<8x128xf32>
    %576 = vector.broadcast %556 : f32 to vector<8x128xf32>
    %577 = arith.maximumf %567, %576 : vector<8x128xf32>
    %578 = arith.subf %575, %577 : vector<8x128xf32>
    %cst_242 = arith.constant 0.000000e+00 : f32
    %579 = vector.broadcast %cst_242 : f32 to vector<8x128xf32>
    %580 = arith.maximumf %578, %579 : vector<8x128xf32>
    %581 = vector.broadcast %565 : f32 to vector<8x128xf32>
    %582 = arith.minimumf %573, %581 : vector<8x128xf32>
    %583 = vector.broadcast %559 : f32 to vector<8x128xf32>
    %584 = arith.maximumf %569, %583 : vector<8x128xf32>
    %585 = arith.subf %582, %584 : vector<8x128xf32>
    %cst_243 = arith.constant 0.000000e+00 : f32
    %586 = vector.broadcast %cst_243 : f32 to vector<8x128xf32>
    %587 = arith.maximumf %585, %586 : vector<8x128xf32>
    %588 = arith.mulf %580, %587 : vector<8x128xf32>
    %589 = arith.subf %562, %556 : f32
    %590 = arith.subf %565, %559 : f32
    %591 = arith.mulf %589, %590 : f32
    %592 = vector.broadcast %591 : f32 to vector<8x128xf32>
    %593 = arith.addf %592, %10 : vector<8x128xf32>
    %594 = arith.subf %593, %588 : vector<8x128xf32>
    %595 = tpu.reciprocal %594 {approx = true} : vector<8x128xf32> -> vector<8x128xf32>
    %596 = arith.mulf %594, %595 : vector<8x128xf32>
    %cst_244 = arith.constant 2.000000e+00 : f32
    %597 = vector.broadcast %cst_244 : f32 to vector<8x128xf32>
    %598 = arith.subf %597, %596 : vector<8x128xf32>
    %599 = arith.mulf %595, %598 : vector<8x128xf32>
    %600 = arith.mulf %588, %599 : vector<8x128xf32>
    %601 = vector.shape_cast %600 : vector<8x128xf32> to vector<1x8x128xf32>
    %cst_245 = arith.constant dense<0xFF800000> : vector<1xf32>
    %602 = vector.multi_reduction <maximumf>, %601, %cst_245 [1, 2] : vector<1x8x128xf32> to vector<1xf32>
    %603 = vector.shape_cast %602 : vector<1xf32> to vector<1x1x1xf32>
    %604 = vector.extract %603[0, 0, 0] : f32 from vector<1x1x1xf32>
    %cst_246 = arith.constant 0.000000e+00 : f32
    %605 = arith.cmpf ogt, %604, %cst_246 : f32
    %cst_247 = arith.constant 5.000000e-01 : f32
    %606 = arith.minimumf %cst_247, %604 : f32
    %cst_248 = arith.constant 5.000000e-01 : f32
    %607 = arith.select %605, %606, %cst_248 : f32
    %c1_i32_249 = arith.constant 1 : i32
    %608 = arith.cmpi sgt, %495, %c1_i32_249 : i32
    %cst_250 = arith.constant 0x7F800000 : f32
    %609 = arith.select %608, %607, %cst_250 : f32
    %610 = vector.broadcast %609 : f32 to vector<8x128xf32>
    %611 = arith.cmpf oge, %600, %610 : vector<8x128xf32>
    %612 = arith.ori %553, %611 : vector<8x128xi1>
    %c8_i32_251 = arith.constant 8 : i32
    %613 = arith.addi %493, %c8_i32_251 : i32
    %614 = arith.index_cast %613 : i32 to index
    %615 = memref.load %arg2[%614] : memref<256xf32, #tpu.memory_space<smem>>
    %c1_i32_252 = arith.constant 1 : i32
    %616 = arith.addi %613, %c1_i32_252 : i32
    %617 = arith.index_cast %616 : i32 to index
    %618 = memref.load %arg2[%617] : memref<256xf32, #tpu.memory_space<smem>>
    %c2_i32_253 = arith.constant 2 : i32
    %619 = arith.addi %613, %c2_i32_253 : i32
    %620 = arith.index_cast %619 : i32 to index
    %621 = memref.load %arg2[%620] : memref<256xf32, #tpu.memory_space<smem>>
    %c3_i32_254 = arith.constant 3 : i32
    %622 = arith.addi %613, %c3_i32_254 : i32
    %623 = arith.index_cast %622 : i32 to index
    %624 = memref.load %arg2[%623] : memref<256xf32, #tpu.memory_space<smem>>
    %c0_255 = arith.constant 0 : index
    %c0_256 = arith.constant 0 : index
    %c0_257 = arith.constant 0 : index
    %625 = vector.load %arg3[%c0_255, %c0_256, %c0_257] : memref<4x8x128xf32, #tpu.memory_space<vmem>>, vector<1x8x128xf32>
    %626 = vector.shape_cast %625 : vector<1x8x128xf32> to vector<8x128xf32>
    %c1_258 = arith.constant 1 : index
    %c0_259 = arith.constant 0 : index
    %c0_260 = arith.constant 0 : index
    %627 = vector.load %arg3[%c1_258, %c0_259, %c0_260] : memref<4x8x128xf32, #tpu.memory_space<vmem>>, vector<1x8x128xf32>
    %628 = vector.shape_cast %627 : vector<1x8x128xf32> to vector<8x128xf32>
    %c2_261 = arith.constant 2 : index
    %c0_262 = arith.constant 0 : index
    %c0_263 = arith.constant 0 : index
    %629 = vector.load %arg3[%c2_261, %c0_262, %c0_263] : memref<4x8x128xf32, #tpu.memory_space<vmem>>, vector<1x8x128xf32>
    %630 = vector.shape_cast %629 : vector<1x8x128xf32> to vector<8x128xf32>
    %c3_264 = arith.constant 3 : index
    %c0_265 = arith.constant 0 : index
    %c0_266 = arith.constant 0 : index
    %631 = vector.load %arg3[%c3_264, %c0_265, %c0_266] : memref<4x8x128xf32, #tpu.memory_space<vmem>>, vector<1x8x128xf32>
    %632 = vector.shape_cast %631 : vector<1x8x128xf32> to vector<8x128xf32>
    %633 = vector.broadcast %621 : f32 to vector<8x128xf32>
    %634 = arith.minimumf %630, %633 : vector<8x128xf32>
    %635 = vector.broadcast %615 : f32 to vector<8x128xf32>
    %636 = arith.maximumf %626, %635 : vector<8x128xf32>
    %637 = arith.subf %634, %636 : vector<8x128xf32>
    %cst_267 = arith.constant 0.000000e+00 : f32
    %638 = vector.broadcast %cst_267 : f32 to vector<8x128xf32>
    %639 = arith.maximumf %637, %638 : vector<8x128xf32>
    %640 = vector.broadcast %624 : f32 to vector<8x128xf32>
    %641 = arith.minimumf %632, %640 : vector<8x128xf32>
    %642 = vector.broadcast %618 : f32 to vector<8x128xf32>
    %643 = arith.maximumf %628, %642 : vector<8x128xf32>
    %644 = arith.subf %641, %643 : vector<8x128xf32>
    %cst_268 = arith.constant 0.000000e+00 : f32
    %645 = vector.broadcast %cst_268 : f32 to vector<8x128xf32>
    %646 = arith.maximumf %644, %645 : vector<8x128xf32>
    %647 = arith.mulf %639, %646 : vector<8x128xf32>
    %648 = arith.subf %621, %615 : f32
    %649 = arith.subf %624, %618 : f32
    %650 = arith.mulf %648, %649 : f32
    %651 = vector.broadcast %650 : f32 to vector<8x128xf32>
    %652 = arith.addf %651, %10 : vector<8x128xf32>
    %653 = arith.subf %652, %647 : vector<8x128xf32>
    %654 = tpu.reciprocal %653 {approx = true} : vector<8x128xf32> -> vector<8x128xf32>
    %655 = arith.mulf %653, %654 : vector<8x128xf32>
    %cst_269 = arith.constant 2.000000e+00 : f32
    %656 = vector.broadcast %cst_269 : f32 to vector<8x128xf32>
    %657 = arith.subf %656, %655 : vector<8x128xf32>
    %658 = arith.mulf %654, %657 : vector<8x128xf32>
    %659 = arith.mulf %647, %658 : vector<8x128xf32>
    %660 = vector.shape_cast %659 : vector<8x128xf32> to vector<1x8x128xf32>
    %cst_270 = arith.constant dense<0xFF800000> : vector<1xf32>
    %661 = vector.multi_reduction <maximumf>, %660, %cst_270 [1, 2] : vector<1x8x128xf32> to vector<1xf32>
    %662 = vector.shape_cast %661 : vector<1xf32> to vector<1x1x1xf32>
    %663 = vector.extract %662[0, 0, 0] : f32 from vector<1x1x1xf32>
    %cst_271 = arith.constant 0.000000e+00 : f32
    %664 = arith.cmpf ogt, %663, %cst_271 : f32
    %cst_272 = arith.constant 5.000000e-01 : f32
    %665 = arith.minimumf %cst_272, %663 : f32
    %cst_273 = arith.constant 5.000000e-01 : f32
    %666 = arith.select %664, %665, %cst_273 : f32
    %c2_i32_274 = arith.constant 2 : i32
    %667 = arith.cmpi sgt, %495, %c2_i32_274 : i32
    %cst_275 = arith.constant 0x7F800000 : f32
    %668 = arith.select %667, %666, %cst_275 : f32
    %669 = vector.broadcast %668 : f32 to vector<8x128xf32>
    %670 = arith.cmpf oge, %659, %669 : vector<8x128xf32>
    %671 = arith.ori %612, %670 : vector<8x128xi1>
    %c12_i32_276 = arith.constant 12 : i32
    %672 = arith.addi %493, %c12_i32_276 : i32
    %673 = arith.index_cast %672 : i32 to index
    %674 = memref.load %arg2[%673] : memref<256xf32, #tpu.memory_space<smem>>
    %c1_i32_277 = arith.constant 1 : i32
    %675 = arith.addi %672, %c1_i32_277 : i32
    %676 = arith.index_cast %675 : i32 to index
    %677 = memref.load %arg2[%676] : memref<256xf32, #tpu.memory_space<smem>>
    %c2_i32_278 = arith.constant 2 : i32
    %678 = arith.addi %672, %c2_i32_278 : i32
    %679 = arith.index_cast %678 : i32 to index
    %680 = memref.load %arg2[%679] : memref<256xf32, #tpu.memory_space<smem>>
    %c3_i32_279 = arith.constant 3 : i32
    %681 = arith.addi %672, %c3_i32_279 : i32
    %682 = arith.index_cast %681 : i32 to index
    %683 = memref.load %arg2[%682] : memref<256xf32, #tpu.memory_space<smem>>
    %c0_280 = arith.constant 0 : index
    %c0_281 = arith.constant 0 : index
    %c0_282 = arith.constant 0 : index
    %684 = vector.load %arg3[%c0_280, %c0_281, %c0_282] : memref<4x8x128xf32, #tpu.memory_space<vmem>>, vector<1x8x128xf32>
    %685 = vector.shape_cast %684 : vector<1x8x128xf32> to vector<8x128xf32>
    %c1_283 = arith.constant 1 : index
    %c0_284 = arith.constant 0 : index
    %c0_285 = arith.constant 0 : index
    %686 = vector.load %arg3[%c1_283, %c0_284, %c0_285] : memref<4x8x128xf32, #tpu.memory_space<vmem>>, vector<1x8x128xf32>
    %687 = vector.shape_cast %686 : vector<1x8x128xf32> to vector<8x128xf32>
    %c2_286 = arith.constant 2 : index
    %c0_287 = arith.constant 0 : index
    %c0_288 = arith.constant 0 : index
    %688 = vector.load %arg3[%c2_286, %c0_287, %c0_288] : memref<4x8x128xf32, #tpu.memory_space<vmem>>, vector<1x8x128xf32>
    %689 = vector.shape_cast %688 : vector<1x8x128xf32> to vector<8x128xf32>
    %c3_289 = arith.constant 3 : index
    %c0_290 = arith.constant 0 : index
    %c0_291 = arith.constant 0 : index
    %690 = vector.load %arg3[%c3_289, %c0_290, %c0_291] : memref<4x8x128xf32, #tpu.memory_space<vmem>>, vector<1x8x128xf32>
    %691 = vector.shape_cast %690 : vector<1x8x128xf32> to vector<8x128xf32>
    %692 = vector.broadcast %680 : f32 to vector<8x128xf32>
    %693 = arith.minimumf %689, %692 : vector<8x128xf32>
    %694 = vector.broadcast %674 : f32 to vector<8x128xf32>
    %695 = arith.maximumf %685, %694 : vector<8x128xf32>
    %696 = arith.subf %693, %695 : vector<8x128xf32>
    %cst_292 = arith.constant 0.000000e+00 : f32
    %697 = vector.broadcast %cst_292 : f32 to vector<8x128xf32>
    %698 = arith.maximumf %696, %697 : vector<8x128xf32>
    %699 = vector.broadcast %683 : f32 to vector<8x128xf32>
    %700 = arith.minimumf %691, %699 : vector<8x128xf32>
    %701 = vector.broadcast %677 : f32 to vector<8x128xf32>
    %702 = arith.maximumf %687, %701 : vector<8x128xf32>
    %703 = arith.subf %700, %702 : vector<8x128xf32>
    %cst_293 = arith.constant 0.000000e+00 : f32
    %704 = vector.broadcast %cst_293 : f32 to vector<8x128xf32>
    %705 = arith.maximumf %703, %704 : vector<8x128xf32>
    %706 = arith.mulf %698, %705 : vector<8x128xf32>
    %707 = arith.subf %680, %674 : f32
    %708 = arith.subf %683, %677 : f32
    %709 = arith.mulf %707, %708 : f32
    %710 = vector.broadcast %709 : f32 to vector<8x128xf32>
    %711 = arith.addf %710, %10 : vector<8x128xf32>
    %712 = arith.subf %711, %706 : vector<8x128xf32>
    %713 = tpu.reciprocal %712 {approx = true} : vector<8x128xf32> -> vector<8x128xf32>
    %714 = arith.mulf %712, %713 : vector<8x128xf32>
    %cst_294 = arith.constant 2.000000e+00 : f32
    %715 = vector.broadcast %cst_294 : f32 to vector<8x128xf32>
    %716 = arith.subf %715, %714 : vector<8x128xf32>
    %717 = arith.mulf %713, %716 : vector<8x128xf32>
    %718 = arith.mulf %706, %717 : vector<8x128xf32>
    %719 = vector.shape_cast %718 : vector<8x128xf32> to vector<1x8x128xf32>
    %cst_295 = arith.constant dense<0xFF800000> : vector<1xf32>
    %720 = vector.multi_reduction <maximumf>, %719, %cst_295 [1, 2] : vector<1x8x128xf32> to vector<1xf32>
    %721 = vector.shape_cast %720 : vector<1xf32> to vector<1x1x1xf32>
    %722 = vector.extract %721[0, 0, 0] : f32 from vector<1x1x1xf32>
    %cst_296 = arith.constant 0.000000e+00 : f32
    %723 = arith.cmpf ogt, %722, %cst_296 : f32
    %cst_297 = arith.constant 5.000000e-01 : f32
    %724 = arith.minimumf %cst_297, %722 : f32
    %cst_298 = arith.constant 5.000000e-01 : f32
    %725 = arith.select %723, %724, %cst_298 : f32
    %c3_i32_299 = arith.constant 3 : i32
    %726 = arith.cmpi sgt, %495, %c3_i32_299 : i32
    %cst_300 = arith.constant 0x7F800000 : f32
    %727 = arith.select %726, %725, %cst_300 : f32
    %728 = vector.broadcast %727 : f32 to vector<8x128xf32>
    %729 = arith.cmpf oge, %718, %728 : vector<8x128xf32>
    %730 = arith.ori %671, %729 : vector<8x128xi1>
    %c16_i32_301 = arith.constant 16 : i32
    %731 = arith.addi %493, %c16_i32_301 : i32
    %732 = arith.index_cast %731 : i32 to index
    %733 = memref.load %arg2[%732] : memref<256xf32, #tpu.memory_space<smem>>
    %c1_i32_302 = arith.constant 1 : i32
    %734 = arith.addi %731, %c1_i32_302 : i32
    %735 = arith.index_cast %734 : i32 to index
    %736 = memref.load %arg2[%735] : memref<256xf32, #tpu.memory_space<smem>>
    %c2_i32_303 = arith.constant 2 : i32
    %737 = arith.addi %731, %c2_i32_303 : i32
    %738 = arith.index_cast %737 : i32 to index
    %739 = memref.load %arg2[%738] : memref<256xf32, #tpu.memory_space<smem>>
    %c3_i32_304 = arith.constant 3 : i32
    %740 = arith.addi %731, %c3_i32_304 : i32
    %741 = arith.index_cast %740 : i32 to index
    %742 = memref.load %arg2[%741] : memref<256xf32, #tpu.memory_space<smem>>
    %c0_305 = arith.constant 0 : index
    %c0_306 = arith.constant 0 : index
    %c0_307 = arith.constant 0 : index
    %743 = vector.load %arg3[%c0_305, %c0_306, %c0_307] : memref<4x8x128xf32, #tpu.memory_space<vmem>>, vector<1x8x128xf32>
    %744 = vector.shape_cast %743 : vector<1x8x128xf32> to vector<8x128xf32>
    %c1_308 = arith.constant 1 : index
    %c0_309 = arith.constant 0 : index
    %c0_310 = arith.constant 0 : index
    %745 = vector.load %arg3[%c1_308, %c0_309, %c0_310] : memref<4x8x128xf32, #tpu.memory_space<vmem>>, vector<1x8x128xf32>
    %746 = vector.shape_cast %745 : vector<1x8x128xf32> to vector<8x128xf32>
    %c2_311 = arith.constant 2 : index
    %c0_312 = arith.constant 0 : index
    %c0_313 = arith.constant 0 : index
    %747 = vector.load %arg3[%c2_311, %c0_312, %c0_313] : memref<4x8x128xf32, #tpu.memory_space<vmem>>, vector<1x8x128xf32>
    %748 = vector.shape_cast %747 : vector<1x8x128xf32> to vector<8x128xf32>
    %c3_314 = arith.constant 3 : index
    %c0_315 = arith.constant 0 : index
    %c0_316 = arith.constant 0 : index
    %749 = vector.load %arg3[%c3_314, %c0_315, %c0_316] : memref<4x8x128xf32, #tpu.memory_space<vmem>>, vector<1x8x128xf32>
    %750 = vector.shape_cast %749 : vector<1x8x128xf32> to vector<8x128xf32>
    %751 = vector.broadcast %739 : f32 to vector<8x128xf32>
    %752 = arith.minimumf %748, %751 : vector<8x128xf32>
    %753 = vector.broadcast %733 : f32 to vector<8x128xf32>
    %754 = arith.maximumf %744, %753 : vector<8x128xf32>
    %755 = arith.subf %752, %754 : vector<8x128xf32>
    %cst_317 = arith.constant 0.000000e+00 : f32
    %756 = vector.broadcast %cst_317 : f32 to vector<8x128xf32>
    %757 = arith.maximumf %755, %756 : vector<8x128xf32>
    %758 = vector.broadcast %742 : f32 to vector<8x128xf32>
    %759 = arith.minimumf %750, %758 : vector<8x128xf32>
    %760 = vector.broadcast %736 : f32 to vector<8x128xf32>
    %761 = arith.maximumf %746, %760 : vector<8x128xf32>
    %762 = arith.subf %759, %761 : vector<8x128xf32>
    %cst_318 = arith.constant 0.000000e+00 : f32
    %763 = vector.broadcast %cst_318 : f32 to vector<8x128xf32>
    %764 = arith.maximumf %762, %763 : vector<8x128xf32>
    %765 = arith.mulf %757, %764 : vector<8x128xf32>
    %766 = arith.subf %739, %733 : f32
    %767 = arith.subf %742, %736 : f32
    %768 = arith.mulf %766, %767 : f32
    %769 = vector.broadcast %768 : f32 to vector<8x128xf32>
    %770 = arith.addf %769, %10 : vector<8x128xf32>
    %771 = arith.subf %770, %765 : vector<8x128xf32>
    %772 = tpu.reciprocal %771 {approx = true} : vector<8x128xf32> -> vector<8x128xf32>
    %773 = arith.mulf %771, %772 : vector<8x128xf32>
    %cst_319 = arith.constant 2.000000e+00 : f32
    %774 = vector.broadcast %cst_319 : f32 to vector<8x128xf32>
    %775 = arith.subf %774, %773 : vector<8x128xf32>
    %776 = arith.mulf %772, %775 : vector<8x128xf32>
    %777 = arith.mulf %765, %776 : vector<8x128xf32>
    %778 = vector.shape_cast %777 : vector<8x128xf32> to vector<1x8x128xf32>
    %cst_320 = arith.constant dense<0xFF800000> : vector<1xf32>
    %779 = vector.multi_reduction <maximumf>, %778, %cst_320 [1, 2] : vector<1x8x128xf32> to vector<1xf32>
    %780 = vector.shape_cast %779 : vector<1xf32> to vector<1x1x1xf32>
    %781 = vector.extract %780[0, 0, 0] : f32 from vector<1x1x1xf32>
    %cst_321 = arith.constant 0.000000e+00 : f32
    %782 = arith.cmpf ogt, %781, %cst_321 : f32
    %cst_322 = arith.constant 5.000000e-01 : f32
    %783 = arith.minimumf %cst_322, %781 : f32
    %cst_323 = arith.constant 5.000000e-01 : f32
    %784 = arith.select %782, %783, %cst_323 : f32
    %c4_i32_324 = arith.constant 4 : i32
    %785 = arith.cmpi sgt, %495, %c4_i32_324 : i32
    %cst_325 = arith.constant 0x7F800000 : f32
    %786 = arith.select %785, %784, %cst_325 : f32
    %787 = vector.broadcast %786 : f32 to vector<8x128xf32>
    %788 = arith.cmpf oge, %777, %787 : vector<8x128xf32>
    %789 = arith.ori %730, %788 : vector<8x128xi1>
    %c20_i32_326 = arith.constant 20 : i32
    %790 = arith.addi %493, %c20_i32_326 : i32
    %791 = arith.index_cast %790 : i32 to index
    %792 = memref.load %arg2[%791] : memref<256xf32, #tpu.memory_space<smem>>
    %c1_i32_327 = arith.constant 1 : i32
    %793 = arith.addi %790, %c1_i32_327 : i32
    %794 = arith.index_cast %793 : i32 to index
    %795 = memref.load %arg2[%794] : memref<256xf32, #tpu.memory_space<smem>>
    %c2_i32_328 = arith.constant 2 : i32
    %796 = arith.addi %790, %c2_i32_328 : i32
    %797 = arith.index_cast %796 : i32 to index
    %798 = memref.load %arg2[%797] : memref<256xf32, #tpu.memory_space<smem>>
    %c3_i32_329 = arith.constant 3 : i32
    %799 = arith.addi %790, %c3_i32_329 : i32
    %800 = arith.index_cast %799 : i32 to index
    %801 = memref.load %arg2[%800] : memref<256xf32, #tpu.memory_space<smem>>
    %c0_330 = arith.constant 0 : index
    %c0_331 = arith.constant 0 : index
    %c0_332 = arith.constant 0 : index
    %802 = vector.load %arg3[%c0_330, %c0_331, %c0_332] : memref<4x8x128xf32, #tpu.memory_space<vmem>>, vector<1x8x128xf32>
    %803 = vector.shape_cast %802 : vector<1x8x128xf32> to vector<8x128xf32>
    %c1_333 = arith.constant 1 : index
    %c0_334 = arith.constant 0 : index
    %c0_335 = arith.constant 0 : index
    %804 = vector.load %arg3[%c1_333, %c0_334, %c0_335] : memref<4x8x128xf32, #tpu.memory_space<vmem>>, vector<1x8x128xf32>
    %805 = vector.shape_cast %804 : vector<1x8x128xf32> to vector<8x128xf32>
    %c2_336 = arith.constant 2 : index
    %c0_337 = arith.constant 0 : index
    %c0_338 = arith.constant 0 : index
    %806 = vector.load %arg3[%c2_336, %c0_337, %c0_338] : memref<4x8x128xf32, #tpu.memory_space<vmem>>, vector<1x8x128xf32>
    %807 = vector.shape_cast %806 : vector<1x8x128xf32> to vector<8x128xf32>
    %c3_339 = arith.constant 3 : index
    %c0_340 = arith.constant 0 : index
    %c0_341 = arith.constant 0 : index
    %808 = vector.load %arg3[%c3_339, %c0_340, %c0_341] : memref<4x8x128xf32, #tpu.memory_space<vmem>>, vector<1x8x128xf32>
    %809 = vector.shape_cast %808 : vector<1x8x128xf32> to vector<8x128xf32>
    %810 = vector.broadcast %798 : f32 to vector<8x128xf32>
    %811 = arith.minimumf %807, %810 : vector<8x128xf32>
    %812 = vector.broadcast %792 : f32 to vector<8x128xf32>
    %813 = arith.maximumf %803, %812 : vector<8x128xf32>
    %814 = arith.subf %811, %813 : vector<8x128xf32>
    %cst_342 = arith.constant 0.000000e+00 : f32
    %815 = vector.broadcast %cst_342 : f32 to vector<8x128xf32>
    %816 = arith.maximumf %814, %815 : vector<8x128xf32>
    %817 = vector.broadcast %801 : f32 to vector<8x128xf32>
    %818 = arith.minimumf %809, %817 : vector<8x128xf32>
    %819 = vector.broadcast %795 : f32 to vector<8x128xf32>
    %820 = arith.maximumf %805, %819 : vector<8x128xf32>
    %821 = arith.subf %818, %820 : vector<8x128xf32>
    %cst_343 = arith.constant 0.000000e+00 : f32
    %822 = vector.broadcast %cst_343 : f32 to vector<8x128xf32>
    %823 = arith.maximumf %821, %822 : vector<8x128xf32>
    %824 = arith.mulf %816, %823 : vector<8x128xf32>
    %825 = arith.subf %798, %792 : f32
    %826 = arith.subf %801, %795 : f32
    %827 = arith.mulf %825, %826 : f32
    %828 = vector.broadcast %827 : f32 to vector<8x128xf32>
    %829 = arith.addf %828, %10 : vector<8x128xf32>
    %830 = arith.subf %829, %824 : vector<8x128xf32>
    %831 = tpu.reciprocal %830 {approx = true} : vector<8x128xf32> -> vector<8x128xf32>
    %832 = arith.mulf %830, %831 : vector<8x128xf32>
    %cst_344 = arith.constant 2.000000e+00 : f32
    %833 = vector.broadcast %cst_344 : f32 to vector<8x128xf32>
    %834 = arith.subf %833, %832 : vector<8x128xf32>
    %835 = arith.mulf %831, %834 : vector<8x128xf32>
    %836 = arith.mulf %824, %835 : vector<8x128xf32>
    %837 = vector.shape_cast %836 : vector<8x128xf32> to vector<1x8x128xf32>
    %cst_345 = arith.constant dense<0xFF800000> : vector<1xf32>
    %838 = vector.multi_reduction <maximumf>, %837, %cst_345 [1, 2] : vector<1x8x128xf32> to vector<1xf32>
    %839 = vector.shape_cast %838 : vector<1xf32> to vector<1x1x1xf32>
    %840 = vector.extract %839[0, 0, 0] : f32 from vector<1x1x1xf32>
    %cst_346 = arith.constant 0.000000e+00 : f32
    %841 = arith.cmpf ogt, %840, %cst_346 : f32
    %cst_347 = arith.constant 5.000000e-01 : f32
    %842 = arith.minimumf %cst_347, %840 : f32
    %cst_348 = arith.constant 5.000000e-01 : f32
    %843 = arith.select %841, %842, %cst_348 : f32
    %c5_i32_349 = arith.constant 5 : i32
    %844 = arith.cmpi sgt, %495, %c5_i32_349 : i32
    %cst_350 = arith.constant 0x7F800000 : f32
    %845 = arith.select %844, %843, %cst_350 : f32
    %846 = vector.broadcast %845 : f32 to vector<8x128xf32>
    %847 = arith.cmpf oge, %836, %846 : vector<8x128xf32>
    %848 = arith.ori %789, %847 : vector<8x128xi1>
    %c24_i32_351 = arith.constant 24 : i32
    %849 = arith.addi %493, %c24_i32_351 : i32
    %850 = arith.index_cast %849 : i32 to index
    %851 = memref.load %arg2[%850] : memref<256xf32, #tpu.memory_space<smem>>
    %c1_i32_352 = arith.constant 1 : i32
    %852 = arith.addi %849, %c1_i32_352 : i32
    %853 = arith.index_cast %852 : i32 to index
    %854 = memref.load %arg2[%853] : memref<256xf32, #tpu.memory_space<smem>>
    %c2_i32_353 = arith.constant 2 : i32
    %855 = arith.addi %849, %c2_i32_353 : i32
    %856 = arith.index_cast %855 : i32 to index
    %857 = memref.load %arg2[%856] : memref<256xf32, #tpu.memory_space<smem>>
    %c3_i32_354 = arith.constant 3 : i32
    %858 = arith.addi %849, %c3_i32_354 : i32
    %859 = arith.index_cast %858 : i32 to index
    %860 = memref.load %arg2[%859] : memref<256xf32, #tpu.memory_space<smem>>
    %c0_355 = arith.constant 0 : index
    %c0_356 = arith.constant 0 : index
    %c0_357 = arith.constant 0 : index
    %861 = vector.load %arg3[%c0_355, %c0_356, %c0_357] : memref<4x8x128xf32, #tpu.memory_space<vmem>>, vector<1x8x128xf32>
    %862 = vector.shape_cast %861 : vector<1x8x128xf32> to vector<8x128xf32>
    %c1_358 = arith.constant 1 : index
    %c0_359 = arith.constant 0 : index
    %c0_360 = arith.constant 0 : index
    %863 = vector.load %arg3[%c1_358, %c0_359, %c0_360] : memref<4x8x128xf32, #tpu.memory_space<vmem>>, vector<1x8x128xf32>
    %864 = vector.shape_cast %863 : vector<1x8x128xf32> to vector<8x128xf32>
    %c2_361 = arith.constant 2 : index
    %c0_362 = arith.constant 0 : index
    %c0_363 = arith.constant 0 : index
    %865 = vector.load %arg3[%c2_361, %c0_362, %c0_363] : memref<4x8x128xf32, #tpu.memory_space<vmem>>, vector<1x8x128xf32>
    %866 = vector.shape_cast %865 : vector<1x8x128xf32> to vector<8x128xf32>
    %c3_364 = arith.constant 3 : index
    %c0_365 = arith.constant 0 : index
    %c0_366 = arith.constant 0 : index
    %867 = vector.load %arg3[%c3_364, %c0_365, %c0_366] : memref<4x8x128xf32, #tpu.memory_space<vmem>>, vector<1x8x128xf32>
    %868 = vector.shape_cast %867 : vector<1x8x128xf32> to vector<8x128xf32>
    %869 = vector.broadcast %857 : f32 to vector<8x128xf32>
    %870 = arith.minimumf %866, %869 : vector<8x128xf32>
    %871 = vector.broadcast %851 : f32 to vector<8x128xf32>
    %872 = arith.maximumf %862, %871 : vector<8x128xf32>
    %873 = arith.subf %870, %872 : vector<8x128xf32>
    %cst_367 = arith.constant 0.000000e+00 : f32
    %874 = vector.broadcast %cst_367 : f32 to vector<8x128xf32>
    %875 = arith.maximumf %873, %874 : vector<8x128xf32>
    %876 = vector.broadcast %860 : f32 to vector<8x128xf32>
    %877 = arith.minimumf %868, %876 : vector<8x128xf32>
    %878 = vector.broadcast %854 : f32 to vector<8x128xf32>
    %879 = arith.maximumf %864, %878 : vector<8x128xf32>
    %880 = arith.subf %877, %879 : vector<8x128xf32>
    %cst_368 = arith.constant 0.000000e+00 : f32
    %881 = vector.broadcast %cst_368 : f32 to vector<8x128xf32>
    %882 = arith.maximumf %880, %881 : vector<8x128xf32>
    %883 = arith.mulf %875, %882 : vector<8x128xf32>
    %884 = arith.subf %857, %851 : f32
    %885 = arith.subf %860, %854 : f32
    %886 = arith.mulf %884, %885 : f32
    %887 = vector.broadcast %886 : f32 to vector<8x128xf32>
    %888 = arith.addf %887, %10 : vector<8x128xf32>
    %889 = arith.subf %888, %883 : vector<8x128xf32>
    %890 = tpu.reciprocal %889 {approx = true} : vector<8x128xf32> -> vector<8x128xf32>
    %891 = arith.mulf %889, %890 : vector<8x128xf32>
    %cst_369 = arith.constant 2.000000e+00 : f32
    %892 = vector.broadcast %cst_369 : f32 to vector<8x128xf32>
    %893 = arith.subf %892, %891 : vector<8x128xf32>
    %894 = arith.mulf %890, %893 : vector<8x128xf32>
    %895 = arith.mulf %883, %894 : vector<8x128xf32>
    %896 = vector.shape_cast %895 : vector<8x128xf32> to vector<1x8x128xf32>
    %cst_370 = arith.constant dense<0xFF800000> : vector<1xf32>
    %897 = vector.multi_reduction <maximumf>, %896, %cst_370 [1, 2] : vector<1x8x128xf32> to vector<1xf32>
    %898 = vector.shape_cast %897 : vector<1xf32> to vector<1x1x1xf32>
    %899 = vector.extract %898[0, 0, 0] : f32 from vector<1x1x1xf32>
    %cst_371 = arith.constant 0.000000e+00 : f32
    %900 = arith.cmpf ogt, %899, %cst_371 : f32
    %cst_372 = arith.constant 5.000000e-01 : f32
    %901 = arith.minimumf %cst_372, %899 : f32
    %cst_373 = arith.constant 5.000000e-01 : f32
    %902 = arith.select %900, %901, %cst_373 : f32
    %c6_i32_374 = arith.constant 6 : i32
    %903 = arith.cmpi sgt, %495, %c6_i32_374 : i32
    %cst_375 = arith.constant 0x7F800000 : f32
    %904 = arith.select %903, %902, %cst_375 : f32
    %905 = vector.broadcast %904 : f32 to vector<8x128xf32>
    %906 = arith.cmpf oge, %895, %905 : vector<8x128xf32>
    %907 = arith.ori %848, %906 : vector<8x128xi1>
    %c28_i32_376 = arith.constant 28 : i32
    %908 = arith.addi %493, %c28_i32_376 : i32
    %909 = arith.index_cast %908 : i32 to index
    %910 = memref.load %arg2[%909] : memref<256xf32, #tpu.memory_space<smem>>
    %c1_i32_377 = arith.constant 1 : i32
    %911 = arith.addi %908, %c1_i32_377 : i32
    %912 = arith.index_cast %911 : i32 to index
    %913 = memref.load %arg2[%912] : memref<256xf32, #tpu.memory_space<smem>>
    %c2_i32_378 = arith.constant 2 : i32
    %914 = arith.addi %908, %c2_i32_378 : i32
    %915 = arith.index_cast %914 : i32 to index
    %916 = memref.load %arg2[%915] : memref<256xf32, #tpu.memory_space<smem>>
    %c3_i32_379 = arith.constant 3 : i32
    %917 = arith.addi %908, %c3_i32_379 : i32
    %918 = arith.index_cast %917 : i32 to index
    %919 = memref.load %arg2[%918] : memref<256xf32, #tpu.memory_space<smem>>
    %c0_380 = arith.constant 0 : index
    %c0_381 = arith.constant 0 : index
    %c0_382 = arith.constant 0 : index
    %920 = vector.load %arg3[%c0_380, %c0_381, %c0_382] : memref<4x8x128xf32, #tpu.memory_space<vmem>>, vector<1x8x128xf32>
    %921 = vector.shape_cast %920 : vector<1x8x128xf32> to vector<8x128xf32>
    %c1_383 = arith.constant 1 : index
    %c0_384 = arith.constant 0 : index
    %c0_385 = arith.constant 0 : index
    %922 = vector.load %arg3[%c1_383, %c0_384, %c0_385] : memref<4x8x128xf32, #tpu.memory_space<vmem>>, vector<1x8x128xf32>
    %923 = vector.shape_cast %922 : vector<1x8x128xf32> to vector<8x128xf32>
    %c2_386 = arith.constant 2 : index
    %c0_387 = arith.constant 0 : index
    %c0_388 = arith.constant 0 : index
    %924 = vector.load %arg3[%c2_386, %c0_387, %c0_388] : memref<4x8x128xf32, #tpu.memory_space<vmem>>, vector<1x8x128xf32>
    %925 = vector.shape_cast %924 : vector<1x8x128xf32> to vector<8x128xf32>
    %c3_389 = arith.constant 3 : index
    %c0_390 = arith.constant 0 : index
    %c0_391 = arith.constant 0 : index
    %926 = vector.load %arg3[%c3_389, %c0_390, %c0_391] : memref<4x8x128xf32, #tpu.memory_space<vmem>>, vector<1x8x128xf32>
    %927 = vector.shape_cast %926 : vector<1x8x128xf32> to vector<8x128xf32>
    %928 = vector.broadcast %916 : f32 to vector<8x128xf32>
    %929 = arith.minimumf %925, %928 : vector<8x128xf32>
    %930 = vector.broadcast %910 : f32 to vector<8x128xf32>
    %931 = arith.maximumf %921, %930 : vector<8x128xf32>
    %932 = arith.subf %929, %931 : vector<8x128xf32>
    %cst_392 = arith.constant 0.000000e+00 : f32
    %933 = vector.broadcast %cst_392 : f32 to vector<8x128xf32>
    %934 = arith.maximumf %932, %933 : vector<8x128xf32>
    %935 = vector.broadcast %919 : f32 to vector<8x128xf32>
    %936 = arith.minimumf %927, %935 : vector<8x128xf32>
    %937 = vector.broadcast %913 : f32 to vector<8x128xf32>
    %938 = arith.maximumf %923, %937 : vector<8x128xf32>
    %939 = arith.subf %936, %938 : vector<8x128xf32>
    %cst_393 = arith.constant 0.000000e+00 : f32
    %940 = vector.broadcast %cst_393 : f32 to vector<8x128xf32>
    %941 = arith.maximumf %939, %940 : vector<8x128xf32>
    %942 = arith.mulf %934, %941 : vector<8x128xf32>
    %943 = arith.subf %916, %910 : f32
    %944 = arith.subf %919, %913 : f32
    %945 = arith.mulf %943, %944 : f32
    %946 = vector.broadcast %945 : f32 to vector<8x128xf32>
    %947 = arith.addf %946, %10 : vector<8x128xf32>
    %948 = arith.subf %947, %942 : vector<8x128xf32>
    %949 = tpu.reciprocal %948 {approx = true} : vector<8x128xf32> -> vector<8x128xf32>
    %950 = arith.mulf %948, %949 : vector<8x128xf32>
    %cst_394 = arith.constant 2.000000e+00 : f32
    %951 = vector.broadcast %cst_394 : f32 to vector<8x128xf32>
    %952 = arith.subf %951, %950 : vector<8x128xf32>
    %953 = arith.mulf %949, %952 : vector<8x128xf32>
    %954 = arith.mulf %942, %953 : vector<8x128xf32>
    %955 = vector.shape_cast %954 : vector<8x128xf32> to vector<1x8x128xf32>
    %cst_395 = arith.constant dense<0xFF800000> : vector<1xf32>
    %956 = vector.multi_reduction <maximumf>, %955, %cst_395 [1, 2] : vector<1x8x128xf32> to vector<1xf32>
    %957 = vector.shape_cast %956 : vector<1xf32> to vector<1x1x1xf32>
    %958 = vector.extract %957[0, 0, 0] : f32 from vector<1x1x1xf32>
    %cst_396 = arith.constant 0.000000e+00 : f32
    %959 = arith.cmpf ogt, %958, %cst_396 : f32
    %cst_397 = arith.constant 5.000000e-01 : f32
    %960 = arith.minimumf %cst_397, %958 : f32
    %cst_398 = arith.constant 5.000000e-01 : f32
    %961 = arith.select %959, %960, %cst_398 : f32
    %c7_i32_399 = arith.constant 7 : i32
    %962 = arith.cmpi sgt, %495, %c7_i32_399 : i32
    %cst_400 = arith.constant 0x7F800000 : f32
    %963 = arith.select %962, %961, %cst_400 : f32
    %964 = vector.broadcast %963 : f32 to vector<8x128xf32>
    %965 = arith.cmpf oge, %954, %964 : vector<8x128xf32>
    %966 = arith.ori %907, %965 : vector<8x128xi1>
    %967 = arith.extui %966 : vector<8x128xi1> to vector<8x128xi32>
    %c1_401 = arith.constant 1 : index
    %c0_402 = arith.constant 0 : index
    %c0_403 = arith.constant 0 : index
    %968 = vector.load %arg4[%c1_401, %c0_402, %c0_403] : memref<4x8x128xi32, #tpu.memory_space<vmem>>, vector<1x8x128xi32>
    %969 = vector.shape_cast %968 : vector<1x8x128xi32> to vector<8x128xi32>
    %970 = vector.shape_cast %967 : vector<8x128xi32> to vector<1x8x128xi32>
    tpu.vector_store %arg4[%c1_401, %c0_402, %c0_403], %970 {strides = array<i32>} : memref<4x8x128xi32, #tpu.memory_space<vmem>>, vector<1x8x128xi32>,
    %c4_i32_404 = arith.constant 4 : i32
    %971 = arith.muli %arg0, %c4_i32_404 : i32
    %c2_i32_405 = arith.constant 2 : i32
    %972 = arith.addi %971, %c2_i32_405 : i32
    %c32_i32_406 = arith.constant 32 : i32
    %973 = arith.muli %972, %c32_i32_406 : i32
    %974 = arith.index_cast %972 : i32 to index
    %975 = memref.load %arg1[%974] : memref<8xi32, #tpu.memory_space<smem>>
    %c0_i32_407 = arith.constant 0 : i32
    %976 = arith.addi %973, %c0_i32_407 : i32
    %977 = arith.index_cast %976 : i32 to index
    %978 = memref.load %arg2[%977] : memref<256xf32, #tpu.memory_space<smem>>
    %c1_i32_408 = arith.constant 1 : i32
    %979 = arith.addi %976, %c1_i32_408 : i32
    %980 = arith.index_cast %979 : i32 to index
    %981 = memref.load %arg2[%980] : memref<256xf32, #tpu.memory_space<smem>>
    %c2_i32_409 = arith.constant 2 : i32
    %982 = arith.addi %976, %c2_i32_409 : i32
    %983 = arith.index_cast %982 : i32 to index
    %984 = memref.load %arg2[%983] : memref<256xf32, #tpu.memory_space<smem>>
    %c3_i32_410 = arith.constant 3 : i32
    %985 = arith.addi %976, %c3_i32_410 : i32
    %986 = arith.index_cast %985 : i32 to index
    %987 = memref.load %arg2[%986] : memref<256xf32, #tpu.memory_space<smem>>
    %c0_411 = arith.constant 0 : index
    %c0_412 = arith.constant 0 : index
    %c0_413 = arith.constant 0 : index
    %988 = vector.load %arg3[%c0_411, %c0_412, %c0_413] : memref<4x8x128xf32, #tpu.memory_space<vmem>>, vector<1x8x128xf32>
    %989 = vector.shape_cast %988 : vector<1x8x128xf32> to vector<8x128xf32>
    %c1_414 = arith.constant 1 : index
    %c0_415 = arith.constant 0 : index
    %c0_416 = arith.constant 0 : index
    %990 = vector.load %arg3[%c1_414, %c0_415, %c0_416] : memref<4x8x128xf32, #tpu.memory_space<vmem>>, vector<1x8x128xf32>
    %991 = vector.shape_cast %990 : vector<1x8x128xf32> to vector<8x128xf32>
    %c2_417 = arith.constant 2 : index
    %c0_418 = arith.constant 0 : index
    %c0_419 = arith.constant 0 : index
    %992 = vector.load %arg3[%c2_417, %c0_418, %c0_419] : memref<4x8x128xf32, #tpu.memory_space<vmem>>, vector<1x8x128xf32>
    %993 = vector.shape_cast %992 : vector<1x8x128xf32> to vector<8x128xf32>
    %c3_420 = arith.constant 3 : index
    %c0_421 = arith.constant 0 : index
    %c0_422 = arith.constant 0 : index
    %994 = vector.load %arg3[%c3_420, %c0_421, %c0_422] : memref<4x8x128xf32, #tpu.memory_space<vmem>>, vector<1x8x128xf32>
    %995 = vector.shape_cast %994 : vector<1x8x128xf32> to vector<8x128xf32>
    %996 = vector.broadcast %984 : f32 to vector<8x128xf32>
    %997 = arith.minimumf %993, %996 : vector<8x128xf32>
    %998 = vector.broadcast %978 : f32 to vector<8x128xf32>
    %999 = arith.maximumf %989, %998 : vector<8x128xf32>
    %1000 = arith.subf %997, %999 : vector<8x128xf32>
    %cst_423 = arith.constant 0.000000e+00 : f32
    %1001 = vector.broadcast %cst_423 : f32 to vector<8x128xf32>
    %1002 = arith.maximumf %1000, %1001 : vector<8x128xf32>
    %1003 = vector.broadcast %987 : f32 to vector<8x128xf32>
    %1004 = arith.minimumf %995, %1003 : vector<8x128xf32>
    %1005 = vector.broadcast %981 : f32 to vector<8x128xf32>
    %1006 = arith.maximumf %991, %1005 : vector<8x128xf32>
    %1007 = arith.subf %1004, %1006 : vector<8x128xf32>
    %cst_424 = arith.constant 0.000000e+00 : f32
    %1008 = vector.broadcast %cst_424 : f32 to vector<8x128xf32>
    %1009 = arith.maximumf %1007, %1008 : vector<8x128xf32>
    %1010 = arith.mulf %1002, %1009 : vector<8x128xf32>
    %1011 = arith.subf %984, %978 : f32
    %1012 = arith.subf %987, %981 : f32
    %1013 = arith.mulf %1011, %1012 : f32
    %1014 = vector.broadcast %1013 : f32 to vector<8x128xf32>
    %1015 = arith.addf %1014, %10 : vector<8x128xf32>
    %1016 = arith.subf %1015, %1010 : vector<8x128xf32>
    %1017 = tpu.reciprocal %1016 {approx = true} : vector<8x128xf32> -> vector<8x128xf32>
    %1018 = arith.mulf %1016, %1017 : vector<8x128xf32>
    %cst_425 = arith.constant 2.000000e+00 : f32
    %1019 = vector.broadcast %cst_425 : f32 to vector<8x128xf32>
    %1020 = arith.subf %1019, %1018 : vector<8x128xf32>
    %1021 = arith.mulf %1017, %1020 : vector<8x128xf32>
    %1022 = arith.mulf %1010, %1021 : vector<8x128xf32>
    %1023 = vector.shape_cast %1022 : vector<8x128xf32> to vector<1x8x128xf32>
    %cst_426 = arith.constant dense<0xFF800000> : vector<1xf32>
    %1024 = vector.multi_reduction <maximumf>, %1023, %cst_426 [1, 2] : vector<1x8x128xf32> to vector<1xf32>
    %1025 = vector.shape_cast %1024 : vector<1xf32> to vector<1x1x1xf32>
    %1026 = vector.extract %1025[0, 0, 0] : f32 from vector<1x1x1xf32>
    %cst_427 = arith.constant 0.000000e+00 : f32
    %1027 = arith.cmpf ogt, %1026, %cst_427 : f32
    %cst_428 = arith.constant 5.000000e-01 : f32
    %1028 = arith.minimumf %cst_428, %1026 : f32
    %cst_429 = arith.constant 5.000000e-01 : f32
    %1029 = arith.select %1027, %1028, %cst_429 : f32
    %c0_i32_430 = arith.constant 0 : i32
    %1030 = arith.cmpi sgt, %975, %c0_i32_430 : i32
    %cst_431 = arith.constant 0x7F800000 : f32
    %1031 = arith.select %1030, %1029, %cst_431 : f32
    %1032 = vector.broadcast %1031 : f32 to vector<8x128xf32>
    %1033 = arith.cmpf oge, %1022, %1032 : vector<8x128xf32>
    %c4_i32_432 = arith.constant 4 : i32
    %1034 = arith.addi %973, %c4_i32_432 : i32
    %1035 = arith.index_cast %1034 : i32 to index
    %1036 = memref.load %arg2[%1035] : memref<256xf32, #tpu.memory_space<smem>>
    %c1_i32_433 = arith.constant 1 : i32
    %1037 = arith.addi %1034, %c1_i32_433 : i32
    %1038 = arith.index_cast %1037 : i32 to index
    %1039 = memref.load %arg2[%1038] : memref<256xf32, #tpu.memory_space<smem>>
    %c2_i32_434 = arith.constant 2 : i32
    %1040 = arith.addi %1034, %c2_i32_434 : i32
    %1041 = arith.index_cast %1040 : i32 to index
    %1042 = memref.load %arg2[%1041] : memref<256xf32, #tpu.memory_space<smem>>
    %c3_i32_435 = arith.constant 3 : i32
    %1043 = arith.addi %1034, %c3_i32_435 : i32
    %1044 = arith.index_cast %1043 : i32 to index
    %1045 = memref.load %arg2[%1044] : memref<256xf32, #tpu.memory_space<smem>>
    %c0_436 = arith.constant 0 : index
    %c0_437 = arith.constant 0 : index
    %c0_438 = arith.constant 0 : index
    %1046 = vector.load %arg3[%c0_436, %c0_437, %c0_438] : memref<4x8x128xf32, #tpu.memory_space<vmem>>, vector<1x8x128xf32>
    %1047 = vector.shape_cast %1046 : vector<1x8x128xf32> to vector<8x128xf32>
    %c1_439 = arith.constant 1 : index
    %c0_440 = arith.constant 0 : index
    %c0_441 = arith.constant 0 : index
    %1048 = vector.load %arg3[%c1_439, %c0_440, %c0_441] : memref<4x8x128xf32, #tpu.memory_space<vmem>>, vector<1x8x128xf32>
    %1049 = vector.shape_cast %1048 : vector<1x8x128xf32> to vector<8x128xf32>
    %c2_442 = arith.constant 2 : index
    %c0_443 = arith.constant 0 : index
    %c0_444 = arith.constant 0 : index
    %1050 = vector.load %arg3[%c2_442, %c0_443, %c0_444] : memref<4x8x128xf32, #tpu.memory_space<vmem>>, vector<1x8x128xf32>
    %1051 = vector.shape_cast %1050 : vector<1x8x128xf32> to vector<8x128xf32>
    %c3_445 = arith.constant 3 : index
    %c0_446 = arith.constant 0 : index
    %c0_447 = arith.constant 0 : index
    %1052 = vector.load %arg3[%c3_445, %c0_446, %c0_447] : memref<4x8x128xf32, #tpu.memory_space<vmem>>, vector<1x8x128xf32>
    %1053 = vector.shape_cast %1052 : vector<1x8x128xf32> to vector<8x128xf32>
    %1054 = vector.broadcast %1042 : f32 to vector<8x128xf32>
    %1055 = arith.minimumf %1051, %1054 : vector<8x128xf32>
    %1056 = vector.broadcast %1036 : f32 to vector<8x128xf32>
    %1057 = arith.maximumf %1047, %1056 : vector<8x128xf32>
    %1058 = arith.subf %1055, %1057 : vector<8x128xf32>
    %cst_448 = arith.constant 0.000000e+00 : f32
    %1059 = vector.broadcast %cst_448 : f32 to vector<8x128xf32>
    %1060 = arith.maximumf %1058, %1059 : vector<8x128xf32>
    %1061 = vector.broadcast %1045 : f32 to vector<8x128xf32>
    %1062 = arith.minimumf %1053, %1061 : vector<8x128xf32>
    %1063 = vector.broadcast %1039 : f32 to vector<8x128xf32>
    %1064 = arith.maximumf %1049, %1063 : vector<8x128xf32>
    %1065 = arith.subf %1062, %1064 : vector<8x128xf32>
    %cst_449 = arith.constant 0.000000e+00 : f32
    %1066 = vector.broadcast %cst_449 : f32 to vector<8x128xf32>
    %1067 = arith.maximumf %1065, %1066 : vector<8x128xf32>
    %1068 = arith.mulf %1060, %1067 : vector<8x128xf32>
    %1069 = arith.subf %1042, %1036 : f32
    %1070 = arith.subf %1045, %1039 : f32
    %1071 = arith.mulf %1069, %1070 : f32
    %1072 = vector.broadcast %1071 : f32 to vector<8x128xf32>
    %1073 = arith.addf %1072, %10 : vector<8x128xf32>
    %1074 = arith.subf %1073, %1068 : vector<8x128xf32>
    %1075 = tpu.reciprocal %1074 {approx = true} : vector<8x128xf32> -> vector<8x128xf32>
    %1076 = arith.mulf %1074, %1075 : vector<8x128xf32>
    %cst_450 = arith.constant 2.000000e+00 : f32
    %1077 = vector.broadcast %cst_450 : f32 to vector<8x128xf32>
    %1078 = arith.subf %1077, %1076 : vector<8x128xf32>
    %1079 = arith.mulf %1075, %1078 : vector<8x128xf32>
    %1080 = arith.mulf %1068, %1079 : vector<8x128xf32>
    %1081 = vector.shape_cast %1080 : vector<8x128xf32> to vector<1x8x128xf32>
    %cst_451 = arith.constant dense<0xFF800000> : vector<1xf32>
    %1082 = vector.multi_reduction <maximumf>, %1081, %cst_451 [1, 2] : vector<1x8x128xf32> to vector<1xf32>
    %1083 = vector.shape_cast %1082 : vector<1xf32> to vector<1x1x1xf32>
    %1084 = vector.extract %1083[0, 0, 0] : f32 from vector<1x1x1xf32>
    %cst_452 = arith.constant 0.000000e+00 : f32
    %1085 = arith.cmpf ogt, %1084, %cst_452 : f32
    %cst_453 = arith.constant 5.000000e-01 : f32
    %1086 = arith.minimumf %cst_453, %1084 : f32
    %cst_454 = arith.constant 5.000000e-01 : f32
    %1087 = arith.select %1085, %1086, %cst_454 : f32
    %c1_i32_455 = arith.constant 1 : i32
    %1088 = arith.cmpi sgt, %975, %c1_i32_455 : i32
    %cst_456 = arith.constant 0x7F800000 : f32
    %1089 = arith.select %1088, %1087, %cst_456 : f32
    %1090 = vector.broadcast %1089 : f32 to vector<8x128xf32>
    %1091 = arith.cmpf oge, %1080, %1090 : vector<8x128xf32>
    %1092 = arith.ori %1033, %1091 : vector<8x128xi1>
    %c8_i32_457 = arith.constant 8 : i32
    %1093 = arith.addi %973, %c8_i32_457 : i32
    %1094 = arith.index_cast %1093 : i32 to index
    %1095 = memref.load %arg2[%1094] : memref<256xf32, #tpu.memory_space<smem>>
    %c1_i32_458 = arith.constant 1 : i32
    %1096 = arith.addi %1093, %c1_i32_458 : i32
    %1097 = arith.index_cast %1096 : i32 to index
    %1098 = memref.load %arg2[%1097] : memref<256xf32, #tpu.memory_space<smem>>
    %c2_i32_459 = arith.constant 2 : i32
    %1099 = arith.addi %1093, %c2_i32_459 : i32
    %1100 = arith.index_cast %1099 : i32 to index
    %1101 = memref.load %arg2[%1100] : memref<256xf32, #tpu.memory_space<smem>>
    %c3_i32_460 = arith.constant 3 : i32
    %1102 = arith.addi %1093, %c3_i32_460 : i32
    %1103 = arith.index_cast %1102 : i32 to index
    %1104 = memref.load %arg2[%1103] : memref<256xf32, #tpu.memory_space<smem>>
    %c0_461 = arith.constant 0 : index
    %c0_462 = arith.constant 0 : index
    %c0_463 = arith.constant 0 : index
    %1105 = vector.load %arg3[%c0_461, %c0_462, %c0_463] : memref<4x8x128xf32, #tpu.memory_space<vmem>>, vector<1x8x128xf32>
    %1106 = vector.shape_cast %1105 : vector<1x8x128xf32> to vector<8x128xf32>
    %c1_464 = arith.constant 1 : index
    %c0_465 = arith.constant 0 : index
    %c0_466 = arith.constant 0 : index
    %1107 = vector.load %arg3[%c1_464, %c0_465, %c0_466] : memref<4x8x128xf32, #tpu.memory_space<vmem>>, vector<1x8x128xf32>
    %1108 = vector.shape_cast %1107 : vector<1x8x128xf32> to vector<8x128xf32>
    %c2_467 = arith.constant 2 : index
    %c0_468 = arith.constant 0 : index
    %c0_469 = arith.constant 0 : index
    %1109 = vector.load %arg3[%c2_467, %c0_468, %c0_469] : memref<4x8x128xf32, #tpu.memory_space<vmem>>, vector<1x8x128xf32>
    %1110 = vector.shape_cast %1109 : vector<1x8x128xf32> to vector<8x128xf32>
    %c3_470 = arith.constant 3 : index
    %c0_471 = arith.constant 0 : index
    %c0_472 = arith.constant 0 : index
    %1111 = vector.load %arg3[%c3_470, %c0_471, %c0_472] : memref<4x8x128xf32, #tpu.memory_space<vmem>>, vector<1x8x128xf32>
    %1112 = vector.shape_cast %1111 : vector<1x8x128xf32> to vector<8x128xf32>
    %1113 = vector.broadcast %1101 : f32 to vector<8x128xf32>
    %1114 = arith.minimumf %1110, %1113 : vector<8x128xf32>
    %1115 = vector.broadcast %1095 : f32 to vector<8x128xf32>
    %1116 = arith.maximumf %1106, %1115 : vector<8x128xf32>
    %1117 = arith.subf %1114, %1116 : vector<8x128xf32>
    %cst_473 = arith.constant 0.000000e+00 : f32
    %1118 = vector.broadcast %cst_473 : f32 to vector<8x128xf32>
    %1119 = arith.maximumf %1117, %1118 : vector<8x128xf32>
    %1120 = vector.broadcast %1104 : f32 to vector<8x128xf32>
    %1121 = arith.minimumf %1112, %1120 : vector<8x128xf32>
    %1122 = vector.broadcast %1098 : f32 to vector<8x128xf32>
    %1123 = arith.maximumf %1108, %1122 : vector<8x128xf32>
    %1124 = arith.subf %1121, %1123 : vector<8x128xf32>
    %cst_474 = arith.constant 0.000000e+00 : f32
    %1125 = vector.broadcast %cst_474 : f32 to vector<8x128xf32>
    %1126 = arith.maximumf %1124, %1125 : vector<8x128xf32>
    %1127 = arith.mulf %1119, %1126 : vector<8x128xf32>
    %1128 = arith.subf %1101, %1095 : f32
    %1129 = arith.subf %1104, %1098 : f32
    %1130 = arith.mulf %1128, %1129 : f32
    %1131 = vector.broadcast %1130 : f32 to vector<8x128xf32>
    %1132 = arith.addf %1131, %10 : vector<8x128xf32>
    %1133 = arith.subf %1132, %1127 : vector<8x128xf32>
    %1134 = tpu.reciprocal %1133 {approx = true} : vector<8x128xf32> -> vector<8x128xf32>
    %1135 = arith.mulf %1133, %1134 : vector<8x128xf32>
    %cst_475 = arith.constant 2.000000e+00 : f32
    %1136 = vector.broadcast %cst_475 : f32 to vector<8x128xf32>
    %1137 = arith.subf %1136, %1135 : vector<8x128xf32>
    %1138 = arith.mulf %1134, %1137 : vector<8x128xf32>
    %1139 = arith.mulf %1127, %1138 : vector<8x128xf32>
    %1140 = vector.shape_cast %1139 : vector<8x128xf32> to vector<1x8x128xf32>
    %cst_476 = arith.constant dense<0xFF800000> : vector<1xf32>
    %1141 = vector.multi_reduction <maximumf>, %1140, %cst_476 [1, 2] : vector<1x8x128xf32> to vector<1xf32>
    %1142 = vector.shape_cast %1141 : vector<1xf32> to vector<1x1x1xf32>
    %1143 = vector.extract %1142[0, 0, 0] : f32 from vector<1x1x1xf32>
    %cst_477 = arith.constant 0.000000e+00 : f32
    %1144 = arith.cmpf ogt, %1143, %cst_477 : f32
    %cst_478 = arith.constant 5.000000e-01 : f32
    %1145 = arith.minimumf %cst_478, %1143 : f32
    %cst_479 = arith.constant 5.000000e-01 : f32
    %1146 = arith.select %1144, %1145, %cst_479 : f32
    %c2_i32_480 = arith.constant 2 : i32
    %1147 = arith.cmpi sgt, %975, %c2_i32_480 : i32
    %cst_481 = arith.constant 0x7F800000 : f32
    %1148 = arith.select %1147, %1146, %cst_481 : f32
    %1149 = vector.broadcast %1148 : f32 to vector<8x128xf32>
    %1150 = arith.cmpf oge, %1139, %1149 : vector<8x128xf32>
    %1151 = arith.ori %1092, %1150 : vector<8x128xi1>
    %c12_i32_482 = arith.constant 12 : i32
    %1152 = arith.addi %973, %c12_i32_482 : i32
    %1153 = arith.index_cast %1152 : i32 to index
    %1154 = memref.load %arg2[%1153] : memref<256xf32, #tpu.memory_space<smem>>
    %c1_i32_483 = arith.constant 1 : i32
    %1155 = arith.addi %1152, %c1_i32_483 : i32
    %1156 = arith.index_cast %1155 : i32 to index
    %1157 = memref.load %arg2[%1156] : memref<256xf32, #tpu.memory_space<smem>>
    %c2_i32_484 = arith.constant 2 : i32
    %1158 = arith.addi %1152, %c2_i32_484 : i32
    %1159 = arith.index_cast %1158 : i32 to index
    %1160 = memref.load %arg2[%1159] : memref<256xf32, #tpu.memory_space<smem>>
    %c3_i32_485 = arith.constant 3 : i32
    %1161 = arith.addi %1152, %c3_i32_485 : i32
    %1162 = arith.index_cast %1161 : i32 to index
    %1163 = memref.load %arg2[%1162] : memref<256xf32, #tpu.memory_space<smem>>
    %c0_486 = arith.constant 0 : index
    %c0_487 = arith.constant 0 : index
    %c0_488 = arith.constant 0 : index
    %1164 = vector.load %arg3[%c0_486, %c0_487, %c0_488] : memref<4x8x128xf32, #tpu.memory_space<vmem>>, vector<1x8x128xf32>
    %1165 = vector.shape_cast %1164 : vector<1x8x128xf32> to vector<8x128xf32>
    %c1_489 = arith.constant 1 : index
    %c0_490 = arith.constant 0 : index
    %c0_491 = arith.constant 0 : index
    %1166 = vector.load %arg3[%c1_489, %c0_490, %c0_491] : memref<4x8x128xf32, #tpu.memory_space<vmem>>, vector<1x8x128xf32>
    %1167 = vector.shape_cast %1166 : vector<1x8x128xf32> to vector<8x128xf32>
    %c2_492 = arith.constant 2 : index
    %c0_493 = arith.constant 0 : index
    %c0_494 = arith.constant 0 : index
    %1168 = vector.load %arg3[%c2_492, %c0_493, %c0_494] : memref<4x8x128xf32, #tpu.memory_space<vmem>>, vector<1x8x128xf32>
    %1169 = vector.shape_cast %1168 : vector<1x8x128xf32> to vector<8x128xf32>
    %c3_495 = arith.constant 3 : index
    %c0_496 = arith.constant 0 : index
    %c0_497 = arith.constant 0 : index
    %1170 = vector.load %arg3[%c3_495, %c0_496, %c0_497] : memref<4x8x128xf32, #tpu.memory_space<vmem>>, vector<1x8x128xf32>
    %1171 = vector.shape_cast %1170 : vector<1x8x128xf32> to vector<8x128xf32>
    %1172 = vector.broadcast %1160 : f32 to vector<8x128xf32>
    %1173 = arith.minimumf %1169, %1172 : vector<8x128xf32>
    %1174 = vector.broadcast %1154 : f32 to vector<8x128xf32>
    %1175 = arith.maximumf %1165, %1174 : vector<8x128xf32>
    %1176 = arith.subf %1173, %1175 : vector<8x128xf32>
    %cst_498 = arith.constant 0.000000e+00 : f32
    %1177 = vector.broadcast %cst_498 : f32 to vector<8x128xf32>
    %1178 = arith.maximumf %1176, %1177 : vector<8x128xf32>
    %1179 = vector.broadcast %1163 : f32 to vector<8x128xf32>
    %1180 = arith.minimumf %1171, %1179 : vector<8x128xf32>
    %1181 = vector.broadcast %1157 : f32 to vector<8x128xf32>
    %1182 = arith.maximumf %1167, %1181 : vector<8x128xf32>
    %1183 = arith.subf %1180, %1182 : vector<8x128xf32>
    %cst_499 = arith.constant 0.000000e+00 : f32
    %1184 = vector.broadcast %cst_499 : f32 to vector<8x128xf32>
    %1185 = arith.maximumf %1183, %1184 : vector<8x128xf32>
    %1186 = arith.mulf %1178, %1185 : vector<8x128xf32>
    %1187 = arith.subf %1160, %1154 : f32
    %1188 = arith.subf %1163, %1157 : f32
    %1189 = arith.mulf %1187, %1188 : f32
    %1190 = vector.broadcast %1189 : f32 to vector<8x128xf32>
    %1191 = arith.addf %1190, %10 : vector<8x128xf32>
    %1192 = arith.subf %1191, %1186 : vector<8x128xf32>
    %1193 = tpu.reciprocal %1192 {approx = true} : vector<8x128xf32> -> vector<8x128xf32>
    %1194 = arith.mulf %1192, %1193 : vector<8x128xf32>
    %cst_500 = arith.constant 2.000000e+00 : f32
    %1195 = vector.broadcast %cst_500 : f32 to vector<8x128xf32>
    %1196 = arith.subf %1195, %1194 : vector<8x128xf32>
    %1197 = arith.mulf %1193, %1196 : vector<8x128xf32>
    %1198 = arith.mulf %1186, %1197 : vector<8x128xf32>
    %1199 = vector.shape_cast %1198 : vector<8x128xf32> to vector<1x8x128xf32>
    %cst_501 = arith.constant dense<0xFF800000> : vector<1xf32>
    %1200 = vector.multi_reduction <maximumf>, %1199, %cst_501 [1, 2] : vector<1x8x128xf32> to vector<1xf32>
    %1201 = vector.shape_cast %1200 : vector<1xf32> to vector<1x1x1xf32>
    %1202 = vector.extract %1201[0, 0, 0] : f32 from vector<1x1x1xf32>
    %cst_502 = arith.constant 0.000000e+00 : f32
    %1203 = arith.cmpf ogt, %1202, %cst_502 : f32
    %cst_503 = arith.constant 5.000000e-01 : f32
    %1204 = arith.minimumf %cst_503, %1202 : f32
    %cst_504 = arith.constant 5.000000e-01 : f32
    %1205 = arith.select %1203, %1204, %cst_504 : f32
    %c3_i32_505 = arith.constant 3 : i32
    %1206 = arith.cmpi sgt, %975, %c3_i32_505 : i32
    %cst_506 = arith.constant 0x7F800000 : f32
    %1207 = arith.select %1206, %1205, %cst_506 : f32
    %1208 = vector.broadcast %1207 : f32 to vector<8x128xf32>
    %1209 = arith.cmpf oge, %1198, %1208 : vector<8x128xf32>
    %1210 = arith.ori %1151, %1209 : vector<8x128xi1>
    %c16_i32_507 = arith.constant 16 : i32
    %1211 = arith.addi %973, %c16_i32_507 : i32
    %1212 = arith.index_cast %1211 : i32 to index
    %1213 = memref.load %arg2[%1212] : memref<256xf32, #tpu.memory_space<smem>>
    %c1_i32_508 = arith.constant 1 : i32
    %1214 = arith.addi %1211, %c1_i32_508 : i32
    %1215 = arith.index_cast %1214 : i32 to index
    %1216 = memref.load %arg2[%1215] : memref<256xf32, #tpu.memory_space<smem>>
    %c2_i32_509 = arith.constant 2 : i32
    %1217 = arith.addi %1211, %c2_i32_509 : i32
    %1218 = arith.index_cast %1217 : i32 to index
    %1219 = memref.load %arg2[%1218] : memref<256xf32, #tpu.memory_space<smem>>
    %c3_i32_510 = arith.constant 3 : i32
    %1220 = arith.addi %1211, %c3_i32_510 : i32
    %1221 = arith.index_cast %1220 : i32 to index
    %1222 = memref.load %arg2[%1221] : memref<256xf32, #tpu.memory_space<smem>>
    %c0_511 = arith.constant 0 : index
    %c0_512 = arith.constant 0 : index
    %c0_513 = arith.constant 0 : index
    %1223 = vector.load %arg3[%c0_511, %c0_512, %c0_513] : memref<4x8x128xf32, #tpu.memory_space<vmem>>, vector<1x8x128xf32>
    %1224 = vector.shape_cast %1223 : vector<1x8x128xf32> to vector<8x128xf32>
    %c1_514 = arith.constant 1 : index
    %c0_515 = arith.constant 0 : index
    %c0_516 = arith.constant 0 : index
    %1225 = vector.load %arg3[%c1_514, %c0_515, %c0_516] : memref<4x8x128xf32, #tpu.memory_space<vmem>>, vector<1x8x128xf32>
    %1226 = vector.shape_cast %1225 : vector<1x8x128xf32> to vector<8x128xf32>
    %c2_517 = arith.constant 2 : index
    %c0_518 = arith.constant 0 : index
    %c0_519 = arith.constant 0 : index
    %1227 = vector.load %arg3[%c2_517, %c0_518, %c0_519] : memref<4x8x128xf32, #tpu.memory_space<vmem>>, vector<1x8x128xf32>
    %1228 = vector.shape_cast %1227 : vector<1x8x128xf32> to vector<8x128xf32>
    %c3_520 = arith.constant 3 : index
    %c0_521 = arith.constant 0 : index
    %c0_522 = arith.constant 0 : index
    %1229 = vector.load %arg3[%c3_520, %c0_521, %c0_522] : memref<4x8x128xf32, #tpu.memory_space<vmem>>, vector<1x8x128xf32>
    %1230 = vector.shape_cast %1229 : vector<1x8x128xf32> to vector<8x128xf32>
    %1231 = vector.broadcast %1219 : f32 to vector<8x128xf32>
    %1232 = arith.minimumf %1228, %1231 : vector<8x128xf32>
    %1233 = vector.broadcast %1213 : f32 to vector<8x128xf32>
    %1234 = arith.maximumf %1224, %1233 : vector<8x128xf32>
    %1235 = arith.subf %1232, %1234 : vector<8x128xf32>
    %cst_523 = arith.constant 0.000000e+00 : f32
    %1236 = vector.broadcast %cst_523 : f32 to vector<8x128xf32>
    %1237 = arith.maximumf %1235, %1236 : vector<8x128xf32>
    %1238 = vector.broadcast %1222 : f32 to vector<8x128xf32>
    %1239 = arith.minimumf %1230, %1238 : vector<8x128xf32>
    %1240 = vector.broadcast %1216 : f32 to vector<8x128xf32>
    %1241 = arith.maximumf %1226, %1240 : vector<8x128xf32>
    %1242 = arith.subf %1239, %1241 : vector<8x128xf32>
    %cst_524 = arith.constant 0.000000e+00 : f32
    %1243 = vector.broadcast %cst_524 : f32 to vector<8x128xf32>
    %1244 = arith.maximumf %1242, %1243 : vector<8x128xf32>
    %1245 = arith.mulf %1237, %1244 : vector<8x128xf32>
    %1246 = arith.subf %1219, %1213 : f32
    %1247 = arith.subf %1222, %1216 : f32
    %1248 = arith.mulf %1246, %1247 : f32
    %1249 = vector.broadcast %1248 : f32 to vector<8x128xf32>
    %1250 = arith.addf %1249, %10 : vector<8x128xf32>
    %1251 = arith.subf %1250, %1245 : vector<8x128xf32>
    %1252 = tpu.reciprocal %1251 {approx = true} : vector<8x128xf32> -> vector<8x128xf32>
    %1253 = arith.mulf %1251, %1252 : vector<8x128xf32>
    %cst_525 = arith.constant 2.000000e+00 : f32
    %1254 = vector.broadcast %cst_525 : f32 to vector<8x128xf32>
    %1255 = arith.subf %1254, %1253 : vector<8x128xf32>
    %1256 = arith.mulf %1252, %1255 : vector<8x128xf32>
    %1257 = arith.mulf %1245, %1256 : vector<8x128xf32>
    %1258 = vector.shape_cast %1257 : vector<8x128xf32> to vector<1x8x128xf32>
    %cst_526 = arith.constant dense<0xFF800000> : vector<1xf32>
    %1259 = vector.multi_reduction <maximumf>, %1258, %cst_526 [1, 2] : vector<1x8x128xf32> to vector<1xf32>
    %1260 = vector.shape_cast %1259 : vector<1xf32> to vector<1x1x1xf32>
    %1261 = vector.extract %1260[0, 0, 0] : f32 from vector<1x1x1xf32>
    %cst_527 = arith.constant 0.000000e+00 : f32
    %1262 = arith.cmpf ogt, %1261, %cst_527 : f32
    %cst_528 = arith.constant 5.000000e-01 : f32
    %1263 = arith.minimumf %cst_528, %1261 : f32
    %cst_529 = arith.constant 5.000000e-01 : f32
    %1264 = arith.select %1262, %1263, %cst_529 : f32
    %c4_i32_530 = arith.constant 4 : i32
    %1265 = arith.cmpi sgt, %975, %c4_i32_530 : i32
    %cst_531 = arith.constant 0x7F800000 : f32
    %1266 = arith.select %1265, %1264, %cst_531 : f32
    %1267 = vector.broadcast %1266 : f32 to vector<8x128xf32>
    %1268 = arith.cmpf oge, %1257, %1267 : vector<8x128xf32>
    %1269 = arith.ori %1210, %1268 : vector<8x128xi1>
    %c20_i32_532 = arith.constant 20 : i32
    %1270 = arith.addi %973, %c20_i32_532 : i32
    %1271 = arith.index_cast %1270 : i32 to index
    %1272 = memref.load %arg2[%1271] : memref<256xf32, #tpu.memory_space<smem>>
    %c1_i32_533 = arith.constant 1 : i32
    %1273 = arith.addi %1270, %c1_i32_533 : i32
    %1274 = arith.index_cast %1273 : i32 to index
    %1275 = memref.load %arg2[%1274] : memref<256xf32, #tpu.memory_space<smem>>
    %c2_i32_534 = arith.constant 2 : i32
    %1276 = arith.addi %1270, %c2_i32_534 : i32
    %1277 = arith.index_cast %1276 : i32 to index
    %1278 = memref.load %arg2[%1277] : memref<256xf32, #tpu.memory_space<smem>>
    %c3_i32_535 = arith.constant 3 : i32
    %1279 = arith.addi %1270, %c3_i32_535 : i32
    %1280 = arith.index_cast %1279 : i32 to index
    %1281 = memref.load %arg2[%1280] : memref<256xf32, #tpu.memory_space<smem>>
    %c0_536 = arith.constant 0 : index
    %c0_537 = arith.constant 0 : index
    %c0_538 = arith.constant 0 : index
    %1282 = vector.load %arg3[%c0_536, %c0_537, %c0_538] : memref<4x8x128xf32, #tpu.memory_space<vmem>>, vector<1x8x128xf32>
    %1283 = vector.shape_cast %1282 : vector<1x8x128xf32> to vector<8x128xf32>
    %c1_539 = arith.constant 1 : index
    %c0_540 = arith.constant 0 : index
    %c0_541 = arith.constant 0 : index
    %1284 = vector.load %arg3[%c1_539, %c0_540, %c0_541] : memref<4x8x128xf32, #tpu.memory_space<vmem>>, vector<1x8x128xf32>
    %1285 = vector.shape_cast %1284 : vector<1x8x128xf32> to vector<8x128xf32>
    %c2_542 = arith.constant 2 : index
    %c0_543 = arith.constant 0 : index
    %c0_544 = arith.constant 0 : index
    %1286 = vector.load %arg3[%c2_542, %c0_543, %c0_544] : memref<4x8x128xf32, #tpu.memory_space<vmem>>, vector<1x8x128xf32>
    %1287 = vector.shape_cast %1286 : vector<1x8x128xf32> to vector<8x128xf32>
    %c3_545 = arith.constant 3 : index
    %c0_546 = arith.constant 0 : index
    %c0_547 = arith.constant 0 : index
    %1288 = vector.load %arg3[%c3_545, %c0_546, %c0_547] : memref<4x8x128xf32, #tpu.memory_space<vmem>>, vector<1x8x128xf32>
    %1289 = vector.shape_cast %1288 : vector<1x8x128xf32> to vector<8x128xf32>
    %1290 = vector.broadcast %1278 : f32 to vector<8x128xf32>
    %1291 = arith.minimumf %1287, %1290 : vector<8x128xf32>
    %1292 = vector.broadcast %1272 : f32 to vector<8x128xf32>
    %1293 = arith.maximumf %1283, %1292 : vector<8x128xf32>
    %1294 = arith.subf %1291, %1293 : vector<8x128xf32>
    %cst_548 = arith.constant 0.000000e+00 : f32
    %1295 = vector.broadcast %cst_548 : f32 to vector<8x128xf32>
    %1296 = arith.maximumf %1294, %1295 : vector<8x128xf32>
    %1297 = vector.broadcast %1281 : f32 to vector<8x128xf32>
    %1298 = arith.minimumf %1289, %1297 : vector<8x128xf32>
    %1299 = vector.broadcast %1275 : f32 to vector<8x128xf32>
    %1300 = arith.maximumf %1285, %1299 : vector<8x128xf32>
    %1301 = arith.subf %1298, %1300 : vector<8x128xf32>
    %cst_549 = arith.constant 0.000000e+00 : f32
    %1302 = vector.broadcast %cst_549 : f32 to vector<8x128xf32>
    %1303 = arith.maximumf %1301, %1302 : vector<8x128xf32>
    %1304 = arith.mulf %1296, %1303 : vector<8x128xf32>
    %1305 = arith.subf %1278, %1272 : f32
    %1306 = arith.subf %1281, %1275 : f32
    %1307 = arith.mulf %1305, %1306 : f32
    %1308 = vector.broadcast %1307 : f32 to vector<8x128xf32>
    %1309 = arith.addf %1308, %10 : vector<8x128xf32>
    %1310 = arith.subf %1309, %1304 : vector<8x128xf32>
    %1311 = tpu.reciprocal %1310 {approx = true} : vector<8x128xf32> -> vector<8x128xf32>
    %1312 = arith.mulf %1310, %1311 : vector<8x128xf32>
    %cst_550 = arith.constant 2.000000e+00 : f32
    %1313 = vector.broadcast %cst_550 : f32 to vector<8x128xf32>
    %1314 = arith.subf %1313, %1312 : vector<8x128xf32>
    %1315 = arith.mulf %1311, %1314 : vector<8x128xf32>
    %1316 = arith.mulf %1304, %1315 : vector<8x128xf32>
    %1317 = vector.shape_cast %1316 : vector<8x128xf32> to vector<1x8x128xf32>
    %cst_551 = arith.constant dense<0xFF800000> : vector<1xf32>
    %1318 = vector.multi_reduction <maximumf>, %1317, %cst_551 [1, 2] : vector<1x8x128xf32> to vector<1xf32>
    %1319 = vector.shape_cast %1318 : vector<1xf32> to vector<1x1x1xf32>
    %1320 = vector.extract %1319[0, 0, 0] : f32 from vector<1x1x1xf32>
    %cst_552 = arith.constant 0.000000e+00 : f32
    %1321 = arith.cmpf ogt, %1320, %cst_552 : f32
    %cst_553 = arith.constant 5.000000e-01 : f32
    %1322 = arith.minimumf %cst_553, %1320 : f32
    %cst_554 = arith.constant 5.000000e-01 : f32
    %1323 = arith.select %1321, %1322, %cst_554 : f32
    %c5_i32_555 = arith.constant 5 : i32
    %1324 = arith.cmpi sgt, %975, %c5_i32_555 : i32
    %cst_556 = arith.constant 0x7F800000 : f32
    %1325 = arith.select %1324, %1323, %cst_556 : f32
    %1326 = vector.broadcast %1325 : f32 to vector<8x128xf32>
    %1327 = arith.cmpf oge, %1316, %1326 : vector<8x128xf32>
    %1328 = arith.ori %1269, %1327 : vector<8x128xi1>
    %c24_i32_557 = arith.constant 24 : i32
    %1329 = arith.addi %973, %c24_i32_557 : i32
    %1330 = arith.index_cast %1329 : i32 to index
    %1331 = memref.load %arg2[%1330] : memref<256xf32, #tpu.memory_space<smem>>
    %c1_i32_558 = arith.constant 1 : i32
    %1332 = arith.addi %1329, %c1_i32_558 : i32
    %1333 = arith.index_cast %1332 : i32 to index
    %1334 = memref.load %arg2[%1333] : memref<256xf32, #tpu.memory_space<smem>>
    %c2_i32_559 = arith.constant 2 : i32
    %1335 = arith.addi %1329, %c2_i32_559 : i32
    %1336 = arith.index_cast %1335 : i32 to index
    %1337 = memref.load %arg2[%1336] : memref<256xf32, #tpu.memory_space<smem>>
    %c3_i32_560 = arith.constant 3 : i32
    %1338 = arith.addi %1329, %c3_i32_560 : i32
    %1339 = arith.index_cast %1338 : i32 to index
    %1340 = memref.load %arg2[%1339] : memref<256xf32, #tpu.memory_space<smem>>
    %c0_561 = arith.constant 0 : index
    %c0_562 = arith.constant 0 : index
    %c0_563 = arith.constant 0 : index
    %1341 = vector.load %arg3[%c0_561, %c0_562, %c0_563] : memref<4x8x128xf32, #tpu.memory_space<vmem>>, vector<1x8x128xf32>
    %1342 = vector.shape_cast %1341 : vector<1x8x128xf32> to vector<8x128xf32>
    %c1_564 = arith.constant 1 : index
    %c0_565 = arith.constant 0 : index
    %c0_566 = arith.constant 0 : index
    %1343 = vector.load %arg3[%c1_564, %c0_565, %c0_566] : memref<4x8x128xf32, #tpu.memory_space<vmem>>, vector<1x8x128xf32>
    %1344 = vector.shape_cast %1343 : vector<1x8x128xf32> to vector<8x128xf32>
    %c2_567 = arith.constant 2 : index
    %c0_568 = arith.constant 0 : index
    %c0_569 = arith.constant 0 : index
    %1345 = vector.load %arg3[%c2_567, %c0_568, %c0_569] : memref<4x8x128xf32, #tpu.memory_space<vmem>>, vector<1x8x128xf32>
    %1346 = vector.shape_cast %1345 : vector<1x8x128xf32> to vector<8x128xf32>
    %c3_570 = arith.constant 3 : index
    %c0_571 = arith.constant 0 : index
    %c0_572 = arith.constant 0 : index
    %1347 = vector.load %arg3[%c3_570, %c0_571, %c0_572] : memref<4x8x128xf32, #tpu.memory_space<vmem>>, vector<1x8x128xf32>
    %1348 = vector.shape_cast %1347 : vector<1x8x128xf32> to vector<8x128xf32>
    %1349 = vector.broadcast %1337 : f32 to vector<8x128xf32>
    %1350 = arith.minimumf %1346, %1349 : vector<8x128xf32>
    %1351 = vector.broadcast %1331 : f32 to vector<8x128xf32>
    %1352 = arith.maximumf %1342, %1351 : vector<8x128xf32>
    %1353 = arith.subf %1350, %1352 : vector<8x128xf32>
    %cst_573 = arith.constant 0.000000e+00 : f32
    %1354 = vector.broadcast %cst_573 : f32 to vector<8x128xf32>
    %1355 = arith.maximumf %1353, %1354 : vector<8x128xf32>
    %1356 = vector.broadcast %1340 : f32 to vector<8x128xf32>
    %1357 = arith.minimumf %1348, %1356 : vector<8x128xf32>
    %1358 = vector.broadcast %1334 : f32 to vector<8x128xf32>
    %1359 = arith.maximumf %1344, %1358 : vector<8x128xf32>
    %1360 = arith.subf %1357, %1359 : vector<8x128xf32>
    %cst_574 = arith.constant 0.000000e+00 : f32
    %1361 = vector.broadcast %cst_574 : f32 to vector<8x128xf32>
    %1362 = arith.maximumf %1360, %1361 : vector<8x128xf32>
    %1363 = arith.mulf %1355, %1362 : vector<8x128xf32>
    %1364 = arith.subf %1337, %1331 : f32
    %1365 = arith.subf %1340, %1334 : f32
    %1366 = arith.mulf %1364, %1365 : f32
    %1367 = vector.broadcast %1366 : f32 to vector<8x128xf32>
    %1368 = arith.addf %1367, %10 : vector<8x128xf32>
    %1369 = arith.subf %1368, %1363 : vector<8x128xf32>
    %1370 = tpu.reciprocal %1369 {approx = true} : vector<8x128xf32> -> vector<8x128xf32>
    %1371 = arith.mulf %1369, %1370 : vector<8x128xf32>
    %cst_575 = arith.constant 2.000000e+00 : f32
    %1372 = vector.broadcast %cst_575 : f32 to vector<8x128xf32>
    %1373 = arith.subf %1372, %1371 : vector<8x128xf32>
    %1374 = arith.mulf %1370, %1373 : vector<8x128xf32>
    %1375 = arith.mulf %1363, %1374 : vector<8x128xf32>
    %1376 = vector.shape_cast %1375 : vector<8x128xf32> to vector<1x8x128xf32>
    %cst_576 = arith.constant dense<0xFF800000> : vector<1xf32>
    %1377 = vector.multi_reduction <maximumf>, %1376, %cst_576 [1, 2] : vector<1x8x128xf32> to vector<1xf32>
    %1378 = vector.shape_cast %1377 : vector<1xf32> to vector<1x1x1xf32>
    %1379 = vector.extract %1378[0, 0, 0] : f32 from vector<1x1x1xf32>
    %cst_577 = arith.constant 0.000000e+00 : f32
    %1380 = arith.cmpf ogt, %1379, %cst_577 : f32
    %cst_578 = arith.constant 5.000000e-01 : f32
    %1381 = arith.minimumf %cst_578, %1379 : f32
    %cst_579 = arith.constant 5.000000e-01 : f32
    %1382 = arith.select %1380, %1381, %cst_579 : f32
    %c6_i32_580 = arith.constant 6 : i32
    %1383 = arith.cmpi sgt, %975, %c6_i32_580 : i32
    %cst_581 = arith.constant 0x7F800000 : f32
    %1384 = arith.select %1383, %1382, %cst_581 : f32
    %1385 = vector.broadcast %1384 : f32 to vector<8x128xf32>
    %1386 = arith.cmpf oge, %1375, %1385 : vector<8x128xf32>
    %1387 = arith.ori %1328, %1386 : vector<8x128xi1>
    %c28_i32_582 = arith.constant 28 : i32
    %1388 = arith.addi %973, %c28_i32_582 : i32
    %1389 = arith.index_cast %1388 : i32 to index
    %1390 = memref.load %arg2[%1389] : memref<256xf32, #tpu.memory_space<smem>>
    %c1_i32_583 = arith.constant 1 : i32
    %1391 = arith.addi %1388, %c1_i32_583 : i32
    %1392 = arith.index_cast %1391 : i32 to index
    %1393 = memref.load %arg2[%1392] : memref<256xf32, #tpu.memory_space<smem>>
    %c2_i32_584 = arith.constant 2 : i32
    %1394 = arith.addi %1388, %c2_i32_584 : i32
    %1395 = arith.index_cast %1394 : i32 to index
    %1396 = memref.load %arg2[%1395] : memref<256xf32, #tpu.memory_space<smem>>
    %c3_i32_585 = arith.constant 3 : i32
    %1397 = arith.addi %1388, %c3_i32_585 : i32
    %1398 = arith.index_cast %1397 : i32 to index
    %1399 = memref.load %arg2[%1398] : memref<256xf32, #tpu.memory_space<smem>>
    %c0_586 = arith.constant 0 : index
    %c0_587 = arith.constant 0 : index
    %c0_588 = arith.constant 0 : index
    %1400 = vector.load %arg3[%c0_586, %c0_587, %c0_588] : memref<4x8x128xf32, #tpu.memory_space<vmem>>, vector<1x8x128xf32>
    %1401 = vector.shape_cast %1400 : vector<1x8x128xf32> to vector<8x128xf32>
    %c1_589 = arith.constant 1 : index
    %c0_590 = arith.constant 0 : index
    %c0_591 = arith.constant 0 : index
    %1402 = vector.load %arg3[%c1_589, %c0_590, %c0_591] : memref<4x8x128xf32, #tpu.memory_space<vmem>>, vector<1x8x128xf32>
    %1403 = vector.shape_cast %1402 : vector<1x8x128xf32> to vector<8x128xf32>
    %c2_592 = arith.constant 2 : index
    %c0_593 = arith.constant 0 : index
    %c0_594 = arith.constant 0 : index
    %1404 = vector.load %arg3[%c2_592, %c0_593, %c0_594] : memref<4x8x128xf32, #tpu.memory_space<vmem>>, vector<1x8x128xf32>
    %1405 = vector.shape_cast %1404 : vector<1x8x128xf32> to vector<8x128xf32>
    %c3_595 = arith.constant 3 : index
    %c0_596 = arith.constant 0 : index
    %c0_597 = arith.constant 0 : index
    %1406 = vector.load %arg3[%c3_595, %c0_596, %c0_597] : memref<4x8x128xf32, #tpu.memory_space<vmem>>, vector<1x8x128xf32>
    %1407 = vector.shape_cast %1406 : vector<1x8x128xf32> to vector<8x128xf32>
    %1408 = vector.broadcast %1396 : f32 to vector<8x128xf32>
    %1409 = arith.minimumf %1405, %1408 : vector<8x128xf32>
    %1410 = vector.broadcast %1390 : f32 to vector<8x128xf32>
    %1411 = arith.maximumf %1401, %1410 : vector<8x128xf32>
    %1412 = arith.subf %1409, %1411 : vector<8x128xf32>
    %cst_598 = arith.constant 0.000000e+00 : f32
    %1413 = vector.broadcast %cst_598 : f32 to vector<8x128xf32>
    %1414 = arith.maximumf %1412, %1413 : vector<8x128xf32>
    %1415 = vector.broadcast %1399 : f32 to vector<8x128xf32>
    %1416 = arith.minimumf %1407, %1415 : vector<8x128xf32>
    %1417 = vector.broadcast %1393 : f32 to vector<8x128xf32>
    %1418 = arith.maximumf %1403, %1417 : vector<8x128xf32>
    %1419 = arith.subf %1416, %1418 : vector<8x128xf32>
    %cst_599 = arith.constant 0.000000e+00 : f32
    %1420 = vector.broadcast %cst_599 : f32 to vector<8x128xf32>
    %1421 = arith.maximumf %1419, %1420 : vector<8x128xf32>
    %1422 = arith.mulf %1414, %1421 : vector<8x128xf32>
    %1423 = arith.subf %1396, %1390 : f32
    %1424 = arith.subf %1399, %1393 : f32
    %1425 = arith.mulf %1423, %1424 : f32
    %1426 = vector.broadcast %1425 : f32 to vector<8x128xf32>
    %1427 = arith.addf %1426, %10 : vector<8x128xf32>
    %1428 = arith.subf %1427, %1422 : vector<8x128xf32>
    %1429 = tpu.reciprocal %1428 {approx = true} : vector<8x128xf32> -> vector<8x128xf32>
    %1430 = arith.mulf %1428, %1429 : vector<8x128xf32>
    %cst_600 = arith.constant 2.000000e+00 : f32
    %1431 = vector.broadcast %cst_600 : f32 to vector<8x128xf32>
    %1432 = arith.subf %1431, %1430 : vector<8x128xf32>
    %1433 = arith.mulf %1429, %1432 : vector<8x128xf32>
    %1434 = arith.mulf %1422, %1433 : vector<8x128xf32>
    %1435 = vector.shape_cast %1434 : vector<8x128xf32> to vector<1x8x128xf32>
    %cst_601 = arith.constant dense<0xFF800000> : vector<1xf32>
    %1436 = vector.multi_reduction <maximumf>, %1435, %cst_601 [1, 2] : vector<1x8x128xf32> to vector<1xf32>
    %1437 = vector.shape_cast %1436 : vector<1xf32> to vector<1x1x1xf32>
    %1438 = vector.extract %1437[0, 0, 0] : f32 from vector<1x1x1xf32>
    %cst_602 = arith.constant 0.000000e+00 : f32
    %1439 = arith.cmpf ogt, %1438, %cst_602 : f32
    %cst_603 = arith.constant 5.000000e-01 : f32
    %1440 = arith.minimumf %cst_603, %1438 : f32
    %cst_604 = arith.constant 5.000000e-01 : f32
    %1441 = arith.select %1439, %1440, %cst_604 : f32
    %c7_i32_605 = arith.constant 7 : i32
    %1442 = arith.cmpi sgt, %975, %c7_i32_605 : i32
    %cst_606 = arith.constant 0x7F800000 : f32
    %1443 = arith.select %1442, %1441, %cst_606 : f32
    %1444 = vector.broadcast %1443 : f32 to vector<8x128xf32>
    %1445 = arith.cmpf oge, %1434, %1444 : vector<8x128xf32>
    %1446 = arith.ori %1387, %1445 : vector<8x128xi1>
    %1447 = arith.extui %1446 : vector<8x128xi1> to vector<8x128xi32>
    %c2_607 = arith.constant 2 : index
    %c0_608 = arith.constant 0 : index
    %c0_609 = arith.constant 0 : index
    %1448 = vector.load %arg4[%c2_607, %c0_608, %c0_609] : memref<4x8x128xi32, #tpu.memory_space<vmem>>, vector<1x8x128xi32>
    %1449 = vector.shape_cast %1448 : vector<1x8x128xi32> to vector<8x128xi32>
    %1450 = vector.shape_cast %1447 : vector<8x128xi32> to vector<1x8x128xi32>
    tpu.vector_store %arg4[%c2_607, %c0_608, %c0_609], %1450 {strides = array<i32>} : memref<4x8x128xi32, #tpu.memory_space<vmem>>, vector<1x8x128xi32>,
    %c4_i32_610 = arith.constant 4 : i32
    %1451 = arith.muli %arg0, %c4_i32_610 : i32
    %c3_i32_611 = arith.constant 3 : i32
    %1452 = arith.addi %1451, %c3_i32_611 : i32
    %c32_i32_612 = arith.constant 32 : i32
    %1453 = arith.muli %1452, %c32_i32_612 : i32
    %1454 = arith.index_cast %1452 : i32 to index
    %1455 = memref.load %arg1[%1454] : memref<8xi32, #tpu.memory_space<smem>>
    %c0_i32_613 = arith.constant 0 : i32
    %1456 = arith.addi %1453, %c0_i32_613 : i32
    %1457 = arith.index_cast %1456 : i32 to index
    %1458 = memref.load %arg2[%1457] : memref<256xf32, #tpu.memory_space<smem>>
    %c1_i32_614 = arith.constant 1 : i32
    %1459 = arith.addi %1456, %c1_i32_614 : i32
    %1460 = arith.index_cast %1459 : i32 to index
    %1461 = memref.load %arg2[%1460] : memref<256xf32, #tpu.memory_space<smem>>
    %c2_i32_615 = arith.constant 2 : i32
    %1462 = arith.addi %1456, %c2_i32_615 : i32
    %1463 = arith.index_cast %1462 : i32 to index
    %1464 = memref.load %arg2[%1463] : memref<256xf32, #tpu.memory_space<smem>>
    %c3_i32_616 = arith.constant 3 : i32
    %1465 = arith.addi %1456, %c3_i32_616 : i32
    %1466 = arith.index_cast %1465 : i32 to index
    %1467 = memref.load %arg2[%1466] : memref<256xf32, #tpu.memory_space<smem>>
    %c0_617 = arith.constant 0 : index
    %c0_618 = arith.constant 0 : index
    %c0_619 = arith.constant 0 : index
    %1468 = vector.load %arg3[%c0_617, %c0_618, %c0_619] : memref<4x8x128xf32, #tpu.memory_space<vmem>>, vector<1x8x128xf32>
    %1469 = vector.shape_cast %1468 : vector<1x8x128xf32> to vector<8x128xf32>
    %c1_620 = arith.constant 1 : index
    %c0_621 = arith.constant 0 : index
    %c0_622 = arith.constant 0 : index
    %1470 = vector.load %arg3[%c1_620, %c0_621, %c0_622] : memref<4x8x128xf32, #tpu.memory_space<vmem>>, vector<1x8x128xf32>
    %1471 = vector.shape_cast %1470 : vector<1x8x128xf32> to vector<8x128xf32>
    %c2_623 = arith.constant 2 : index
    %c0_624 = arith.constant 0 : index
    %c0_625 = arith.constant 0 : index
    %1472 = vector.load %arg3[%c2_623, %c0_624, %c0_625] : memref<4x8x128xf32, #tpu.memory_space<vmem>>, vector<1x8x128xf32>
    %1473 = vector.shape_cast %1472 : vector<1x8x128xf32> to vector<8x128xf32>
    %c3_626 = arith.constant 3 : index
    %c0_627 = arith.constant 0 : index
    %c0_628 = arith.constant 0 : index
    %1474 = vector.load %arg3[%c3_626, %c0_627, %c0_628] : memref<4x8x128xf32, #tpu.memory_space<vmem>>, vector<1x8x128xf32>
    %1475 = vector.shape_cast %1474 : vector<1x8x128xf32> to vector<8x128xf32>
    %1476 = vector.broadcast %1464 : f32 to vector<8x128xf32>
    %1477 = arith.minimumf %1473, %1476 : vector<8x128xf32>
    %1478 = vector.broadcast %1458 : f32 to vector<8x128xf32>
    %1479 = arith.maximumf %1469, %1478 : vector<8x128xf32>
    %1480 = arith.subf %1477, %1479 : vector<8x128xf32>
    %cst_629 = arith.constant 0.000000e+00 : f32
    %1481 = vector.broadcast %cst_629 : f32 to vector<8x128xf32>
    %1482 = arith.maximumf %1480, %1481 : vector<8x128xf32>
    %1483 = vector.broadcast %1467 : f32 to vector<8x128xf32>
    %1484 = arith.minimumf %1475, %1483 : vector<8x128xf32>
    %1485 = vector.broadcast %1461 : f32 to vector<8x128xf32>
    %1486 = arith.maximumf %1471, %1485 : vector<8x128xf32>
    %1487 = arith.subf %1484, %1486 : vector<8x128xf32>
    %cst_630 = arith.constant 0.000000e+00 : f32
    %1488 = vector.broadcast %cst_630 : f32 to vector<8x128xf32>
    %1489 = arith.maximumf %1487, %1488 : vector<8x128xf32>
    %1490 = arith.mulf %1482, %1489 : vector<8x128xf32>
    %1491 = arith.subf %1464, %1458 : f32
    %1492 = arith.subf %1467, %1461 : f32
    %1493 = arith.mulf %1491, %1492 : f32
    %1494 = vector.broadcast %1493 : f32 to vector<8x128xf32>
    %1495 = arith.addf %1494, %10 : vector<8x128xf32>
    %1496 = arith.subf %1495, %1490 : vector<8x128xf32>
    %1497 = tpu.reciprocal %1496 {approx = true} : vector<8x128xf32> -> vector<8x128xf32>
    %1498 = arith.mulf %1496, %1497 : vector<8x128xf32>
    %cst_631 = arith.constant 2.000000e+00 : f32
    %1499 = vector.broadcast %cst_631 : f32 to vector<8x128xf32>
    %1500 = arith.subf %1499, %1498 : vector<8x128xf32>
    %1501 = arith.mulf %1497, %1500 : vector<8x128xf32>
    %1502 = arith.mulf %1490, %1501 : vector<8x128xf32>
    %1503 = vector.shape_cast %1502 : vector<8x128xf32> to vector<1x8x128xf32>
    %cst_632 = arith.constant dense<0xFF800000> : vector<1xf32>
    %1504 = vector.multi_reduction <maximumf>, %1503, %cst_632 [1, 2] : vector<1x8x128xf32> to vector<1xf32>
    %1505 = vector.shape_cast %1504 : vector<1xf32> to vector<1x1x1xf32>
    %1506 = vector.extract %1505[0, 0, 0] : f32 from vector<1x1x1xf32>
    %cst_633 = arith.constant 0.000000e+00 : f32
    %1507 = arith.cmpf ogt, %1506, %cst_633 : f32
    %cst_634 = arith.constant 5.000000e-01 : f32
    %1508 = arith.minimumf %cst_634, %1506 : f32
    %cst_635 = arith.constant 5.000000e-01 : f32
    %1509 = arith.select %1507, %1508, %cst_635 : f32
    %c0_i32_636 = arith.constant 0 : i32
    %1510 = arith.cmpi sgt, %1455, %c0_i32_636 : i32
    %cst_637 = arith.constant 0x7F800000 : f32
    %1511 = arith.select %1510, %1509, %cst_637 : f32
    %1512 = vector.broadcast %1511 : f32 to vector<8x128xf32>
    %1513 = arith.cmpf oge, %1502, %1512 : vector<8x128xf32>
    %c4_i32_638 = arith.constant 4 : i32
    %1514 = arith.addi %1453, %c4_i32_638 : i32
    %1515 = arith.index_cast %1514 : i32 to index
    %1516 = memref.load %arg2[%1515] : memref<256xf32, #tpu.memory_space<smem>>
    %c1_i32_639 = arith.constant 1 : i32
    %1517 = arith.addi %1514, %c1_i32_639 : i32
    %1518 = arith.index_cast %1517 : i32 to index
    %1519 = memref.load %arg2[%1518] : memref<256xf32, #tpu.memory_space<smem>>
    %c2_i32_640 = arith.constant 2 : i32
    %1520 = arith.addi %1514, %c2_i32_640 : i32
    %1521 = arith.index_cast %1520 : i32 to index
    %1522 = memref.load %arg2[%1521] : memref<256xf32, #tpu.memory_space<smem>>
    %c3_i32_641 = arith.constant 3 : i32
    %1523 = arith.addi %1514, %c3_i32_641 : i32
    %1524 = arith.index_cast %1523 : i32 to index
    %1525 = memref.load %arg2[%1524] : memref<256xf32, #tpu.memory_space<smem>>
    %c0_642 = arith.constant 0 : index
    %c0_643 = arith.constant 0 : index
    %c0_644 = arith.constant 0 : index
    %1526 = vector.load %arg3[%c0_642, %c0_643, %c0_644] : memref<4x8x128xf32, #tpu.memory_space<vmem>>, vector<1x8x128xf32>
    %1527 = vector.shape_cast %1526 : vector<1x8x128xf32> to vector<8x128xf32>
    %c1_645 = arith.constant 1 : index
    %c0_646 = arith.constant 0 : index
    %c0_647 = arith.constant 0 : index
    %1528 = vector.load %arg3[%c1_645, %c0_646, %c0_647] : memref<4x8x128xf32, #tpu.memory_space<vmem>>, vector<1x8x128xf32>
    %1529 = vector.shape_cast %1528 : vector<1x8x128xf32> to vector<8x128xf32>
    %c2_648 = arith.constant 2 : index
    %c0_649 = arith.constant 0 : index
    %c0_650 = arith.constant 0 : index
    %1530 = vector.load %arg3[%c2_648, %c0_649, %c0_650] : memref<4x8x128xf32, #tpu.memory_space<vmem>>, vector<1x8x128xf32>
    %1531 = vector.shape_cast %1530 : vector<1x8x128xf32> to vector<8x128xf32>
    %c3_651 = arith.constant 3 : index
    %c0_652 = arith.constant 0 : index
    %c0_653 = arith.constant 0 : index
    %1532 = vector.load %arg3[%c3_651, %c0_652, %c0_653] : memref<4x8x128xf32, #tpu.memory_space<vmem>>, vector<1x8x128xf32>
    %1533 = vector.shape_cast %1532 : vector<1x8x128xf32> to vector<8x128xf32>
    %1534 = vector.broadcast %1522 : f32 to vector<8x128xf32>
    %1535 = arith.minimumf %1531, %1534 : vector<8x128xf32>
    %1536 = vector.broadcast %1516 : f32 to vector<8x128xf32>
    %1537 = arith.maximumf %1527, %1536 : vector<8x128xf32>
    %1538 = arith.subf %1535, %1537 : vector<8x128xf32>
    %cst_654 = arith.constant 0.000000e+00 : f32
    %1539 = vector.broadcast %cst_654 : f32 to vector<8x128xf32>
    %1540 = arith.maximumf %1538, %1539 : vector<8x128xf32>
    %1541 = vector.broadcast %1525 : f32 to vector<8x128xf32>
    %1542 = arith.minimumf %1533, %1541 : vector<8x128xf32>
    %1543 = vector.broadcast %1519 : f32 to vector<8x128xf32>
    %1544 = arith.maximumf %1529, %1543 : vector<8x128xf32>
    %1545 = arith.subf %1542, %1544 : vector<8x128xf32>
    %cst_655 = arith.constant 0.000000e+00 : f32
    %1546 = vector.broadcast %cst_655 : f32 to vector<8x128xf32>
    %1547 = arith.maximumf %1545, %1546 : vector<8x128xf32>
    %1548 = arith.mulf %1540, %1547 : vector<8x128xf32>
    %1549 = arith.subf %1522, %1516 : f32
    %1550 = arith.subf %1525, %1519 : f32
    %1551 = arith.mulf %1549, %1550 : f32
    %1552 = vector.broadcast %1551 : f32 to vector<8x128xf32>
    %1553 = arith.addf %1552, %10 : vector<8x128xf32>
    %1554 = arith.subf %1553, %1548 : vector<8x128xf32>
    %1555 = tpu.reciprocal %1554 {approx = true} : vector<8x128xf32> -> vector<8x128xf32>
    %1556 = arith.mulf %1554, %1555 : vector<8x128xf32>
    %cst_656 = arith.constant 2.000000e+00 : f32
    %1557 = vector.broadcast %cst_656 : f32 to vector<8x128xf32>
    %1558 = arith.subf %1557, %1556 : vector<8x128xf32>
    %1559 = arith.mulf %1555, %1558 : vector<8x128xf32>
    %1560 = arith.mulf %1548, %1559 : vector<8x128xf32>
    %1561 = vector.shape_cast %1560 : vector<8x128xf32> to vector<1x8x128xf32>
    %cst_657 = arith.constant dense<0xFF800000> : vector<1xf32>
    %1562 = vector.multi_reduction <maximumf>, %1561, %cst_657 [1, 2] : vector<1x8x128xf32> to vector<1xf32>
    %1563 = vector.shape_cast %1562 : vector<1xf32> to vector<1x1x1xf32>
    %1564 = vector.extract %1563[0, 0, 0] : f32 from vector<1x1x1xf32>
    %cst_658 = arith.constant 0.000000e+00 : f32
    %1565 = arith.cmpf ogt, %1564, %cst_658 : f32
    %cst_659 = arith.constant 5.000000e-01 : f32
    %1566 = arith.minimumf %cst_659, %1564 : f32
    %cst_660 = arith.constant 5.000000e-01 : f32
    %1567 = arith.select %1565, %1566, %cst_660 : f32
    %c1_i32_661 = arith.constant 1 : i32
    %1568 = arith.cmpi sgt, %1455, %c1_i32_661 : i32
    %cst_662 = arith.constant 0x7F800000 : f32
    %1569 = arith.select %1568, %1567, %cst_662 : f32
    %1570 = vector.broadcast %1569 : f32 to vector<8x128xf32>
    %1571 = arith.cmpf oge, %1560, %1570 : vector<8x128xf32>
    %1572 = arith.ori %1513, %1571 : vector<8x128xi1>
    %c8_i32_663 = arith.constant 8 : i32
    %1573 = arith.addi %1453, %c8_i32_663 : i32
    %1574 = arith.index_cast %1573 : i32 to index
    %1575 = memref.load %arg2[%1574] : memref<256xf32, #tpu.memory_space<smem>>
    %c1_i32_664 = arith.constant 1 : i32
    %1576 = arith.addi %1573, %c1_i32_664 : i32
    %1577 = arith.index_cast %1576 : i32 to index
    %1578 = memref.load %arg2[%1577] : memref<256xf32, #tpu.memory_space<smem>>
    %c2_i32_665 = arith.constant 2 : i32
    %1579 = arith.addi %1573, %c2_i32_665 : i32
    %1580 = arith.index_cast %1579 : i32 to index
    %1581 = memref.load %arg2[%1580] : memref<256xf32, #tpu.memory_space<smem>>
    %c3_i32_666 = arith.constant 3 : i32
    %1582 = arith.addi %1573, %c3_i32_666 : i32
    %1583 = arith.index_cast %1582 : i32 to index
    %1584 = memref.load %arg2[%1583] : memref<256xf32, #tpu.memory_space<smem>>
    %c0_667 = arith.constant 0 : index
    %c0_668 = arith.constant 0 : index
    %c0_669 = arith.constant 0 : index
    %1585 = vector.load %arg3[%c0_667, %c0_668, %c0_669] : memref<4x8x128xf32, #tpu.memory_space<vmem>>, vector<1x8x128xf32>
    %1586 = vector.shape_cast %1585 : vector<1x8x128xf32> to vector<8x128xf32>
    %c1_670 = arith.constant 1 : index
    %c0_671 = arith.constant 0 : index
    %c0_672 = arith.constant 0 : index
    %1587 = vector.load %arg3[%c1_670, %c0_671, %c0_672] : memref<4x8x128xf32, #tpu.memory_space<vmem>>, vector<1x8x128xf32>
    %1588 = vector.shape_cast %1587 : vector<1x8x128xf32> to vector<8x128xf32>
    %c2_673 = arith.constant 2 : index
    %c0_674 = arith.constant 0 : index
    %c0_675 = arith.constant 0 : index
    %1589 = vector.load %arg3[%c2_673, %c0_674, %c0_675] : memref<4x8x128xf32, #tpu.memory_space<vmem>>, vector<1x8x128xf32>
    %1590 = vector.shape_cast %1589 : vector<1x8x128xf32> to vector<8x128xf32>
    %c3_676 = arith.constant 3 : index
    %c0_677 = arith.constant 0 : index
    %c0_678 = arith.constant 0 : index
    %1591 = vector.load %arg3[%c3_676, %c0_677, %c0_678] : memref<4x8x128xf32, #tpu.memory_space<vmem>>, vector<1x8x128xf32>
    %1592 = vector.shape_cast %1591 : vector<1x8x128xf32> to vector<8x128xf32>
    %1593 = vector.broadcast %1581 : f32 to vector<8x128xf32>
    %1594 = arith.minimumf %1590, %1593 : vector<8x128xf32>
    %1595 = vector.broadcast %1575 : f32 to vector<8x128xf32>
    %1596 = arith.maximumf %1586, %1595 : vector<8x128xf32>
    %1597 = arith.subf %1594, %1596 : vector<8x128xf32>
    %cst_679 = arith.constant 0.000000e+00 : f32
    %1598 = vector.broadcast %cst_679 : f32 to vector<8x128xf32>
    %1599 = arith.maximumf %1597, %1598 : vector<8x128xf32>
    %1600 = vector.broadcast %1584 : f32 to vector<8x128xf32>
    %1601 = arith.minimumf %1592, %1600 : vector<8x128xf32>
    %1602 = vector.broadcast %1578 : f32 to vector<8x128xf32>
    %1603 = arith.maximumf %1588, %1602 : vector<8x128xf32>
    %1604 = arith.subf %1601, %1603 : vector<8x128xf32>
    %cst_680 = arith.constant 0.000000e+00 : f32
    %1605 = vector.broadcast %cst_680 : f32 to vector<8x128xf32>
    %1606 = arith.maximumf %1604, %1605 : vector<8x128xf32>
    %1607 = arith.mulf %1599, %1606 : vector<8x128xf32>
    %1608 = arith.subf %1581, %1575 : f32
    %1609 = arith.subf %1584, %1578 : f32
    %1610 = arith.mulf %1608, %1609 : f32
    %1611 = vector.broadcast %1610 : f32 to vector<8x128xf32>
    %1612 = arith.addf %1611, %10 : vector<8x128xf32>
    %1613 = arith.subf %1612, %1607 : vector<8x128xf32>
    %1614 = tpu.reciprocal %1613 {approx = true} : vector<8x128xf32> -> vector<8x128xf32>
    %1615 = arith.mulf %1613, %1614 : vector<8x128xf32>
    %cst_681 = arith.constant 2.000000e+00 : f32
    %1616 = vector.broadcast %cst_681 : f32 to vector<8x128xf32>
    %1617 = arith.subf %1616, %1615 : vector<8x128xf32>
    %1618 = arith.mulf %1614, %1617 : vector<8x128xf32>
    %1619 = arith.mulf %1607, %1618 : vector<8x128xf32>
    %1620 = vector.shape_cast %1619 : vector<8x128xf32> to vector<1x8x128xf32>
    %cst_682 = arith.constant dense<0xFF800000> : vector<1xf32>
    %1621 = vector.multi_reduction <maximumf>, %1620, %cst_682 [1, 2] : vector<1x8x128xf32> to vector<1xf32>
    %1622 = vector.shape_cast %1621 : vector<1xf32> to vector<1x1x1xf32>
    %1623 = vector.extract %1622[0, 0, 0] : f32 from vector<1x1x1xf32>
    %cst_683 = arith.constant 0.000000e+00 : f32
    %1624 = arith.cmpf ogt, %1623, %cst_683 : f32
    %cst_684 = arith.constant 5.000000e-01 : f32
    %1625 = arith.minimumf %cst_684, %1623 : f32
    %cst_685 = arith.constant 5.000000e-01 : f32
    %1626 = arith.select %1624, %1625, %cst_685 : f32
    %c2_i32_686 = arith.constant 2 : i32
    %1627 = arith.cmpi sgt, %1455, %c2_i32_686 : i32
    %cst_687 = arith.constant 0x7F800000 : f32
    %1628 = arith.select %1627, %1626, %cst_687 : f32
    %1629 = vector.broadcast %1628 : f32 to vector<8x128xf32>
    %1630 = arith.cmpf oge, %1619, %1629 : vector<8x128xf32>
    %1631 = arith.ori %1572, %1630 : vector<8x128xi1>
    %c12_i32_688 = arith.constant 12 : i32
    %1632 = arith.addi %1453, %c12_i32_688 : i32
    %1633 = arith.index_cast %1632 : i32 to index
    %1634 = memref.load %arg2[%1633] : memref<256xf32, #tpu.memory_space<smem>>
    %c1_i32_689 = arith.constant 1 : i32
    %1635 = arith.addi %1632, %c1_i32_689 : i32
    %1636 = arith.index_cast %1635 : i32 to index
    %1637 = memref.load %arg2[%1636] : memref<256xf32, #tpu.memory_space<smem>>
    %c2_i32_690 = arith.constant 2 : i32
    %1638 = arith.addi %1632, %c2_i32_690 : i32
    %1639 = arith.index_cast %1638 : i32 to index
    %1640 = memref.load %arg2[%1639] : memref<256xf32, #tpu.memory_space<smem>>
    %c3_i32_691 = arith.constant 3 : i32
    %1641 = arith.addi %1632, %c3_i32_691 : i32
    %1642 = arith.index_cast %1641 : i32 to index
    %1643 = memref.load %arg2[%1642] : memref<256xf32, #tpu.memory_space<smem>>
    %c0_692 = arith.constant 0 : index
    %c0_693 = arith.constant 0 : index
    %c0_694 = arith.constant 0 : index
    %1644 = vector.load %arg3[%c0_692, %c0_693, %c0_694] : memref<4x8x128xf32, #tpu.memory_space<vmem>>, vector<1x8x128xf32>
    %1645 = vector.shape_cast %1644 : vector<1x8x128xf32> to vector<8x128xf32>
    %c1_695 = arith.constant 1 : index
    %c0_696 = arith.constant 0 : index
    %c0_697 = arith.constant 0 : index
    %1646 = vector.load %arg3[%c1_695, %c0_696, %c0_697] : memref<4x8x128xf32, #tpu.memory_space<vmem>>, vector<1x8x128xf32>
    %1647 = vector.shape_cast %1646 : vector<1x8x128xf32> to vector<8x128xf32>
    %c2_698 = arith.constant 2 : index
    %c0_699 = arith.constant 0 : index
    %c0_700 = arith.constant 0 : index
    %1648 = vector.load %arg3[%c2_698, %c0_699, %c0_700] : memref<4x8x128xf32, #tpu.memory_space<vmem>>, vector<1x8x128xf32>
    %1649 = vector.shape_cast %1648 : vector<1x8x128xf32> to vector<8x128xf32>
    %c3_701 = arith.constant 3 : index
    %c0_702 = arith.constant 0 : index
    %c0_703 = arith.constant 0 : index
    %1650 = vector.load %arg3[%c3_701, %c0_702, %c0_703] : memref<4x8x128xf32, #tpu.memory_space<vmem>>, vector<1x8x128xf32>
    %1651 = vector.shape_cast %1650 : vector<1x8x128xf32> to vector<8x128xf32>
    %1652 = vector.broadcast %1640 : f32 to vector<8x128xf32>
    %1653 = arith.minimumf %1649, %1652 : vector<8x128xf32>
    %1654 = vector.broadcast %1634 : f32 to vector<8x128xf32>
    %1655 = arith.maximumf %1645, %1654 : vector<8x128xf32>
    %1656 = arith.subf %1653, %1655 : vector<8x128xf32>
    %cst_704 = arith.constant 0.000000e+00 : f32
    %1657 = vector.broadcast %cst_704 : f32 to vector<8x128xf32>
    %1658 = arith.maximumf %1656, %1657 : vector<8x128xf32>
    %1659 = vector.broadcast %1643 : f32 to vector<8x128xf32>
    %1660 = arith.minimumf %1651, %1659 : vector<8x128xf32>
    %1661 = vector.broadcast %1637 : f32 to vector<8x128xf32>
    %1662 = arith.maximumf %1647, %1661 : vector<8x128xf32>
    %1663 = arith.subf %1660, %1662 : vector<8x128xf32>
    %cst_705 = arith.constant 0.000000e+00 : f32
    %1664 = vector.broadcast %cst_705 : f32 to vector<8x128xf32>
    %1665 = arith.maximumf %1663, %1664 : vector<8x128xf32>
    %1666 = arith.mulf %1658, %1665 : vector<8x128xf32>
    %1667 = arith.subf %1640, %1634 : f32
    %1668 = arith.subf %1643, %1637 : f32
    %1669 = arith.mulf %1667, %1668 : f32
    %1670 = vector.broadcast %1669 : f32 to vector<8x128xf32>
    %1671 = arith.addf %1670, %10 : vector<8x128xf32>
    %1672 = arith.subf %1671, %1666 : vector<8x128xf32>
    %1673 = tpu.reciprocal %1672 {approx = true} : vector<8x128xf32> -> vector<8x128xf32>
    %1674 = arith.mulf %1672, %1673 : vector<8x128xf32>
    %cst_706 = arith.constant 2.000000e+00 : f32
    %1675 = vector.broadcast %cst_706 : f32 to vector<8x128xf32>
    %1676 = arith.subf %1675, %1674 : vector<8x128xf32>
    %1677 = arith.mulf %1673, %1676 : vector<8x128xf32>
    %1678 = arith.mulf %1666, %1677 : vector<8x128xf32>
    %1679 = vector.shape_cast %1678 : vector<8x128xf32> to vector<1x8x128xf32>
    %cst_707 = arith.constant dense<0xFF800000> : vector<1xf32>
    %1680 = vector.multi_reduction <maximumf>, %1679, %cst_707 [1, 2] : vector<1x8x128xf32> to vector<1xf32>
    %1681 = vector.shape_cast %1680 : vector<1xf32> to vector<1x1x1xf32>
    %1682 = vector.extract %1681[0, 0, 0] : f32 from vector<1x1x1xf32>
    %cst_708 = arith.constant 0.000000e+00 : f32
    %1683 = arith.cmpf ogt, %1682, %cst_708 : f32
    %cst_709 = arith.constant 5.000000e-01 : f32
    %1684 = arith.minimumf %cst_709, %1682 : f32
    %cst_710 = arith.constant 5.000000e-01 : f32
    %1685 = arith.select %1683, %1684, %cst_710 : f32
    %c3_i32_711 = arith.constant 3 : i32
    %1686 = arith.cmpi sgt, %1455, %c3_i32_711 : i32
    %cst_712 = arith.constant 0x7F800000 : f32
    %1687 = arith.select %1686, %1685, %cst_712 : f32
    %1688 = vector.broadcast %1687 : f32 to vector<8x128xf32>
    %1689 = arith.cmpf oge, %1678, %1688 : vector<8x128xf32>
    %1690 = arith.ori %1631, %1689 : vector<8x128xi1>
    %c16_i32_713 = arith.constant 16 : i32
    %1691 = arith.addi %1453, %c16_i32_713 : i32
    %1692 = arith.index_cast %1691 : i32 to index
    %1693 = memref.load %arg2[%1692] : memref<256xf32, #tpu.memory_space<smem>>
    %c1_i32_714 = arith.constant 1 : i32
    %1694 = arith.addi %1691, %c1_i32_714 : i32
    %1695 = arith.index_cast %1694 : i32 to index
    %1696 = memref.load %arg2[%1695] : memref<256xf32, #tpu.memory_space<smem>>
    %c2_i32_715 = arith.constant 2 : i32
    %1697 = arith.addi %1691, %c2_i32_715 : i32
    %1698 = arith.index_cast %1697 : i32 to index
    %1699 = memref.load %arg2[%1698] : memref<256xf32, #tpu.memory_space<smem>>
    %c3_i32_716 = arith.constant 3 : i32
    %1700 = arith.addi %1691, %c3_i32_716 : i32
    %1701 = arith.index_cast %1700 : i32 to index
    %1702 = memref.load %arg2[%1701] : memref<256xf32, #tpu.memory_space<smem>>
    %c0_717 = arith.constant 0 : index
    %c0_718 = arith.constant 0 : index
    %c0_719 = arith.constant 0 : index
    %1703 = vector.load %arg3[%c0_717, %c0_718, %c0_719] : memref<4x8x128xf32, #tpu.memory_space<vmem>>, vector<1x8x128xf32>
    %1704 = vector.shape_cast %1703 : vector<1x8x128xf32> to vector<8x128xf32>
    %c1_720 = arith.constant 1 : index
    %c0_721 = arith.constant 0 : index
    %c0_722 = arith.constant 0 : index
    %1705 = vector.load %arg3[%c1_720, %c0_721, %c0_722] : memref<4x8x128xf32, #tpu.memory_space<vmem>>, vector<1x8x128xf32>
    %1706 = vector.shape_cast %1705 : vector<1x8x128xf32> to vector<8x128xf32>
    %c2_723 = arith.constant 2 : index
    %c0_724 = arith.constant 0 : index
    %c0_725 = arith.constant 0 : index
    %1707 = vector.load %arg3[%c2_723, %c0_724, %c0_725] : memref<4x8x128xf32, #tpu.memory_space<vmem>>, vector<1x8x128xf32>
    %1708 = vector.shape_cast %1707 : vector<1x8x128xf32> to vector<8x128xf32>
    %c3_726 = arith.constant 3 : index
    %c0_727 = arith.constant 0 : index
    %c0_728 = arith.constant 0 : index
    %1709 = vector.load %arg3[%c3_726, %c0_727, %c0_728] : memref<4x8x128xf32, #tpu.memory_space<vmem>>, vector<1x8x128xf32>
    %1710 = vector.shape_cast %1709 : vector<1x8x128xf32> to vector<8x128xf32>
    %1711 = vector.broadcast %1699 : f32 to vector<8x128xf32>
    %1712 = arith.minimumf %1708, %1711 : vector<8x128xf32>
    %1713 = vector.broadcast %1693 : f32 to vector<8x128xf32>
    %1714 = arith.maximumf %1704, %1713 : vector<8x128xf32>
    %1715 = arith.subf %1712, %1714 : vector<8x128xf32>
    %cst_729 = arith.constant 0.000000e+00 : f32
    %1716 = vector.broadcast %cst_729 : f32 to vector<8x128xf32>
    %1717 = arith.maximumf %1715, %1716 : vector<8x128xf32>
    %1718 = vector.broadcast %1702 : f32 to vector<8x128xf32>
    %1719 = arith.minimumf %1710, %1718 : vector<8x128xf32>
    %1720 = vector.broadcast %1696 : f32 to vector<8x128xf32>
    %1721 = arith.maximumf %1706, %1720 : vector<8x128xf32>
    %1722 = arith.subf %1719, %1721 : vector<8x128xf32>
    %cst_730 = arith.constant 0.000000e+00 : f32
    %1723 = vector.broadcast %cst_730 : f32 to vector<8x128xf32>
    %1724 = arith.maximumf %1722, %1723 : vector<8x128xf32>
    %1725 = arith.mulf %1717, %1724 : vector<8x128xf32>
    %1726 = arith.subf %1699, %1693 : f32
    %1727 = arith.subf %1702, %1696 : f32
    %1728 = arith.mulf %1726, %1727 : f32
    %1729 = vector.broadcast %1728 : f32 to vector<8x128xf32>
    %1730 = arith.addf %1729, %10 : vector<8x128xf32>
    %1731 = arith.subf %1730, %1725 : vector<8x128xf32>
    %1732 = tpu.reciprocal %1731 {approx = true} : vector<8x128xf32> -> vector<8x128xf32>
    %1733 = arith.mulf %1731, %1732 : vector<8x128xf32>
    %cst_731 = arith.constant 2.000000e+00 : f32
    %1734 = vector.broadcast %cst_731 : f32 to vector<8x128xf32>
    %1735 = arith.subf %1734, %1733 : vector<8x128xf32>
    %1736 = arith.mulf %1732, %1735 : vector<8x128xf32>
    %1737 = arith.mulf %1725, %1736 : vector<8x128xf32>
    %1738 = vector.shape_cast %1737 : vector<8x128xf32> to vector<1x8x128xf32>
    %cst_732 = arith.constant dense<0xFF800000> : vector<1xf32>
    %1739 = vector.multi_reduction <maximumf>, %1738, %cst_732 [1, 2] : vector<1x8x128xf32> to vector<1xf32>
    %1740 = vector.shape_cast %1739 : vector<1xf32> to vector<1x1x1xf32>
    %1741 = vector.extract %1740[0, 0, 0] : f32 from vector<1x1x1xf32>
    %cst_733 = arith.constant 0.000000e+00 : f32
    %1742 = arith.cmpf ogt, %1741, %cst_733 : f32
    %cst_734 = arith.constant 5.000000e-01 : f32
    %1743 = arith.minimumf %cst_734, %1741 : f32
    %cst_735 = arith.constant 5.000000e-01 : f32
    %1744 = arith.select %1742, %1743, %cst_735 : f32
    %c4_i32_736 = arith.constant 4 : i32
    %1745 = arith.cmpi sgt, %1455, %c4_i32_736 : i32
    %cst_737 = arith.constant 0x7F800000 : f32
    %1746 = arith.select %1745, %1744, %cst_737 : f32
    %1747 = vector.broadcast %1746 : f32 to vector<8x128xf32>
    %1748 = arith.cmpf oge, %1737, %1747 : vector<8x128xf32>
    %1749 = arith.ori %1690, %1748 : vector<8x128xi1>
    %c20_i32_738 = arith.constant 20 : i32
    %1750 = arith.addi %1453, %c20_i32_738 : i32
    %1751 = arith.index_cast %1750 : i32 to index
    %1752 = memref.load %arg2[%1751] : memref<256xf32, #tpu.memory_space<smem>>
    %c1_i32_739 = arith.constant 1 : i32
    %1753 = arith.addi %1750, %c1_i32_739 : i32
    %1754 = arith.index_cast %1753 : i32 to index
    %1755 = memref.load %arg2[%1754] : memref<256xf32, #tpu.memory_space<smem>>
    %c2_i32_740 = arith.constant 2 : i32
    %1756 = arith.addi %1750, %c2_i32_740 : i32
    %1757 = arith.index_cast %1756 : i32 to index
    %1758 = memref.load %arg2[%1757] : memref<256xf32, #tpu.memory_space<smem>>
    %c3_i32_741 = arith.constant 3 : i32
    %1759 = arith.addi %1750, %c3_i32_741 : i32
    %1760 = arith.index_cast %1759 : i32 to index
    %1761 = memref.load %arg2[%1760] : memref<256xf32, #tpu.memory_space<smem>>
    %c0_742 = arith.constant 0 : index
    %c0_743 = arith.constant 0 : index
    %c0_744 = arith.constant 0 : index
    %1762 = vector.load %arg3[%c0_742, %c0_743, %c0_744] : memref<4x8x128xf32, #tpu.memory_space<vmem>>, vector<1x8x128xf32>
    %1763 = vector.shape_cast %1762 : vector<1x8x128xf32> to vector<8x128xf32>
    %c1_745 = arith.constant 1 : index
    %c0_746 = arith.constant 0 : index
    %c0_747 = arith.constant 0 : index
    %1764 = vector.load %arg3[%c1_745, %c0_746, %c0_747] : memref<4x8x128xf32, #tpu.memory_space<vmem>>, vector<1x8x128xf32>
    %1765 = vector.shape_cast %1764 : vector<1x8x128xf32> to vector<8x128xf32>
    %c2_748 = arith.constant 2 : index
    %c0_749 = arith.constant 0 : index
    %c0_750 = arith.constant 0 : index
    %1766 = vector.load %arg3[%c2_748, %c0_749, %c0_750] : memref<4x8x128xf32, #tpu.memory_space<vmem>>, vector<1x8x128xf32>
    %1767 = vector.shape_cast %1766 : vector<1x8x128xf32> to vector<8x128xf32>
    %c3_751 = arith.constant 3 : index
    %c0_752 = arith.constant 0 : index
    %c0_753 = arith.constant 0 : index
    %1768 = vector.load %arg3[%c3_751, %c0_752, %c0_753] : memref<4x8x128xf32, #tpu.memory_space<vmem>>, vector<1x8x128xf32>
    %1769 = vector.shape_cast %1768 : vector<1x8x128xf32> to vector<8x128xf32>
    %1770 = vector.broadcast %1758 : f32 to vector<8x128xf32>
    %1771 = arith.minimumf %1767, %1770 : vector<8x128xf32>
    %1772 = vector.broadcast %1752 : f32 to vector<8x128xf32>
    %1773 = arith.maximumf %1763, %1772 : vector<8x128xf32>
    %1774 = arith.subf %1771, %1773 : vector<8x128xf32>
    %cst_754 = arith.constant 0.000000e+00 : f32
    %1775 = vector.broadcast %cst_754 : f32 to vector<8x128xf32>
    %1776 = arith.maximumf %1774, %1775 : vector<8x128xf32>
    %1777 = vector.broadcast %1761 : f32 to vector<8x128xf32>
    %1778 = arith.minimumf %1769, %1777 : vector<8x128xf32>
    %1779 = vector.broadcast %1755 : f32 to vector<8x128xf32>
    %1780 = arith.maximumf %1765, %1779 : vector<8x128xf32>
    %1781 = arith.subf %1778, %1780 : vector<8x128xf32>
    %cst_755 = arith.constant 0.000000e+00 : f32
    %1782 = vector.broadcast %cst_755 : f32 to vector<8x128xf32>
    %1783 = arith.maximumf %1781, %1782 : vector<8x128xf32>
    %1784 = arith.mulf %1776, %1783 : vector<8x128xf32>
    %1785 = arith.subf %1758, %1752 : f32
    %1786 = arith.subf %1761, %1755 : f32
    %1787 = arith.mulf %1785, %1786 : f32
    %1788 = vector.broadcast %1787 : f32 to vector<8x128xf32>
    %1789 = arith.addf %1788, %10 : vector<8x128xf32>
    %1790 = arith.subf %1789, %1784 : vector<8x128xf32>
    %1791 = tpu.reciprocal %1790 {approx = true} : vector<8x128xf32> -> vector<8x128xf32>
    %1792 = arith.mulf %1790, %1791 : vector<8x128xf32>
    %cst_756 = arith.constant 2.000000e+00 : f32
    %1793 = vector.broadcast %cst_756 : f32 to vector<8x128xf32>
    %1794 = arith.subf %1793, %1792 : vector<8x128xf32>
    %1795 = arith.mulf %1791, %1794 : vector<8x128xf32>
    %1796 = arith.mulf %1784, %1795 : vector<8x128xf32>
    %1797 = vector.shape_cast %1796 : vector<8x128xf32> to vector<1x8x128xf32>
    %cst_757 = arith.constant dense<0xFF800000> : vector<1xf32>
    %1798 = vector.multi_reduction <maximumf>, %1797, %cst_757 [1, 2] : vector<1x8x128xf32> to vector<1xf32>
    %1799 = vector.shape_cast %1798 : vector<1xf32> to vector<1x1x1xf32>
    %1800 = vector.extract %1799[0, 0, 0] : f32 from vector<1x1x1xf32>
    %cst_758 = arith.constant 0.000000e+00 : f32
    %1801 = arith.cmpf ogt, %1800, %cst_758 : f32
    %cst_759 = arith.constant 5.000000e-01 : f32
    %1802 = arith.minimumf %cst_759, %1800 : f32
    %cst_760 = arith.constant 5.000000e-01 : f32
    %1803 = arith.select %1801, %1802, %cst_760 : f32
    %c5_i32_761 = arith.constant 5 : i32
    %1804 = arith.cmpi sgt, %1455, %c5_i32_761 : i32
    %cst_762 = arith.constant 0x7F800000 : f32
    %1805 = arith.select %1804, %1803, %cst_762 : f32
    %1806 = vector.broadcast %1805 : f32 to vector<8x128xf32>
    %1807 = arith.cmpf oge, %1796, %1806 : vector<8x128xf32>
    %1808 = arith.ori %1749, %1807 : vector<8x128xi1>
    %c24_i32_763 = arith.constant 24 : i32
    %1809 = arith.addi %1453, %c24_i32_763 : i32
    %1810 = arith.index_cast %1809 : i32 to index
    %1811 = memref.load %arg2[%1810] : memref<256xf32, #tpu.memory_space<smem>>
    %c1_i32_764 = arith.constant 1 : i32
    %1812 = arith.addi %1809, %c1_i32_764 : i32
    %1813 = arith.index_cast %1812 : i32 to index
    %1814 = memref.load %arg2[%1813] : memref<256xf32, #tpu.memory_space<smem>>
    %c2_i32_765 = arith.constant 2 : i32
    %1815 = arith.addi %1809, %c2_i32_765 : i32
    %1816 = arith.index_cast %1815 : i32 to index
    %1817 = memref.load %arg2[%1816] : memref<256xf32, #tpu.memory_space<smem>>
    %c3_i32_766 = arith.constant 3 : i32
    %1818 = arith.addi %1809, %c3_i32_766 : i32
    %1819 = arith.index_cast %1818 : i32 to index
    %1820 = memref.load %arg2[%1819] : memref<256xf32, #tpu.memory_space<smem>>
    %c0_767 = arith.constant 0 : index
    %c0_768 = arith.constant 0 : index
    %c0_769 = arith.constant 0 : index
    %1821 = vector.load %arg3[%c0_767, %c0_768, %c0_769] : memref<4x8x128xf32, #tpu.memory_space<vmem>>, vector<1x8x128xf32>
    %1822 = vector.shape_cast %1821 : vector<1x8x128xf32> to vector<8x128xf32>
    %c1_770 = arith.constant 1 : index
    %c0_771 = arith.constant 0 : index
    %c0_772 = arith.constant 0 : index
    %1823 = vector.load %arg3[%c1_770, %c0_771, %c0_772] : memref<4x8x128xf32, #tpu.memory_space<vmem>>, vector<1x8x128xf32>
    %1824 = vector.shape_cast %1823 : vector<1x8x128xf32> to vector<8x128xf32>
    %c2_773 = arith.constant 2 : index
    %c0_774 = arith.constant 0 : index
    %c0_775 = arith.constant 0 : index
    %1825 = vector.load %arg3[%c2_773, %c0_774, %c0_775] : memref<4x8x128xf32, #tpu.memory_space<vmem>>, vector<1x8x128xf32>
    %1826 = vector.shape_cast %1825 : vector<1x8x128xf32> to vector<8x128xf32>
    %c3_776 = arith.constant 3 : index
    %c0_777 = arith.constant 0 : index
    %c0_778 = arith.constant 0 : index
    %1827 = vector.load %arg3[%c3_776, %c0_777, %c0_778] : memref<4x8x128xf32, #tpu.memory_space<vmem>>, vector<1x8x128xf32>
    %1828 = vector.shape_cast %1827 : vector<1x8x128xf32> to vector<8x128xf32>
    %1829 = vector.broadcast %1817 : f32 to vector<8x128xf32>
    %1830 = arith.minimumf %1826, %1829 : vector<8x128xf32>
    %1831 = vector.broadcast %1811 : f32 to vector<8x128xf32>
    %1832 = arith.maximumf %1822, %1831 : vector<8x128xf32>
    %1833 = arith.subf %1830, %1832 : vector<8x128xf32>
    %cst_779 = arith.constant 0.000000e+00 : f32
    %1834 = vector.broadcast %cst_779 : f32 to vector<8x128xf32>
    %1835 = arith.maximumf %1833, %1834 : vector<8x128xf32>
    %1836 = vector.broadcast %1820 : f32 to vector<8x128xf32>
    %1837 = arith.minimumf %1828, %1836 : vector<8x128xf32>
    %1838 = vector.broadcast %1814 : f32 to vector<8x128xf32>
    %1839 = arith.maximumf %1824, %1838 : vector<8x128xf32>
    %1840 = arith.subf %1837, %1839 : vector<8x128xf32>
    %cst_780 = arith.constant 0.000000e+00 : f32
    %1841 = vector.broadcast %cst_780 : f32 to vector<8x128xf32>
    %1842 = arith.maximumf %1840, %1841 : vector<8x128xf32>
    %1843 = arith.mulf %1835, %1842 : vector<8x128xf32>
    %1844 = arith.subf %1817, %1811 : f32
    %1845 = arith.subf %1820, %1814 : f32
    %1846 = arith.mulf %1844, %1845 : f32
    %1847 = vector.broadcast %1846 : f32 to vector<8x128xf32>
    %1848 = arith.addf %1847, %10 : vector<8x128xf32>
    %1849 = arith.subf %1848, %1843 : vector<8x128xf32>
    %1850 = tpu.reciprocal %1849 {approx = true} : vector<8x128xf32> -> vector<8x128xf32>
    %1851 = arith.mulf %1849, %1850 : vector<8x128xf32>
    %cst_781 = arith.constant 2.000000e+00 : f32
    %1852 = vector.broadcast %cst_781 : f32 to vector<8x128xf32>
    %1853 = arith.subf %1852, %1851 : vector<8x128xf32>
    %1854 = arith.mulf %1850, %1853 : vector<8x128xf32>
    %1855 = arith.mulf %1843, %1854 : vector<8x128xf32>
    %1856 = vector.shape_cast %1855 : vector<8x128xf32> to vector<1x8x128xf32>
    %cst_782 = arith.constant dense<0xFF800000> : vector<1xf32>
    %1857 = vector.multi_reduction <maximumf>, %1856, %cst_782 [1, 2] : vector<1x8x128xf32> to vector<1xf32>
    %1858 = vector.shape_cast %1857 : vector<1xf32> to vector<1x1x1xf32>
    %1859 = vector.extract %1858[0, 0, 0] : f32 from vector<1x1x1xf32>
    %cst_783 = arith.constant 0.000000e+00 : f32
    %1860 = arith.cmpf ogt, %1859, %cst_783 : f32
    %cst_784 = arith.constant 5.000000e-01 : f32
    %1861 = arith.minimumf %cst_784, %1859 : f32
    %cst_785 = arith.constant 5.000000e-01 : f32
    %1862 = arith.select %1860, %1861, %cst_785 : f32
    %c6_i32_786 = arith.constant 6 : i32
    %1863 = arith.cmpi sgt, %1455, %c6_i32_786 : i32
    %cst_787 = arith.constant 0x7F800000 : f32
    %1864 = arith.select %1863, %1862, %cst_787 : f32
    %1865 = vector.broadcast %1864 : f32 to vector<8x128xf32>
    %1866 = arith.cmpf oge, %1855, %1865 : vector<8x128xf32>
    %1867 = arith.ori %1808, %1866 : vector<8x128xi1>
    %c28_i32_788 = arith.constant 28 : i32
    %1868 = arith.addi %1453, %c28_i32_788 : i32
    %1869 = arith.index_cast %1868 : i32 to index
    %1870 = memref.load %arg2[%1869] : memref<256xf32, #tpu.memory_space<smem>>
    %c1_i32_789 = arith.constant 1 : i32
    %1871 = arith.addi %1868, %c1_i32_789 : i32
    %1872 = arith.index_cast %1871 : i32 to index
    %1873 = memref.load %arg2[%1872] : memref<256xf32, #tpu.memory_space<smem>>
    %c2_i32_790 = arith.constant 2 : i32
    %1874 = arith.addi %1868, %c2_i32_790 : i32
    %1875 = arith.index_cast %1874 : i32 to index
    %1876 = memref.load %arg2[%1875] : memref<256xf32, #tpu.memory_space<smem>>
    %c3_i32_791 = arith.constant 3 : i32
    %1877 = arith.addi %1868, %c3_i32_791 : i32
    %1878 = arith.index_cast %1877 : i32 to index
    %1879 = memref.load %arg2[%1878] : memref<256xf32, #tpu.memory_space<smem>>
    %c0_792 = arith.constant 0 : index
    %c0_793 = arith.constant 0 : index
    %c0_794 = arith.constant 0 : index
    %1880 = vector.load %arg3[%c0_792, %c0_793, %c0_794] : memref<4x8x128xf32, #tpu.memory_space<vmem>>, vector<1x8x128xf32>
    %1881 = vector.shape_cast %1880 : vector<1x8x128xf32> to vector<8x128xf32>
    %c1_795 = arith.constant 1 : index
    %c0_796 = arith.constant 0 : index
    %c0_797 = arith.constant 0 : index
    %1882 = vector.load %arg3[%c1_795, %c0_796, %c0_797] : memref<4x8x128xf32, #tpu.memory_space<vmem>>, vector<1x8x128xf32>
    %1883 = vector.shape_cast %1882 : vector<1x8x128xf32> to vector<8x128xf32>
    %c2_798 = arith.constant 2 : index
    %c0_799 = arith.constant 0 : index
    %c0_800 = arith.constant 0 : index
    %1884 = vector.load %arg3[%c2_798, %c0_799, %c0_800] : memref<4x8x128xf32, #tpu.memory_space<vmem>>, vector<1x8x128xf32>
    %1885 = vector.shape_cast %1884 : vector<1x8x128xf32> to vector<8x128xf32>
    %c3_801 = arith.constant 3 : index
    %c0_802 = arith.constant 0 : index
    %c0_803 = arith.constant 0 : index
    %1886 = vector.load %arg3[%c3_801, %c0_802, %c0_803] : memref<4x8x128xf32, #tpu.memory_space<vmem>>, vector<1x8x128xf32>
    %1887 = vector.shape_cast %1886 : vector<1x8x128xf32> to vector<8x128xf32>
    %1888 = vector.broadcast %1876 : f32 to vector<8x128xf32>
    %1889 = arith.minimumf %1885, %1888 : vector<8x128xf32>
    %1890 = vector.broadcast %1870 : f32 to vector<8x128xf32>
    %1891 = arith.maximumf %1881, %1890 : vector<8x128xf32>
    %1892 = arith.subf %1889, %1891 : vector<8x128xf32>
    %cst_804 = arith.constant 0.000000e+00 : f32
    %1893 = vector.broadcast %cst_804 : f32 to vector<8x128xf32>
    %1894 = arith.maximumf %1892, %1893 : vector<8x128xf32>
    %1895 = vector.broadcast %1879 : f32 to vector<8x128xf32>
    %1896 = arith.minimumf %1887, %1895 : vector<8x128xf32>
    %1897 = vector.broadcast %1873 : f32 to vector<8x128xf32>
    %1898 = arith.maximumf %1883, %1897 : vector<8x128xf32>
    %1899 = arith.subf %1896, %1898 : vector<8x128xf32>
    %cst_805 = arith.constant 0.000000e+00 : f32
    %1900 = vector.broadcast %cst_805 : f32 to vector<8x128xf32>
    %1901 = arith.maximumf %1899, %1900 : vector<8x128xf32>
    %1902 = arith.mulf %1894, %1901 : vector<8x128xf32>
    %1903 = arith.subf %1876, %1870 : f32
    %1904 = arith.subf %1879, %1873 : f32
    %1905 = arith.mulf %1903, %1904 : f32
    %1906 = vector.broadcast %1905 : f32 to vector<8x128xf32>
    %1907 = arith.addf %1906, %10 : vector<8x128xf32>
    %1908 = arith.subf %1907, %1902 : vector<8x128xf32>
    %1909 = tpu.reciprocal %1908 {approx = true} : vector<8x128xf32> -> vector<8x128xf32>
    %1910 = arith.mulf %1908, %1909 : vector<8x128xf32>
    %cst_806 = arith.constant 2.000000e+00 : f32
    %1911 = vector.broadcast %cst_806 : f32 to vector<8x128xf32>
    %1912 = arith.subf %1911, %1910 : vector<8x128xf32>
    %1913 = arith.mulf %1909, %1912 : vector<8x128xf32>
    %1914 = arith.mulf %1902, %1913 : vector<8x128xf32>
    %1915 = vector.shape_cast %1914 : vector<8x128xf32> to vector<1x8x128xf32>
    %cst_807 = arith.constant dense<0xFF800000> : vector<1xf32>
    %1916 = vector.multi_reduction <maximumf>, %1915, %cst_807 [1, 2] : vector<1x8x128xf32> to vector<1xf32>
    %1917 = vector.shape_cast %1916 : vector<1xf32> to vector<1x1x1xf32>
    %1918 = vector.extract %1917[0, 0, 0] : f32 from vector<1x1x1xf32>
    %cst_808 = arith.constant 0.000000e+00 : f32
    %1919 = arith.cmpf ogt, %1918, %cst_808 : f32
    %cst_809 = arith.constant 5.000000e-01 : f32
    %1920 = arith.minimumf %cst_809, %1918 : f32
    %cst_810 = arith.constant 5.000000e-01 : f32
    %1921 = arith.select %1919, %1920, %cst_810 : f32
    %c7_i32_811 = arith.constant 7 : i32
    %1922 = arith.cmpi sgt, %1455, %c7_i32_811 : i32
    %cst_812 = arith.constant 0x7F800000 : f32
    %1923 = arith.select %1922, %1921, %cst_812 : f32
    %1924 = vector.broadcast %1923 : f32 to vector<8x128xf32>
    %1925 = arith.cmpf oge, %1914, %1924 : vector<8x128xf32>
    %1926 = arith.ori %1867, %1925 : vector<8x128xi1>
    %1927 = arith.extui %1926 : vector<8x128xi1> to vector<8x128xi32>
    %c3_813 = arith.constant 3 : index
    %c0_814 = arith.constant 0 : index
    %c0_815 = arith.constant 0 : index
    %1928 = vector.load %arg4[%c3_813, %c0_814, %c0_815] : memref<4x8x128xi32, #tpu.memory_space<vmem>>, vector<1x8x128xi32>
    %1929 = vector.shape_cast %1928 : vector<1x8x128xi32> to vector<8x128xi32>
    %1930 = vector.shape_cast %1927 : vector<8x128xi32> to vector<1x8x128xi32>
    tpu.vector_store %arg4[%c3_813, %c0_814, %c0_815], %1930 {strides = array<i32>} : memref<4x8x128xi32, #tpu.memory_space<vmem>>, vector<1x8x128xi32>,
    return
  }
  func.func @transform_0(%arg0: i32, %arg1: memref<8xi32, #tpu.memory_space<smem>>) -> i32 {
    %c0_i32 = arith.constant 0 : i32
    %c0_i32_0 = arith.constant 0 : i32
    return %c0_i32 : i32
  }
  func.func @transform_1(%arg0: i32, %arg1: memref<8xi32, #tpu.memory_space<smem>>) -> (i32, i32, i32) {
    %c0_i32 = arith.constant 0 : i32
    %c0_i32_0 = arith.constant 0 : i32
    %c0_i32_1 = arith.constant 0 : i32
    %c0_i32_2 = arith.constant 0 : i32
    return %c0_i32, %c0_i32_0, %c0_i32_1 : i32, i32, i32
  }
  func.func @transform_2(%arg0: i32, %arg1: memref<8xi32, #tpu.memory_space<smem>>) -> (i32, i32, i32) {
    %c0_i32 = arith.constant 0 : i32
    %c0_i32_0 = arith.constant 0 : i32
    %c0_i32_1 = arith.constant 0 : i32
    return %arg0, %c0_i32, %c0_i32_0 : i32, i32, i32
  }
}

</mosaic_0001>

<llo_original>
// kernel: tpu_custom_call.1
$region0: #{tpu_custom_call.1}
  #allocation0 [shape = 'u32[]', space=smem, size = 0x4, offset = 0x4, fixed_abs, tag = 'smem constant byte address 0x4 - core index']
  #allocation1 [shape = 'u32[144,128]{1,0:T(1,128)}', space=vmem, size = 0x12000, scoped, tag = 'internal scratch']
  #allocation2 [shape = 's32[1]{0}', space=sflag, size = 0x4, scoped, tag = 'scoped memory for tpu_custom_call.1']
  #allocation3 [shape = 'u8[512]{0}', space=smem, size = 0x200, scoped, tag = 'prefetched SMEM operand 0']
  %s0 = inlined_call_operand.hbm [shape: s32[8], index: 0, kind: input, shape index: {}]
  %s1 = inlined_call_operand.vmem [shape: f32[256], index: 1, kind: input, shape index: {}]
  %s2 = inlined_call_operand.hbm [shape: f32[4,8,128], index: 2, kind: input, shape index: {}]
  %s3 = inlined_call_operand.hbm [shape: s32[8,8,128], index: 3, kind: output, shape index: {}]
  %s4 = sld [smem:[#allocation0]]
  $region49: #{tpu_custom_call.1} parent=0
    _
  %s6 = ssub.s32 1, %s4
  %s7 = scalar_select 0, %s6, %s4
  %9 = dma.hbm_to_smem %s0, 16, [#allocation3], [#allocation2]
  %10 = dma.done [#allocation2], 16
  %11 = sfence
  $region1: #{tpu_custom_call.1} parent=0
    #allocation4 [shape = 'u8[1024]{0}', space=smem, size = 0x400, scoped, tag = 'input window, operand 1, single buffered']
    #allocation5 [shape = 's32[2]{0}', space=sflag, size = 0x8, scoped, tag = 'scoped memory for tpu_custom_call.1']
    #allocation6 [shape = 's32[2]{0}', space=sflag, size = 0x8, scoped, tag = 'scoped memory for tpu_custom_call.1']
    #allocation7 [shape = 's32[2]{0}', space=sflag, size = 0x8, scoped, tag = 'scoped memory for tpu_custom_call.1']
    #allocation8 [shape = 'u8[16384]{0}', space=vmem, size = 0x4000, scoped, tag = 'input window, operand 2, single buffered']
    #allocation9 [shape = 'u8[32768]{0}', space=vmem, size = 0x8000, scoped, tag = 'output window, operand 0']
    %12 = vsyncpa [#allocation7], 0
    %13 = vsyncpa [#allocation5], 0
    %14 = vsyncpa [#allocation6], 0
    %s15 = scalar_lea.sflag [#allocation6], 1
    %16 = vsyncpa %s15, 0
    loop: start=0, step=1, limit=4
    $region2: #{tpu_custom_call.1} parent=1 // loop_pre_header
      _
    $region3: #{tpu_custom_call.1} parent=1 // loop_header
      %s18 = sphi 0, %s22
      %p19 = scmp.ge.s32.totalorder %s18, 4
      %s26 = sphi 0, %s26
      %s28 = sphi 0, %s26
      %s29 = sphi 0, %s28
      %s43 = sphi 0, %s29
      %s47 = sphi 0, %s47
      %s49 = sphi 0, %s47
      %s50 = sphi 0, %s49
      %s64 = sphi 0, %s50
      %s70 = sphi 0, %s72
      %s73 = sphi 0, %s70
      %s74 = sphi 0, %s73
      %s90 = sphi 0, %s74
    $region4: #{tpu_custom_call.1} parent=1 // loop_header_branch
      %21 = sbr.rel (%p19) target = $region8
    $region5: #{tpu_custom_call.1} parent=1 // loop_body
      %s23 = ssub.s32 %s18, 1
      %s24 = ssub.s32 %s18, 2
      %s25 = sadd.s32 %s18, 1
      %s27 = sadd.s32 %s26, 1
      %p30 = scmp.eq.s32.totalorder %s18, 1
      %p31 = scmp.ne.s32.totalorder %s26, %s28
      %p32 = scmp.eq.s32.totalorder %s18, 0
      %p33 = por %p31, %p32
      %p34 = scmp.ne.s32.totalorder %s26, %s28
      %p35 = scmp.eq.s32.totalorder %s23, 1
      %p36 = por %p34, %p35
      %p37 = scmp.ne.s32.totalorder %s28, %s29
      %p38 = scmp.eq.s32.totalorder %s23, 0
      %p39 = por %p37, %p38
      %p40 = scmp.ne.s32.totalorder %s28, %s29
      %p41 = scmp.eq.s32.totalorder %s24, 1
      %p42 = por %p40, %p41
      %p44 = scmp.ne.s32.totalorder %s29, %s43
      %p45 = scmp.eq.s32.totalorder %s24, 0
      %p46 = por %p44, %p45
      %s48 = sadd.s32 %s47, 1
      %p51 = scmp.eq.s32.totalorder %s18, 1
      %p52 = scmp.ne.s32.totalorder %s47, %s49
      %p53 = scmp.eq.s32.totalorder %s18, 0
      %p54 = por %p52, %p53
      %p55 = scmp.ne.s32.totalorder %s47, %s49
      %p56 = scmp.eq.s32.totalorder %s23, 1
      %p57 = por %p55, %p56
      %p58 = scmp.ne.s32.totalorder %s49, %s50
      %p59 = scmp.eq.s32.totalorder %s23, 0
      %p60 = por %p58, %p59
      %p61 = scmp.ne.s32.totalorder %s49, %s50
      %p62 = scmp.eq.s32.totalorder %s24, 1
      %p63 = por %p61, %p62
      %p65 = scmp.ne.s32.totalorder %s50, %s64
      %p66 = scmp.eq.s32.totalorder %s24, 0
      %p67 = por %p65, %p66
      %s68 = ssub.s32 %s18, %s25
      %p69 = scmp.eq.s32.totalorder %s68, 0
      %s71 = sadd.s32 %s70, 1
      %s72 = scalar_select %p69, %s70, %s71
      %p75 = pneg %p69
      %p76 = scmp.eq.s32.totalorder %s18, 1
      %p77 = por %p75, %p76
      %p78 = scmp.ne.s32.totalorder %s70, %s73
      %p79 = scmp.eq.s32.totalorder %s18, 0
      %p80 = por %p78, %p79
      %p81 = scmp.ne.s32.totalorder %s70, %s73
      %p82 = scmp.eq.s32.totalorder %s23, 1
      %p83 = por %p81, %p82
      %p84 = scmp.ne.s32.totalorder %s73, %s74
      %p85 = scmp.eq.s32.totalorder %s23, 0
      %p86 = por %p84, %p85
      %p87 = scmp.ne.s32.totalorder %s73, %s74
      %p88 = scmp.eq.s32.totalorder %s24, 1
      %p89 = por %p87, %p88
      %p91 = scmp.ne.s32.totalorder %s74, %s90
      %p92 = scmp.eq.s32.totalorder %s24, 0
      %p93 = por %p91, %p92
      %p94 = scmp.le.s32.totalorder 1, %s18
      %p95 = scmp.lt.s32.totalorder %s18, 3
      %p96 = pnand %p94, %p95
      %p97 = pneg %p96
      // Predicated region
      $region9: #{tpu_custom_call.1} parent=5 // pred_check
        _
      $region10: #{tpu_custom_call.1} parent=5 // pred_check_branch
        %99 = sbr.rel (%p96) target = $region12
      $region11: #{tpu_custom_call.1} parent=5 // pred_region
        %s100 = ssub.s32 %s18, 1
        // Predicated region
        $region13: #{tpu_custom_call.1} parent=11 // pred_check
          %p101 = pneg %p39
        $region14: #{tpu_custom_call.1} parent=11 // pred_check_branch
          %103 = sbr.rel (%p101) target = $region16
        $region15: #{tpu_custom_call.1} parent=11 // pred_region
          %s105 = ssub.s32 32, 32
          %106 = vsyncadd [#allocation7], %s105
          %s108 = sshll.u32 %s1, 4
          %s109 = int_to_ptr.vmem [resolvable:$true] %s108
          %111 = dma.vmem_to_smem %s109, 32, [#allocation4], [#allocation7]
        $region16: #{tpu_custom_call.1} parent=11 // pred_fallthru
          _
        // Predicated region
        $region17: #{tpu_custom_call.1} parent=11 // pred_check
          %p112 = pneg %p60
        $region18: #{tpu_custom_call.1} parent=11 // pred_check_branch
          %114 = sbr.rel (%p112) target = $region20
        $region19: #{tpu_custom_call.1} parent=11 // pred_region
          %s116 = ssub.s32 512, 512
          %117 = vsyncadd [#allocation5], %s116
          %s118 = sshll.u32 [#allocation8], 4
          %s119 = int_to_ptr.vmem [resolvable:$true] %s118
          %124 = dma.hbm_to_vmem [thread:$0]  %s2, 512, %s119, [#allocation5], 128, 128, 8
        $region20: #{tpu_custom_call.1} parent=11 // pred_fallthru
          _
      $region12: #{tpu_custom_call.1} parent=5 // pred_fallthru
        _
      %p125 = scmp.lt.s32.totalorder %s18, 2
      // Predicated region
      $region21: #{tpu_custom_call.1} parent=5 // pred_check
        %p126 = pneg %p125
      $region22: #{tpu_custom_call.1} parent=5 // pred_check_branch
        %128 = sbr.rel (%p126) target = $region24
      $region23: #{tpu_custom_call.1} parent=5 // pred_region
        _
      $region24: #{tpu_custom_call.1} parent=5 // pred_fallthru
        _
      %p129 = scmp.le.s32.totalorder 1, %s18
      %p130 = scmp.lt.s32.totalorder %s18, 3
      %p131 = pnand %p129, %p130
      %p132 = pneg %p131
      // Predicated region
      $region25: #{tpu_custom_call.1} parent=5 // pred_check
        _
      $region26: #{tpu_custom_call.1} parent=5 // pred_check_branch
        %134 = sbr.rel (%p131) target = $region28
      $region27: #{tpu_custom_call.1} parent=5 // pred_region
        %s135 = ssub.s32 %s18, 1
        // Predicated region
        $region29: #{tpu_custom_call.1} parent=27 // pred_check
          %p136 = pneg %p39
        $region30: #{tpu_custom_call.1} parent=27 // pred_check_branch
          %138 = sbr.rel (%p136) target = $region32
        $region31: #{tpu_custom_call.1} parent=27 // pred_region
          %139 = dma.done [#allocation7], 32
        $region32: #{tpu_custom_call.1} parent=27 // pred_fallthru
          _
        // Predicated region
        $region33: #{tpu_custom_call.1} parent=27 // pred_check
          %p140 = pneg %p60
        $region34: #{tpu_custom_call.1} parent=27 // pred_check_branch
          %142 = sbr.rel (%p140) target = $region36
        $region35: #{tpu_custom_call.1} parent=27 // pred_region
          %143 = dma.done [#allocation5], 512
        $region36: #{tpu_custom_call.1} parent=27 // pred_fallthru
          _
        %144 = sfence
        %p145 = pneg %p39
        %p146 = pneg %p36
        %p147 = pneg %p60
        %p148 = pneg %p57
        %p149 = pneg %p86
        %p150 = pneg %p83
        %s151 = sand.u32 %s73, 1
        %s152 = scalar_lea.sflag [#allocation6], %s151
        %s153 = sand.u32 %s73, 1
        %s154 = smul.addr %s153, 32
        %s155 = scalar_lea.vmem [#allocation9], %s154
        %s156 = smul.u32 4, %s23
        %s157 = scalar_lea.vmem [#allocation8], 16
        %v158 = vld [vmem:[%s157] sm:$0xff]
        %v159 = vld [vmem:[#allocation8] sm:$0xff]
        %v160 = vsub.f32 %v158, %v159
        %s161 = scalar_lea.vmem [#allocation8], 24
        %v162 = vld [vmem:[%s161] sm:$0xff]
        %s163 = scalar_lea.vmem [#allocation8], 8
        %v164 = vld [vmem:[%s163] sm:$0xff]
        %v165 = vsub.f32 %v162, %v164
        %v166 = vmul.f32 %v160, %v165
        %s167 = smul.u32 %s23, 4
        %s168 = smul.u32 %s23, 128
        %s169 = sld [smem:[#allocation3 + %s167]]
        %s170 = sld [smem:[#allocation4 + %s168]]
        %s171 = sadd.s32 %s168, 1
        %s172 = sld [smem:[#allocation4 + %s171]]
        %s173 = sadd.s32 %s168, 2
        %s174 = sld [smem:[#allocation4 + %s173]]
        %s175 = sadd.s32 %s168, 3
        %s176 = sld [smem:[#allocation4 + %s175]]
        %v177 = vstv %s174
        %v178 = vmin.f32 %v158, %v177
        %v179 = vstv %s170
        %v180 = vmax.f32 %v159, %v179
        %v181 = vsub.f32 %v178, %v180
        %v182 = vmax.f32 %v181, 0.0
        %v183 = vstv %s176
        %v184 = vmin.f32 %v162, %v183
        %v185 = vstv %s172
        %v186 = vmax.f32 %v164, %v185
        %v187 = vsub.f32 %v184, %v186
        %v188 = vmax.f32 %v187, 0.0
        %v189 = vmul.f32 %v182, %v188
        %s190 = ssub.f32 %s174, %s170
        %s191 = ssub.f32 %s176, %s172
        %s192 = smul.f32 %s190, %s191
        %v193 = vstv %s192
        %v194 = vadd.f32 %v193, %v166
        %v195 = vsub.f32 %v194, %v189
        %v196 = vrcp.pop %v195
        %v197 = vmul.f32 %v195, %v196
        %v198 = vsub.f32 2.0, %v197
        %v199 = vmul.f32 %v196, %v198
        %v200 = vmul.f32 %v189, %v199
        %201 = vmax.xlane.f32.xlu0 %v200
        %v202 = vpop.xlane.xlu0 %201
        %v203 = vrot.slane %v202, 4
        %v204 = vmax.f32 %v202, %v203
        %v205 = vrot.slane %v204, 2
        %v206 = vmax.f32 %v204, %v205
        %v207 = vrot.slane %v206, 1
        %v208 = vmax.f32 %v206, %v207
        %s209 = vtos %v208
        %p210 = scmp.gt.f32.partialorder %s209, 0.0
        %s211 = smin.f32 %s209, 0.5
        %s212 = scalar_select %p210, %s211, 0.5
        %p213 = scmp.gt.s32.totalorder %s169, 0
        %s214 = scalar_select %p213, %s212, inf
        %v215 = vstv %s214
        %vm216 = vcmp.ge.f32.partialorder %v200, %v215
        %s217 = sadd.s32 %s168, 4
        %s218 = sld [smem:[#allocation4 + %s217]]
        %s219 = sadd.s32 %s168, 5
        %s220 = sld [smem:[#allocation4 + %s219]]
        %s221 = sadd.s32 %s168, 6
        %s222 = sld [smem:[#allocation4 + %s221]]
        %s223 = sadd.s32 %s168, 7
        %s224 = sld [smem:[#allocation4 + %s223]]
        %v225 = vstv %s222
        %v226 = vmin.f32 %v158, %v225
        %v227 = vstv %s218
        %v228 = vmax.f32 %v159, %v227
        %v229 = vsub.f32 %v226, %v228
        %v230 = vmax.f32 %v229, 0.0
        %v231 = vstv %s224
        %v232 = vmin.f32 %v162, %v231
        %v233 = vstv %s220
        %v234 = vmax.f32 %v164, %v233
        %v235 = vsub.f32 %v232, %v234
        %v236 = vmax.f32 %v235, 0.0
        %v237 = vmul.f32 %v230, %v236
        %s238 = ssub.f32 %s222, %s218
        %s239 = ssub.f32 %s224, %s220
        %s240 = smul.f32 %s238, %s239
        %v241 = vstv %s240
        %v242 = vadd.f32 %v241, %v166
        %v243 = vsub.f32 %v242, %v237
        %v244 = vrcp.pop %v243
        %v245 = vmul.f32 %v243, %v244
        %v246 = vsub.f32 2.0, %v245
        %v247 = vmul.f32 %v244, %v246
        %v248 = vmul.f32 %v237, %v247
        %249 = vmax.xlane.f32.xlu0 %v248
        %v250 = vpop.xlane.xlu0 %249
        %v251 = vrot.slane %v250, 4
        %v252 = vmax.f32 %v250, %v251
        %v253 = vrot.slane %v252, 2
        %v254 = vmax.f32 %v252, %v253
        %v255 = vrot.slane %v254, 1
        %v256 = vmax.f32 %v254, %v255
        %s257 = vtos %v256
        %p258 = scmp.gt.f32.partialorder %s257, 0.0
        %s259 = smin.f32 %s257, 0.5
        %s260 = scalar_select %p258, %s259, 0.5
        %p261 = scmp.gt.s32.totalorder %s169, 1
        %s262 = scalar_select %p261, %s260, inf
        %v263 = vstv %s262
        %vm264 = vcmp.ge.f32.partialorder %v248, %v263
        %vm265 = vmor %vm216, %vm264
        %s266 = sadd.s32 %s168, 8
        %s267 = sld [smem:[#allocation4 + %s266]]
        %s268 = sadd.s32 %s168, 9
        %s269 = sld [smem:[#allocation4 + %s268]]
        %s270 = sadd.s32 %s168, 10
        %s271 = sld [smem:[#allocation4 + %s270]]
        %s272 = sadd.s32 %s168, 11
        %s273 = sld [smem:[#allocation4 + %s272]]
        %v274 = vstv %s271
        %v275 = vmin.f32 %v158, %v274
        %v276 = vstv %s267
        %v277 = vmax.f32 %v159, %v276
        %v278 = vsub.f32 %v275, %v277
        %v279 = vmax.f32 %v278, 0.0
        %v280 = vstv %s273
        %v281 = vmin.f32 %v162, %v280
        %v282 = vstv %s269
        %v283 = vmax.f32 %v164, %v282
        %v284 = vsub.f32 %v281, %v283
        %v285 = vmax.f32 %v284, 0.0
        %v286 = vmul.f32 %v279, %v285
        %s287 = ssub.f32 %s271, %s267
        %s288 = ssub.f32 %s273, %s269
        %s289 = smul.f32 %s287, %s288
        %v290 = vstv %s289
        %v291 = vadd.f32 %v290, %v166
        %v292 = vsub.f32 %v291, %v286
        %v293 = vrcp.pop %v292
        %v294 = vmul.f32 %v292, %v293
        %v295 = vsub.f32 2.0, %v294
        %v296 = vmul.f32 %v293, %v295
        %v297 = vmul.f32 %v286, %v296
        %298 = vmax.xlane.f32.xlu0 %v297
        %v299 = vpop.xlane.xlu0 %298
        %v300 = vrot.slane %v299, 4
        %v301 = vmax.f32 %v299, %v300
        %v302 = vrot.slane %v301, 2
        %v303 = vmax.f32 %v301, %v302
        %v304 = vrot.slane %v303, 1
        %v305 = vmax.f32 %v303, %v304
        %s306 = vtos %v305
        %p307 = scmp.gt.f32.partialorder %s306, 0.0
        %s308 = smin.f32 %s306, 0.5
        %s309 = scalar_select %p307, %s308, 0.5
        %p310 = scmp.gt.s32.totalorder %s169, 2
        %s311 = scalar_select %p310, %s309, inf
        %v312 = vstv %s311
        %vm313 = vcmp.ge.f32.partialorder %v297, %v312
        %vm314 = vmor %vm265, %vm313
        %s315 = sadd.s32 %s168, 12
        %s316 = sld [smem:[#allocation4 + %s315]]
        %s317 = sadd.s32 %s168, 13
        %s318 = sld [smem:[#allocation4 + %s317]]
        %s319 = sadd.s32 %s168, 14
        %s320 = sld [smem:[#allocation4 + %s319]]
        %s321 = sadd.s32 %s168, 15
        %s322 = sld [smem:[#allocation4 + %s321]]
        %v323 = vstv %s320
        %v324 = vmin.f32 %v158, %v323
        %v325 = vstv %s316
        %v326 = vmax.f32 %v159, %v325
        %v327 = vsub.f32 %v324, %v326
        %v328 = vmax.f32 %v327, 0.0
        %v329 = vstv %s322
        %v330 = vmin.f32 %v162, %v329
        %v331 = vstv %s318
        %v332 = vmax.f32 %v164, %v331
        %v333 = vsub.f32 %v330, %v332
        %v334 = vmax.f32 %v333, 0.0
        %v335 = vmul.f32 %v328, %v334
        %s336 = ssub.f32 %s320, %s316
        %s337 = ssub.f32 %s322, %s318
        %s338 = smul.f32 %s336, %s337
        %v339 = vstv %s338
        %v340 = vadd.f32 %v339, %v166
        %v341 = vsub.f32 %v340, %v335
        %v342 = vrcp.pop %v341
        %v343 = vmul.f32 %v341, %v342
        %v344 = vsub.f32 2.0, %v343
        %v345 = vmul.f32 %v342, %v344
        %v346 = vmul.f32 %v335, %v345
        %347 = vmax.xlane.f32.xlu0 %v346
        %v348 = vpop.xlane.xlu0 %347
        %v349 = vrot.slane %v348, 4
        %v350 = vmax.f32 %v348, %v349
        %v351 = vrot.slane %v350, 2
        %v352 = vmax.f32 %v350, %v351
        %v353 = vrot.slane %v352, 1
        %v354 = vmax.f32 %v352, %v353
        %s355 = vtos %v354
        %p356 = scmp.gt.f32.partialorder %s355, 0.0
        %s357 = smin.f32 %s355, 0.5
        %s358 = scalar_select %p356, %s357, 0.5
        %p359 = scmp.gt.s32.totalorder %s169, 3
        %s360 = scalar_select %p359, %s358, inf
        %v361 = vstv %s360
        %vm362 = vcmp.ge.f32.partialorder %v346, %v361
        %vm363 = vmor %vm314, %vm362
        %s364 = sadd.s32 %s168, 16
        %s365 = sld [smem:[#allocation4 + %s364]]
        %s366 = sadd.s32 %s168, 17
        %s367 = sld [smem:[#allocation4 + %s366]]
        %s368 = sadd.s32 %s168, 18
        %s369 = sld [smem:[#allocation4 + %s368]]
        %s370 = sadd.s32 %s168, 19
        %s371 = sld [smem:[#allocation4 + %s370]]
        %v372 = vstv %s369
        %v373 = vmin.f32 %v158, %v372
        %v374 = vstv %s365
        %v375 = vmax.f32 %v159, %v374
        %v376 = vsub.f32 %v373, %v375
        %v377 = vmax.f32 %v376, 0.0
        %v378 = vstv %s371
        %v379 = vmin.f32 %v162, %v378
        %v380 = vstv %s367
        %v381 = vmax.f32 %v164, %v380
        %v382 = vsub.f32 %v379, %v381
        %v383 = vmax.f32 %v382, 0.0
        %v384 = vmul.f32 %v377, %v383
        %s385 = ssub.f32 %s369, %s365
        %s386 = ssub.f32 %s371, %s367
        %s387 = smul.f32 %s385, %s386
        %v388 = vstv %s387
        %v389 = vadd.f32 %v388, %v166
        %v390 = vsub.f32 %v389, %v384
        %v391 = vrcp.pop %v390
        %v392 = vmul.f32 %v390, %v391
        %v393 = vsub.f32 2.0, %v392
        %v394 = vmul.f32 %v391, %v393
        %v395 = vmul.f32 %v384, %v394
        %396 = vmax.xlane.f32.xlu0 %v395
        %v397 = vpop.xlane.xlu0 %396
        %v398 = vrot.slane %v397, 4
        %v399 = vmax.f32 %v397, %v398
        %v400 = vrot.slane %v399, 2
        %v401 = vmax.f32 %v399, %v400
        %v402 = vrot.slane %v401, 1
        %v403 = vmax.f32 %v401, %v402
        %s404 = vtos %v403
        %p405 = scmp.gt.f32.partialorder %s404, 0.0
        %s406 = smin.f32 %s404, 0.5
        %s407 = scalar_select %p405, %s406, 0.5
        %p408 = scmp.gt.s32.totalorder %s169, 4
        %s409 = scalar_select %p408, %s407, inf
        %v410 = vstv %s409
        %vm411 = vcmp.ge.f32.partialorder %v395, %v410
        %vm412 = vmor %vm363, %vm411
        %s413 = sadd.s32 %s168, 20
        %s414 = sld [smem:[#allocation4 + %s413]]
        %s415 = sadd.s32 %s168, 21
        %s416 = sld [smem:[#allocation4 + %s415]]
        %s417 = sadd.s32 %s168, 22
        %s418 = sld [smem:[#allocation4 + %s417]]
        %s419 = sadd.s32 %s168, 23
        %s420 = sld [smem:[#allocation4 + %s419]]
        %v421 = vstv %s418
        %v422 = vmin.f32 %v158, %v421
        %v423 = vstv %s414
        %v424 = vmax.f32 %v159, %v423
        %v425 = vsub.f32 %v422, %v424
        %v426 = vmax.f32 %v425, 0.0
        %v427 = vstv %s420
        %v428 = vmin.f32 %v162, %v427
        %v429 = vstv %s416
        %v430 = vmax.f32 %v164, %v429
        %v431 = vsub.f32 %v428, %v430
        %v432 = vmax.f32 %v431, 0.0
        %v433 = vmul.f32 %v426, %v432
        %s434 = ssub.f32 %s418, %s414
        %s435 = ssub.f32 %s420, %s416
        %s436 = smul.f32 %s434, %s435
        %v437 = vstv %s436
        %v438 = vadd.f32 %v437, %v166
        %v439 = vsub.f32 %v438, %v433
        %v440 = vrcp.pop %v439
        %v441 = vmul.f32 %v439, %v440
        %v442 = vsub.f32 2.0, %v441
        %v443 = vmul.f32 %v440, %v442
        %v444 = vmul.f32 %v433, %v443
        %445 = vmax.xlane.f32.xlu0 %v444
        %v446 = vpop.xlane.xlu0 %445
        %v447 = vrot.slane %v446, 4
        %v448 = vmax.f32 %v446, %v447
        %v449 = vrot.slane %v448, 2
        %v450 = vmax.f32 %v448, %v449
        %v451 = vrot.slane %v450, 1
        %v452 = vmax.f32 %v450, %v451
        %s453 = vtos %v452
        %p454 = scmp.gt.f32.partialorder %s453, 0.0
        %s455 = smin.f32 %s453, 0.5
        %s456 = scalar_select %p454, %s455, 0.5
        %p457 = scmp.gt.s32.totalorder %s169, 5
        %s458 = scalar_select %p457, %s456, inf
        %v459 = vstv %s458
        %vm460 = vcmp.ge.f32.partialorder %v444, %v459
        %vm461 = vmor %vm412, %vm460
        %s462 = sadd.s32 %s168, 24
        %s463 = sld [smem:[#allocation4 + %s462]]
        %s464 = sadd.s32 %s168, 25
        %s465 = sld [smem:[#allocation4 + %s464]]
        %s466 = sadd.s32 %s168, 26
        %s467 = sld [smem:[#allocation4 + %s466]]
        %s468 = sadd.s32 %s168, 27
        %s469 = sld [smem:[#allocation4 + %s468]]
        %v470 = vstv %s467
        %v471 = vmin.f32 %v158, %v470
        %v472 = vstv %s463
        %v473 = vmax.f32 %v159, %v472
        %v474 = vsub.f32 %v471, %v473
        %v475 = vmax.f32 %v474, 0.0
        %v476 = vstv %s469
        %v477 = vmin.f32 %v162, %v476
        %v478 = vstv %s465
        %v479 = vmax.f32 %v164, %v478
        %v480 = vsub.f32 %v477, %v479
        %v481 = vmax.f32 %v480, 0.0
        %v482 = vmul.f32 %v475, %v481
        %s483 = ssub.f32 %s467, %s463
        %s484 = ssub.f32 %s469, %s465
        %s485 = smul.f32 %s483, %s484
        %v486 = vstv %s485
        %v487 = vadd.f32 %v486, %v166
        %v488 = vsub.f32 %v487, %v482
        %v489 = vrcp.pop %v488
        %v490 = vmul.f32 %v488, %v489
        %v491 = vsub.f32 2.0, %v490
        %v492 = vmul.f32 %v489, %v491
        %v493 = vmul.f32 %v482, %v492
        %494 = vmax.xlane.f32.xlu0 %v493
        %v495 = vpop.xlane.xlu0 %494
        %v496 = vrot.slane %v495, 4
        %v497 = vmax.f32 %v495, %v496
        %v498 = vrot.slane %v497, 2
        %v499 = vmax.f32 %v497, %v498
        %v500 = vrot.slane %v499, 1
        %v501 = vmax.f32 %v499, %v500
        %s502 = vtos %v501
        %p503 = scmp.gt.f32.partialorder %s502, 0.0
        %s504 = smin.f32 %s502, 0.5
        %s505 = scalar_select %p503, %s504, 0.5
        %p506 = scmp.gt.s32.totalorder %s169, 6
        %s507 = scalar_select %p506, %s505, inf
        %v508 = vstv %s507
        %vm509 = vcmp.ge.f32.partialorder %v493, %v508
        %vm510 = vmor %vm461, %vm509
        %s511 = sadd.s32 %s168, 28
        %s512 = sld [smem:[#allocation4 + %s511]]
        %s513 = sadd.s32 %s168, 29
        %s514 = sld [smem:[#allocation4 + %s513]]
        %s515 = sadd.s32 %s168, 30
        %s516 = sld [smem:[#allocation4 + %s515]]
        %s517 = sadd.s32 %s168, 31
        %s518 = sld [smem:[#allocation4 + %s517]]
        %v519 = vstv %s516
        %v520 = vmin.f32 %v158, %v519
        %v521 = vstv %s512
        %v522 = vmax.f32 %v159, %v521
        %v523 = vsub.f32 %v520, %v522
        %v524 = vmax.f32 %v523, 0.0
        %v525 = vstv %s518
        %v526 = vmin.f32 %v162, %v525
        %v527 = vstv %s514
        %v528 = vmax.f32 %v164, %v527
        %v529 = vsub.f32 %v526, %v528
        %v530 = vmax.f32 %v529, 0.0
        %v531 = vmul.f32 %v524, %v530
        %s532 = ssub.f32 %s516, %s512
        %s533 = ssub.f32 %s518, %s514
        %s534 = smul.f32 %s532, %s533
        %v535 = vstv %s534
        %v536 = vadd.f32 %v535, %v166
        %v537 = vsub.f32 %v536, %v531
        %v538 = vrcp.pop %v537
        %v539 = vmul.f32 %v537, %v538
        %v540 = vsub.f32 2.0, %v539
        %v541 = vmul.f32 %v538, %v540
        %v542 = vmul.f32 %v531, %v541
        %543 = vmax.xlane.f32.xlu0 %v542
        %v544 = vpop.xlane.xlu0 %543
        %v545 = vrot.slane %v544, 4
        %v546 = vmax.f32 %v544, %v545
        %v547 = vrot.slane %v546, 2
        %v548 = vmax.f32 %v546, %v547
        %v549 = vrot.slane %v548, 1
        %v550 = vmax.f32 %v548, %v549
        %s551 = vtos %v550
        %p552 = scmp.gt.f32.partialorder %s551, 0.0
        %s553 = smin.f32 %s551, 0.5
        %s554 = scalar_select %p552, %s553, 0.5
        %p555 = scmp.gt.s32.totalorder %s169, 7
        %s556 = scalar_select %p555, %s554, inf
        %v557 = vstv %s556
        %vm558 = vcmp.ge.f32.partialorder %v542, %v557
        %vm559 = vmor %vm510, %vm558
        %v560 = vsel %vm559, 1, 0
        %561 = vst [vmem:[%s155] sm:$0xff] %v560
        %s562 = sadd.s32 %s167, 1
        %s563 = smul.u32 %s562, 32
        %s564 = sld [smem:[#allocation3 + %s562]]
        %s565 = sld [smem:[#allocation4 + %s563]]
        %s566 = sadd.s32 %s563, 1
        %s567 = sld [smem:[#allocation4 + %s566]]
        %s568 = sadd.s32 %s563, 2
        %s569 = sld [smem:[#allocation4 + %s568]]
        %s570 = sadd.s32 %s563, 3
        %s571 = sld [smem:[#allocation4 + %s570]]
        %v572 = vld [vmem:[#allocation8] sm:$0xff]
        %v573 = vld [vmem:[%s163] sm:$0xff]
        %v574 = vld [vmem:[%s157] sm:$0xff]
        %v575 = vld [vmem:[%s161] sm:$0xff]
        %v576 = vstv %s569
        %v577 = vmin.f32 %v574, %v576
        %v578 = vstv %s565
        %v579 = vmax.f32 %v572, %v578
        %v580 = vsub.f32 %v577, %v579
        %v581 = vmax.f32 %v580, 0.0
        %v582 = vstv %s571
        %v583 = vmin.f32 %v575, %v582
        %v584 = vstv %s567
        %v585 = vmax.f32 %v573, %v584
        %v586 = vsub.f32 %v583, %v585
        %v587 = vmax.f32 %v586, 0.0
        %v588 = vmul.f32 %v581, %v587
        %s589 = ssub.f32 %s569, %s565
        %s590 = ssub.f32 %s571, %s567
        %s591 = smul.f32 %s589, %s590
        %v592 = vstv %s591
        %v593 = vadd.f32 %v592, %v166
        %v594 = vsub.f32 %v593, %v588
        %v595 = vrcp.pop %v594
        %v596 = vmul.f32 %v594, %v595
        %v597 = vsub.f32 2.0, %v596
        %v598 = vmul.f32 %v595, %v597
        %v599 = vmul.f32 %v588, %v598
        %600 = vmax.xlane.f32.xlu0 %v599
        %v601 = vpop.xlane.xlu0 %600
        %v602 = vrot.slane %v601, 4
        %v603 = vmax.f32 %v601, %v602
        %v604 = vrot.slane %v603, 2
        %v605 = vmax.f32 %v603, %v604
        %v606 = vrot.slane %v605, 1
        %v607 = vmax.f32 %v605, %v606
        %s608 = vtos %v607
        %p609 = scmp.gt.f32.partialorder %s608, 0.0
        %s610 = smin.f32 %s608, 0.5
        %s611 = scalar_select %p609, %s610, 0.5
        %p612 = scmp.gt.s32.totalorder %s564, 0
        %s613 = scalar_select %p612, %s611, inf
        %v614 = vstv %s613
        %vm615 = vcmp.ge.f32.partialorder %v599, %v614
        %s616 = sadd.s32 %s563, 4
        %s617 = sld [smem:[#allocation4 + %s616]]
        %s618 = sadd.s32 %s563, 5
        %s619 = sld [smem:[#allocation4 + %s618]]
        %s620 = sadd.s32 %s563, 6
        %s621 = sld [smem:[#allocation4 + %s620]]
        %s622 = sadd.s32 %s563, 7
        %s623 = sld [smem:[#allocation4 + %s622]]
        %v624 = vstv %s621
        %v625 = vmin.f32 %v574, %v624
        %v626 = vstv %s617
        %v627 = vmax.f32 %v572, %v626
        %v628 = vsub.f32 %v625, %v627
        %v629 = vmax.f32 %v628, 0.0
        %v630 = vstv %s623
        %v631 = vmin.f32 %v575, %v630
        %v632 = vstv %s619
        %v633 = vmax.f32 %v573, %v632
        %v634 = vsub.f32 %v631, %v633
        %v635 = vmax.f32 %v634, 0.0
        %v636 = vmul.f32 %v629, %v635
        %s637 = ssub.f32 %s621, %s617
        %s638 = ssub.f32 %s623, %s619
        %s639 = smul.f32 %s637, %s638
        %v640 = vstv %s639
        %v641 = vadd.f32 %v640, %v166
        %v642 = vsub.f32 %v641, %v636
        %v643 = vrcp.pop %v642
        %v644 = vmul.f32 %v642, %v643
        %v645 = vsub.f32 2.0, %v644
        %v646 = vmul.f32 %v643, %v645
        %v647 = vmul.f32 %v636, %v646
        %648 = vmax.xlane.f32.xlu0 %v647
        %v649 = vpop.xlane.xlu0 %648
        %v650 = vrot.slane %v649, 4
        %v651 = vmax.f32 %v649, %v650
        %v652 = vrot.slane %v651, 2
        %v653 = vmax.f32 %v651, %v652
        %v654 = vrot.slane %v653, 1
        %v655 = vmax.f32 %v653, %v654
        %s656 = vtos %v655
        %p657 = scmp.gt.f32.partialorder %s656, 0.0
        %s658 = smin.f32 %s656, 0.5
        %s659 = scalar_select %p657, %s658, 0.5
        %p660 = scmp.gt.s32.totalorder %s564, 1
        %s661 = scalar_select %p660, %s659, inf
        %v662 = vstv %s661
        %vm663 = vcmp.ge.f32.partialorder %v647, %v662
        %vm664 = vmor %vm615, %vm663
        %s665 = sadd.s32 %s563, 8
        %s666 = sld [smem:[#allocation4 + %s665]]
        %s667 = sadd.s32 %s563, 9
        %s668 = sld [smem:[#allocation4 + %s667]]
        %s669 = sadd.s32 %s563, 10
        %s670 = sld [smem:[#allocation4 + %s669]]
        %s671 = sadd.s32 %s563, 11
        %s672 = sld [smem:[#allocation4 + %s671]]
        %v673 = vstv %s670
        %v674 = vmin.f32 %v574, %v673
        %v675 = vstv %s666
        %v676 = vmax.f32 %v572, %v675
        %v677 = vsub.f32 %v674, %v676
        %v678 = vmax.f32 %v677, 0.0
        %v679 = vstv %s672
        %v680 = vmin.f32 %v575, %v679
        %v681 = vstv %s668
        %v682 = vmax.f32 %v573, %v681
        %v683 = vsub.f32 %v680, %v682
        %v684 = vmax.f32 %v683, 0.0
        %v685 = vmul.f32 %v678, %v684
        %s686 = ssub.f32 %s670, %s666
        %s687 = ssub.f32 %s672, %s668
        %s688 = smul.f32 %s686, %s687
        %v689 = vstv %s688
        %v690 = vadd.f32 %v689, %v166
        %v691 = vsub.f32 %v690, %v685
        %v692 = vrcp.pop %v691
        %v693 = vmul.f32 %v691, %v692
        %v694 = vsub.f32 2.0, %v693
        %v695 = vmul.f32 %v692, %v694
        %v696 = vmul.f32 %v685, %v695
        %697 = vmax.xlane.f32.xlu0 %v696
        %v698 = vpop.xlane.xlu0 %697
        %v699 = vrot.slane %v698, 4
        %v700 = vmax.f32 %v698, %v699
        %v701 = vrot.slane %v700, 2
        %v702 = vmax.f32 %v700, %v701
        %v703 = vrot.slane %v702, 1
        %v704 = vmax.f32 %v702, %v703
        %s705 = vtos %v704
        %p706 = scmp.gt.f32.partialorder %s705, 0.0
        %s707 = smin.f32 %s705, 0.5
        %s708 = scalar_select %p706, %s707, 0.5
        %p709 = scmp.gt.s32.totalorder %s564, 2
        %s710 = scalar_select %p709, %s708, inf
        %v711 = vstv %s710
        %vm712 = vcmp.ge.f32.partialorder %v696, %v711
        %vm713 = vmor %vm664, %vm712
        %s714 = sadd.s32 %s563, 12
        %s715 = sld [smem:[#allocation4 + %s714]]
        %s716 = sadd.s32 %s563, 13
        %s717 = sld [smem:[#allocation4 + %s716]]
        %s718 = sadd.s32 %s563, 14
        %s719 = sld [smem:[#allocation4 + %s718]]
        %s720 = sadd.s32 %s563, 15
        %s721 = sld [smem:[#allocation4 + %s720]]
        %v722 = vstv %s719
        %v723 = vmin.f32 %v574, %v722
        %v724 = vstv %s715
        %v725 = vmax.f32 %v572, %v724
        %v726 = vsub.f32 %v723, %v725
        %v727 = vmax.f32 %v726, 0.0
        %v728 = vstv %s721
        %v729 = vmin.f32 %v575, %v728
        %v730 = vstv %s717
        %v731 = vmax.f32 %v573, %v730
        %v732 = vsub.f32 %v729, %v731
        %v733 = vmax.f32 %v732, 0.0
        %v734 = vmul.f32 %v727, %v733
        %s735 = ssub.f32 %s719, %s715
        %s736 = ssub.f32 %s721, %s717
        %s737 = smul.f32 %s735, %s736
        %v738 = vstv %s737
        %v739 = vadd.f32 %v738, %v166
        %v740 = vsub.f32 %v739, %v734
        %v741 = vrcp.pop %v740
        %v742 = vmul.f32 %v740, %v741
        %v743 = vsub.f32 2.0, %v742
        %v744 = vmul.f32 %v741, %v743
        %v745 = vmul.f32 %v734, %v744
        %746 = vmax.xlane.f32.xlu0 %v745
        %v747 = vpop.xlane.xlu0 %746
        %v748 = vrot.slane %v747, 4
        %v749 = vmax.f32 %v747, %v748
        %v750 = vrot.slane %v749, 2
        %v751 = vmax.f32 %v749, %v750
        %v752 = vrot.slane %v751, 1
        %v753 = vmax.f32 %v751, %v752
        %s754 = vtos %v753
        %p755 = scmp.gt.f32.partialorder %s754, 0.0
        %s756 = smin.f32 %s754, 0.5
        %s757 = scalar_select %p755, %s756, 0.5
        %p758 = scmp.gt.s32.totalorder %s564, 3
        %s759 = scalar_select %p758, %s757, inf
        %v760 = vstv %s759
        %vm761 = vcmp.ge.f32.partialorder %v745, %v760
        %vm762 = vmor %vm713, %vm761
        %s763 = sadd.s32 %s563, 16
        %s764 = sld [smem:[#allocation4 + %s763]]
        %s765 = sadd.s32 %s563, 17
        %s766 = sld [smem:[#allocation4 + %s765]]
        %s767 = sadd.s32 %s563, 18
        %s768 = sld [smem:[#allocation4 + %s767]]
        %s769 = sadd.s32 %s563, 19
        %s770 = sld [smem:[#allocation4 + %s769]]
        %v771 = vstv %s768
        %v772 = vmin.f32 %v574, %v771
        %v773 = vstv %s764
        %v774 = vmax.f32 %v572, %v773
        %v775 = vsub.f32 %v772, %v774
        %v776 = vmax.f32 %v775, 0.0
        %v777 = vstv %s770
        %v778 = vmin.f32 %v575, %v777
        %v779 = vstv %s766
        %v780 = vmax.f32 %v573, %v779
        %v781 = vsub.f32 %v778, %v780
        %v782 = vmax.f32 %v781, 0.0
        %v783 = vmul.f32 %v776, %v782
        %s784 = ssub.f32 %s768, %s764
        %s785 = ssub.f32 %s770, %s766
        %s786 = smul.f32 %s784, %s785
        %v787 = vstv %s786
        %v788 = vadd.f32 %v787, %v166
        %v789 = vsub.f32 %v788, %v783
        %v790 = vrcp.pop %v789
        %v791 = vmul.f32 %v789, %v790
        %v792 = vsub.f32 2.0, %v791
        %v793 = vmul.f32 %v790, %v792
        %v794 = vmul.f32 %v783, %v793
        %795 = vmax.xlane.f32.xlu0 %v794
        %v796 = vpop.xlane.xlu0 %795
        %v797 = vrot.slane %v796, 4
        %v798 = vmax.f32 %v796, %v797
        %v799 = vrot.slane %v798, 2
        %v800 = vmax.f32 %v798, %v799
        %v801 = vrot.slane %v800, 1
        %v802 = vmax.f32 %v800, %v801
        %s803 = vtos %v802
        %p804 = scmp.gt.f32.partialorder %s803, 0.0
        %s805 = smin.f32 %s803, 0.5
        %s806 = scalar_select %p804, %s805, 0.5
        %p807 = scmp.gt.s32.totalorder %s564, 4
        %s808 = scalar_select %p807, %s806, inf
        %v809 = vstv %s808
        %vm810 = vcmp.ge.f32.partialorder %v794, %v809
        %vm811 = vmor %vm762, %vm810
        %s812 = sadd.s32 %s563, 20
        %s813 = sld [smem:[#allocation4 + %s812]]
        %s814 = sadd.s32 %s563, 21
        %s815 = sld [smem:[#allocation4 + %s814]]
        %s816 = sadd.s32 %s563, 22
        %s817 = sld [smem:[#allocation4 + %s816]]
        %s818 = sadd.s32 %s563, 23
        %s819 = sld [smem:[#allocation4 + %s818]]
        %v820 = vstv %s817
        %v821 = vmin.f32 %v574, %v820
        %v822 = vstv %s813
        %v823 = vmax.f32 %v572, %v822
        %v824 = vsub.f32 %v821, %v823
        %v825 = vmax.f32 %v824, 0.0
        %v826 = vstv %s819
        %v827 = vmin.f32 %v575, %v826
        %v828 = vstv %s815
        %v829 = vmax.f32 %v573, %v828
        %v830 = vsub.f32 %v827, %v829
        %v831 = vmax.f32 %v830, 0.0
        %v832 = vmul.f32 %v825, %v831
        %s833 = ssub.f32 %s817, %s813
        %s834 = ssub.f32 %s819, %s815
        %s835 = smul.f32 %s833, %s834
        %v836 = vstv %s835
        %v837 = vadd.f32 %v836, %v166
        %v838 = vsub.f32 %v837, %v832
        %v839 = vrcp.pop %v838
        %v840 = vmul.f32 %v838, %v839
        %v841 = vsub.f32 2.0, %v840
        %v842 = vmul.f32 %v839, %v841
        %v843 = vmul.f32 %v832, %v842
        %844 = vmax.xlane.f32.xlu0 %v843
        %v845 = vpop.xlane.xlu0 %844
        %v846 = vrot.slane %v845, 4
        %v847 = vmax.f32 %v845, %v846
        %v848 = vrot.slane %v847, 2
        %v849 = vmax.f32 %v847, %v848
        %v850 = vrot.slane %v849, 1
        %v851 = vmax.f32 %v849, %v850
        %s852 = vtos %v851
        %p853 = scmp.gt.f32.partialorder %s852, 0.0
        %s854 = smin.f32 %s852, 0.5
        %s855 = scalar_select %p853, %s854, 0.5
        %p856 = scmp.gt.s32.totalorder %s564, 5
        %s857 = scalar_select %p856, %s855, inf
        %v858 = vstv %s857
        %vm859 = vcmp.ge.f32.partialorder %v843, %v858
        %vm860 = vmor %vm811, %vm859
        %s861 = sadd.s32 %s563, 24
        %s862 = sld [smem:[#allocation4 + %s861]]
        %s863 = sadd.s32 %s563, 25
        %s864 = sld [smem:[#allocation4 + %s863]]
        %s865 = sadd.s32 %s563, 26
        %s866 = sld [smem:[#allocation4 + %s865]]
        %s867 = sadd.s32 %s563, 27
        %s868 = sld [smem:[#allocation4 + %s867]]
        %v869 = vstv %s866
        %v870 = vmin.f32 %v574, %v869
        %v871 = vstv %s862
        %v872 = vmax.f32 %v572, %v871
        %v873 = vsub.f32 %v870, %v872
        %v874 = vmax.f32 %v873, 0.0
        %v875 = vstv %s868
        %v876 = vmin.f32 %v575, %v875
        %v877 = vstv %s864
        %v878 = vmax.f32 %v573, %v877
        %v879 = vsub.f32 %v876, %v878
        %v880 = vmax.f32 %v879, 0.0
        %v881 = vmul.f32 %v874, %v880
        %s882 = ssub.f32 %s866, %s862
        %s883 = ssub.f32 %s868, %s864
        %s884 = smul.f32 %s882, %s883
        %v885 = vstv %s884
        %v886 = vadd.f32 %v885, %v166
        %v887 = vsub.f32 %v886, %v881
        %v888 = vrcp.pop %v887
        %v889 = vmul.f32 %v887, %v888
        %v890 = vsub.f32 2.0, %v889
        %v891 = vmul.f32 %v888, %v890
        %v892 = vmul.f32 %v881, %v891
        %893 = vmax.xlane.f32.xlu0 %v892
        %v894 = vpop.xlane.xlu0 %893
        %v895 = vrot.slane %v894, 4
        %v896 = vmax.f32 %v894, %v895
        %v897 = vrot.slane %v896, 2
        %v898 = vmax.f32 %v896, %v897
        %v899 = vrot.slane %v898, 1
        %v900 = vmax.f32 %v898, %v899
        %s901 = vtos %v900
        %p902 = scmp.gt.f32.partialorder %s901, 0.0
        %s903 = smin.f32 %s901, 0.5
        %s904 = scalar_select %p902, %s903, 0.5
        %p905 = scmp.gt.s32.totalorder %s564, 6
        %s906 = scalar_select %p905, %s904, inf
        %v907 = vstv %s906
        %vm908 = vcmp.ge.f32.partialorder %v892, %v907
        %vm909 = vmor %vm860, %vm908
        %s910 = sadd.s32 %s563, 28
        %s911 = sld [smem:[#allocation4 + %s910]]
        %s912 = sadd.s32 %s563, 29
        %s913 = sld [smem:[#allocation4 + %s912]]
        %s914 = sadd.s32 %s563, 30
        %s915 = sld [smem:[#allocation4 + %s914]]
        %s916 = sadd.s32 %s563, 31
        %s917 = sld [smem:[#allocation4 + %s916]]
        %v918 = vstv %s915
        %v919 = vmin.f32 %v574, %v918
        %v920 = vstv %s911
        %v921 = vmax.f32 %v572, %v920
        %v922 = vsub.f32 %v919, %v921
        %v923 = vmax.f32 %v922, 0.0
        %v924 = vstv %s917
        %v925 = vmin.f32 %v575, %v924
        %v926 = vstv %s913
        %v927 = vmax.f32 %v573, %v926
        %v928 = vsub.f32 %v925, %v927
        %v929 = vmax.f32 %v928, 0.0
        %v930 = vmul.f32 %v923, %v929
        %s931 = ssub.f32 %s915, %s911
        %s932 = ssub.f32 %s917, %s913
        %s933 = smul.f32 %s931, %s932
        %v934 = vstv %s933
        %v935 = vadd.f32 %v934, %v166
        %v936 = vsub.f32 %v935, %v930
        %v937 = vrcp.pop %v936
        %v938 = vmul.f32 %v936, %v937
        %v939 = vsub.f32 2.0, %v938
        %v940 = vmul.f32 %v937, %v939
        %v941 = vmul.f32 %v930, %v940
        %942 = vmax.xlane.f32.xlu0 %v941
        %v943 = vpop.xlane.xlu0 %942
        %v944 = vrot.slane %v943, 4
        %v945 = vmax.f32 %v943, %v944
        %v946 = vrot.slane %v945, 2
        %v947 = vmax.f32 %v945, %v946
        %v948 = vrot.slane %v947, 1
        %v949 = vmax.f32 %v947, %v948
        %s950 = vtos %v949
        %p951 = scmp.gt.f32.partialorder %s950, 0.0
        %s952 = smin.f32 %s950, 0.5
        %s953 = scalar_select %p951, %s952, 0.5
        %p954 = scmp.gt.s32.totalorder %s564, 7
        %s955 = scalar_select %p954, %s953, inf
        %v956 = vstv %s955
        %vm957 = vcmp.ge.f32.partialorder %v941, %v956
        %vm958 = vmor %vm909, %vm957
        %v959 = vsel %vm958, 1, 0
        %s960 = scalar_lea.vmem %s155, 8 [#allocation9]
        %961 = vst [vmem:[%s960] sm:$0xff] %v959
        %s962 = sadd.s32 %s167, 2
        %s963 = smul.u32 %s962, 32
        %s964 = sld [smem:[#allocation3 + %s962]]
        %s965 = sld [smem:[#allocation4 + %s963]]
        %s966 = sadd.s32 %s963, 1
        %s967 = sld [smem:[#allocation4 + %s966]]
        %s968 = sadd.s32 %s963, 2
        %s969 = sld [smem:[#allocation4 + %s968]]
        %s970 = sadd.s32 %s963, 3
        %s971 = sld [smem:[#allocation4 + %s970]]
        %v972 = vld [vmem:[#allocation8] sm:$0xff]
        %v973 = vld [vmem:[%s163] sm:$0xff]
        %v974 = vld [vmem:[%s157] sm:$0xff]
        %v975 = vld [vmem:[%s161] sm:$0xff]
        %v976 = vstv %s969
        %v977 = vmin.f32 %v974, %v976
        %v978 = vstv %s965
        %v979 = vmax.f32 %v972, %v978
        %v980 = vsub.f32 %v977, %v979
        %v981 = vmax.f32 %v980, 0.0
        %v982 = vstv %s971
        %v983 = vmin.f32 %v975, %v982
        %v984 = vstv %s967
        %v985 = vmax.f32 %v973, %v984
        %v986 = vsub.f32 %v983, %v985
        %v987 = vmax.f32 %v986, 0.0
        %v988 = vmul.f32 %v981, %v987
        %s989 = ssub.f32 %s969, %s965
        %s990 = ssub.f32 %s971, %s967
        %s991 = smul.f32 %s989, %s990
        %v992 = vstv %s991
        %v993 = vadd.f32 %v992, %v166
        %v994 = vsub.f32 %v993, %v988
        %v995 = vrcp.pop %v994
        %v996 = vmul.f32 %v994, %v995
        %v997 = vsub.f32 2.0, %v996
        %v998 = vmul.f32 %v995, %v997
        %v999 = vmul.f32 %v988, %v998
        %1000 = vmax.xlane.f32.xlu0 %v999
        %v1001 = vpop.xlane.xlu0 %1000
        %v1002 = vrot.slane %v1001, 4
        %v1003 = vmax.f32 %v1001, %v1002
        %v1004 = vrot.slane %v1003, 2
        %v1005 = vmax.f32 %v1003, %v1004
        %v1006 = vrot.slane %v1005, 1
        %v1007 = vmax.f32 %v1005, %v1006
        %s1008 = vtos %v1007
        %p1009 = scmp.gt.f32.partialorder %s1008, 0.0
        %s1010 = smin.f32 %s1008, 0.5
        %s1011 = scalar_select %p1009, %s1010, 0.5
        %p1012 = scmp.gt.s32.totalorder %s964, 0
        %s1013 = scalar_select %p1012, %s1011, inf
        %v1014 = vstv %s1013
        %vm1015 = vcmp.ge.f32.partialorder %v999, %v1014
        %s1016 = sadd.s32 %s963, 4
        %s1017 = sld [smem:[#allocation4 + %s1016]]
        %s1018 = sadd.s32 %s963, 5
        %s1019 = sld [smem:[#allocation4 + %s1018]]
        %s1020 = sadd.s32 %s963, 6
        %s1021 = sld [smem:[#allocation4 + %s1020]]
        %s1022 = sadd.s32 %s963, 7
        %s1023 = sld [smem:[#allocation4 + %s1022]]
        %v1024 = vstv %s1021
        %v1025 = vmin.f32 %v974, %v1024
        %v1026 = vstv %s1017
        %v1027 = vmax.f32 %v972, %v1026
        %v1028 = vsub.f32 %v1025, %v1027
        %v1029 = vmax.f32 %v1028, 0.0
        %v1030 = vstv %s1023
        %v1031 = vmin.f32 %v975, %v1030
        %v1032 = vstv %s1019
        %v1033 = vmax.f32 %v973, %v1032
        %v1034 = vsub.f32 %v1031, %v1033
        %v1035 = vmax.f32 %v1034, 0.0
        %v1036 = vmul.f32 %v1029, %v1035
        %s1037 = ssub.f32 %s1021, %s1017
        %s1038 = ssub.f32 %s1023, %s1019
        %s1039 = smul.f32 %s1037, %s1038
        %v1040 = vstv %s1039
        %v1041 = vadd.f32 %v1040, %v166
        %v1042 = vsub.f32 %v1041, %v1036
        %v1043 = vrcp.pop %v1042
        %v1044 = vmul.f32 %v1042, %v1043
        %v1045 = vsub.f32 2.0, %v1044
        %v1046 = vmul.f32 %v1043, %v1045
        %v1047 = vmul.f32 %v1036, %v1046
        %1048 = vmax.xlane.f32.xlu0 %v1047
        %v1049 = vpop.xlane.xlu0 %1048
        %v1050 = vrot.slane %v1049, 4
        %v1051 = vmax.f32 %v1049, %v1050
        %v1052 = vrot.slane %v1051, 2
        %v1053 = vmax.f32 %v1051, %v1052
        %v1054 = vrot.slane %v1053, 1
        %v1055 = vmax.f32 %v1053, %v1054
        %s1056 = vtos %v1055
        %p1057 = scmp.gt.f32.partialorder %s1056, 0.0
        %s1058 = smin.f32 %s1056, 0.5
        %s1059 = scalar_select %p1057, %s1058, 0.5
        %p1060 = scmp.gt.s32.totalorder %s964, 1
        %s1061 = scalar_select %p1060, %s1059, inf
        %v1062 = vstv %s1061
        %vm1063 = vcmp.ge.f32.partialorder %v1047, %v1062
        %vm1064 = vmor %vm1015, %vm1063
        %s1065 = sadd.s32 %s963, 8
        %s1066 = sld [smem:[#allocation4 + %s1065]]
        %s1067 = sadd.s32 %s963, 9
        %s1068 = sld [smem:[#allocation4 + %s1067]]
        %s1069 = sadd.s32 %s963, 10
        %s1070 = sld [smem:[#allocation4 + %s1069]]
        %s1071 = sadd.s32 %s963, 11
        %s1072 = sld [smem:[#allocation4 + %s1071]]
        %v1073 = vstv %s1070
        %v1074 = vmin.f32 %v974, %v1073
        %v1075 = vstv %s1066
        %v1076 = vmax.f32 %v972, %v1075
        %v1077 = vsub.f32 %v1074, %v1076
        %v1078 = vmax.f32 %v1077, 0.0
        %v1079 = vstv %s1072
        %v1080 = vmin.f32 %v975, %v1079
        %v1081 = vstv %s1068
        %v1082 = vmax.f32 %v973, %v1081
        %v1083 = vsub.f32 %v1080, %v1082
        %v1084 = vmax.f32 %v1083, 0.0
        %v1085 = vmul.f32 %v1078, %v1084
        %s1086 = ssub.f32 %s1070, %s1066
        %s1087 = ssub.f32 %s1072, %s1068
        %s1088 = smul.f32 %s1086, %s1087
        %v1089 = vstv %s1088
        %v1090 = vadd.f32 %v1089, %v166
        %v1091 = vsub.f32 %v1090, %v1085
        %v1092 = vrcp.pop %v1091
        %v1093 = vmul.f32 %v1091, %v1092
        %v1094 = vsub.f32 2.0, %v1093
        %v1095 = vmul.f32 %v1092, %v1094
        %v1096 = vmul.f32 %v1085, %v1095
        %1097 = vmax.xlane.f32.xlu0 %v1096
        %v1098 = vpop.xlane.xlu0 %1097
        %v1099 = vrot.slane %v1098, 4
        %v1100 = vmax.f32 %v1098, %v1099
        %v1101 = vrot.slane %v1100, 2
        %v1102 = vmax.f32 %v1100, %v1101
        %v1103 = vrot.slane %v1102, 1
        %v1104 = vmax.f32 %v1102, %v1103
        %s1105 = vtos %v1104
        %p1106 = scmp.gt.f32.partialorder %s1105, 0.0
        %s1107 = smin.f32 %s1105, 0.5
        %s1108 = scalar_select %p1106, %s1107, 0.5
        %p1109 = scmp.gt.s32.totalorder %s964, 2
        %s1110 = scalar_select %p1109, %s1108, inf
        %v1111 = vstv %s1110
        %vm1112 = vcmp.ge.f32.partialorder %v1096, %v1111
        %vm1113 = vmor %vm1064, %vm1112
        %s1114 = sadd.s32 %s963, 12
        %s1115 = sld [smem:[#allocation4 + %s1114]]
        %s1116 = sadd.s32 %s963, 13
        %s1117 = sld [smem:[#allocation4 + %s1116]]
        %s1118 = sadd.s32 %s963, 14
        %s1119 = sld [smem:[#allocation4 + %s1118]]
        %s1120 = sadd.s32 %s963, 15
        %s1121 = sld [smem:[#allocation4 + %s1120]]
        %v1122 = vstv %s1119
        %v1123 = vmin.f32 %v974, %v1122
        %v1124 = vstv %s1115
        %v1125 = vmax.f32 %v972, %v1124
        %v1126 = vsub.f32 %v1123, %v1125
        %v1127 = vmax.f32 %v1126, 0.0
        %v1128 = vstv %s1121
        %v1129 = vmin.f32 %v975, %v1128
        %v1130 = vstv %s1117
        %v1131 = vmax.f32 %v973, %v1130
        %v1132 = vsub.f32 %v1129, %v1131
        %v1133 = vmax.f32 %v1132, 0.0
        %v1134 = vmul.f32 %v1127, %v1133
        %s1135 = ssub.f32 %s1119, %s1115
        %s1136 = ssub.f32 %s1121, %s1117
        %s1137 = smul.f32 %s1135, %s1136
        %v1138 = vstv %s1137
        %v1139 = vadd.f32 %v1138, %v166
        %v1140 = vsub.f32 %v1139, %v1134
        %v1141 = vrcp.pop %v1140
        %v1142 = vmul.f32 %v1140, %v1141
        %v1143 = vsub.f32 2.0, %v1142
        %v1144 = vmul.f32 %v1141, %v1143
        %v1145 = vmul.f32 %v1134, %v1144
        %1146 = vmax.xlane.f32.xlu0 %v1145
        %v1147 = vpop.xlane.xlu0 %1146
        %v1148 = vrot.slane %v1147, 4
        %v1149 = vmax.f32 %v1147, %v1148
        %v1150 = vrot.slane %v1149, 2
        %v1151 = vmax.f32 %v1149, %v1150
        %v1152 = vrot.slane %v1151, 1
        %v1153 = vmax.f32 %v1151, %v1152
        %s1154 = vtos %v1153
        %p1155 = scmp.gt.f32.partialorder %s1154, 0.0
        %s1156 = smin.f32 %s1154, 0.5
        %s1157 = scalar_select %p1155, %s1156, 0.5
        %p1158 = scmp.gt.s32.totalorder %s964, 3
        %s1159 = scalar_select %p1158, %s1157, inf
        %v1160 = vstv %s1159
        %vm1161 = vcmp.ge.f32.partialorder %v1145, %v1160
        %vm1162 = vmor %vm1113, %vm1161
        %s1163 = sadd.s32 %s963, 16
        %s1164 = sld [smem:[#allocation4 + %s1163]]
        %s1165 = sadd.s32 %s963, 17
        %s1166 = sld [smem:[#allocation4 + %s1165]]
        %s1167 = sadd.s32 %s963, 18
        %s1168 = sld [smem:[#allocation4 + %s1167]]
        %s1169 = sadd.s32 %s963, 19
        %s1170 = sld [smem:[#allocation4 + %s1169]]
        %v1171 = vstv %s1168
        %v1172 = vmin.f32 %v974, %v1171
        %v1173 = vstv %s1164
        %v1174 = vmax.f32 %v972, %v1173
        %v1175 = vsub.f32 %v1172, %v1174
        %v1176 = vmax.f32 %v1175, 0.0
        %v1177 = vstv %s1170
        %v1178 = vmin.f32 %v975, %v1177
        %v1179 = vstv %s1166
        %v1180 = vmax.f32 %v973, %v1179
        %v1181 = vsub.f32 %v1178, %v1180
        %v1182 = vmax.f32 %v1181, 0.0
        %v1183 = vmul.f32 %v1176, %v1182
        %s1184 = ssub.f32 %s1168, %s1164
        %s1185 = ssub.f32 %s1170, %s1166
        %s1186 = smul.f32 %s1184, %s1185
        %v1187 = vstv %s1186
        %v1188 = vadd.f32 %v1187, %v166
        %v1189 = vsub.f32 %v1188, %v1183
        %v1190 = vrcp.pop %v1189
        %v1191 = vmul.f32 %v1189, %v1190
        %v1192 = vsub.f32 2.0, %v1191
        %v1193 = vmul.f32 %v1190, %v1192
        %v1194 = vmul.f32 %v1183, %v1193
        %1195 = vmax.xlane.f32.xlu0 %v1194
        %v1196 = vpop.xlane.xlu0 %1195
        %v1197 = vrot.slane %v1196, 4
        %v1198 = vmax.f32 %v1196, %v1197
        %v1199 = vrot.slane %v1198, 2
        %v1200 = vmax.f32 %v1198, %v1199
        %v1201 = vrot.slane %v1200, 1
        %v1202 = vmax.f32 %v1200, %v1201
        %s1203 = vtos %v1202
        %p1204 = scmp.gt.f32.partialorder %s1203, 0.0
        %s1205 = smin.f32 %s1203, 0.5
        %s1206 = scalar_select %p1204, %s1205, 0.5
        %p1207 = scmp.gt.s32.totalorder %s964, 4
        %s1208 = scalar_select %p1207, %s1206, inf
        %v1209 = vstv %s1208
        %vm1210 = vcmp.ge.f32.partialorder %v1194, %v1209
        %vm1211 = vmor %vm1162, %vm1210
        %s1212 = sadd.s32 %s963, 20
        %s1213 = sld [smem:[#allocation4 + %s1212]]
        %s1214 = sadd.s32 %s963, 21
        %s1215 = sld [smem:[#allocation4 + %s1214]]
        %s1216 = sadd.s32 %s963, 22
        %s1217 = sld [smem:[#allocation4 + %s1216]]
        %s1218 = sadd.s32 %s963, 23
        %s1219 = sld [smem:[#allocation4 + %s1218]]
        %v1220 = vstv %s1217
        %v1221 = vmin.f32 %v974, %v1220
        %v1222 = vstv %s1213
        %v1223 = vmax.f32 %v972, %v1222
        %v1224 = vsub.f32 %v1221, %v1223
        %v1225 = vmax.f32 %v1224, 0.0
        %v1226 = vstv %s1219
        %v1227 = vmin.f32 %v975, %v1226
        %v1228 = vstv %s1215
        %v1229 = vmax.f32 %v973, %v1228
        %v1230 = vsub.f32 %v1227, %v1229
        %v1231 = vmax.f32 %v1230, 0.0
        %v1232 = vmul.f32 %v1225, %v1231
        %s1233 = ssub.f32 %s1217, %s1213
        %s1234 = ssub.f32 %s1219, %s1215
        %s1235 = smul.f32 %s1233, %s1234
        %v1236 = vstv %s1235
        %v1237 = vadd.f32 %v1236, %v166
        %v1238 = vsub.f32 %v1237, %v1232
        %v1239 = vrcp.pop %v1238
        %v1240 = vmul.f32 %v1238, %v1239
        %v1241 = vsub.f32 2.0, %v1240
        %v1242 = vmul.f32 %v1239, %v1241
        %v1243 = vmul.f32 %v1232, %v1242
        %1244 = vmax.xlane.f32.xlu0 %v1243
        %v1245 = vpop.xlane.xlu0 %1244
        %v1246 = vrot.slane %v1245, 4
        %v1247 = vmax.f32 %v1245, %v1246
        %v1248 = vrot.slane %v1247, 2
        %v1249 = vmax.f32 %v1247, %v1248
        %v1250 = vrot.slane %v1249, 1
        %v1251 = vmax.f32 %v1249, %v1250
        %s1252 = vtos %v1251
        %p1253 = scmp.gt.f32.partialorder %s1252, 0.0
        %s1254 = smin.f32 %s1252, 0.5
        %s1255 = scalar_select %p1253, %s1254, 0.5
        %p1256 = scmp.gt.s32.totalorder %s964, 5
        %s1257 = scalar_select %p1256, %s1255, inf
        %v1258 = vstv %s1257
        %vm1259 = vcmp.ge.f32.partialorder %v1243, %v1258
        %vm1260 = vmor %vm1211, %vm1259
        %s1261 = sadd.s32 %s963, 24
        %s1262 = sld [smem:[#allocation4 + %s1261]]
        %s1263 = sadd.s32 %s963, 25
        %s1264 = sld [smem:[#allocation4 + %s1263]]
        %s1265 = sadd.s32 %s963, 26
        %s1266 = sld [smem:[#allocation4 + %s1265]]
        %s1267 = sadd.s32 %s963, 27
        %s1268 = sld [smem:[#allocation4 + %s1267]]
        %v1269 = vstv %s1266
        %v1270 = vmin.f32 %v974, %v1269
        %v1271 = vstv %s1262
        %v1272 = vmax.f32 %v972, %v1271
        %v1273 = vsub.f32 %v1270, %v1272
        %v1274 = vmax.f32 %v1273, 0.0
        %v1275 = vstv %s1268
        %v1276 = vmin.f32 %v975, %v1275
        %v1277 = vstv %s1264
        %v1278 = vmax.f32 %v973, %v1277
        %v1279 = vsub.f32 %v1276, %v1278
        %v1280 = vmax.f32 %v1279, 0.0
        %v1281 = vmul.f32 %v1274, %v1280
        %s1282 = ssub.f32 %s1266, %s1262
        %s1283 = ssub.f32 %s1268, %s1264
        %s1284 = smul.f32 %s1282, %s1283
        %v1285 = vstv %s1284
        %v1286 = vadd.f32 %v1285, %v166
        %v1287 = vsub.f32 %v1286, %v1281
        %v1288 = vrcp.pop %v1287
        %v1289 = vmul.f32 %v1287, %v1288
        %v1290 = vsub.f32 2.0, %v1289
        %v1291 = vmul.f32 %v1288, %v1290
        %v1292 = vmul.f32 %v1281, %v1291
        %1293 = vmax.xlane.f32.xlu0 %v1292
        %v1294 = vpop.xlane.xlu0 %1293
        %v1295 = vrot.slane %v1294, 4
        %v1296 = vmax.f32 %v1294, %v1295
        %v1297 = vrot.slane %v1296, 2
        %v1298 = vmax.f32 %v1296, %v1297
        %v1299 = vrot.slane %v1298, 1
        %v1300 = vmax.f32 %v1298, %v1299
        %s1301 = vtos %v1300
        %p1302 = scmp.gt.f32.partialorder %s1301, 0.0
        %s1303 = smin.f32 %s1301, 0.5
        %s1304 = scalar_select %p1302, %s1303, 0.5
        %p1305 = scmp.gt.s32.totalorder %s964, 6
        %s1306 = scalar_select %p1305, %s1304, inf
        %v1307 = vstv %s1306
        %vm1308 = vcmp.ge.f32.partialorder %v1292, %v1307
        %vm1309 = vmor %vm1260, %vm1308
        %s1310 = sadd.s32 %s963, 28
        %s1311 = sld [smem:[#allocation4 + %s1310]]
        %s1312 = sadd.s32 %s963, 29
        %s1313 = sld [smem:[#allocation4 + %s1312]]
        %s1314 = sadd.s32 %s963, 30
        %s1315 = sld [smem:[#allocation4 + %s1314]]
        %s1316 = sadd.s32 %s963, 31
        %s1317 = sld [smem:[#allocation4 + %s1316]]
        %v1318 = vstv %s1315
        %v1319 = vmin.f32 %v974, %v1318
        %v1320 = vstv %s1311
        %v1321 = vmax.f32 %v972, %v1320
        %v1322 = vsub.f32 %v1319, %v1321
        %v1323 = vmax.f32 %v1322, 0.0
        %v1324 = vstv %s1317
        %v1325 = vmin.f32 %v975, %v1324
        %v1326 = vstv %s1313
        %v1327 = vmax.f32 %v973, %v1326
        %v1328 = vsub.f32 %v1325, %v1327
        %v1329 = vmax.f32 %v1328, 0.0
        %v1330 = vmul.f32 %v1323, %v1329
        %s1331 = ssub.f32 %s1315, %s1311
        %s1332 = ssub.f32 %s1317, %s1313
        %s1333 = smul.f32 %s1331, %s1332
        %v1334 = vstv %s1333
        %v1335 = vadd.f32 %v1334, %v166
        %v1336 = vsub.f32 %v1335, %v1330
        %v1337 = vrcp.pop %v1336
        %v1338 = vmul.f32 %v1336, %v1337
        %v1339 = vsub.f32 2.0, %v1338
        %v1340 = vmul.f32 %v1337, %v1339
        %v1341 = vmul.f32 %v1330, %v1340
        %1342 = vmax.xlane.f32.xlu0 %v1341
        %v1343 = vpop.xlane.xlu0 %1342
        %v1344 = vrot.slane %v1343, 4
        %v1345 = vmax.f32 %v1343, %v1344
        %v1346 = vrot.slane %v1345, 2
        %v1347 = vmax.f32 %v1345, %v1346
        %v1348 = vrot.slane %v1347, 1
        %v1349 = vmax.f32 %v1347, %v1348
        %s1350 = vtos %v1349
        %p1351 = scmp.gt.f32.partialorder %s1350, 0.0
        %s1352 = smin.f32 %s1350, 0.5
        %s1353 = scalar_select %p1351, %s1352, 0.5
        %p1354 = scmp.gt.s32.totalorder %s964, 7
        %s1355 = scalar_select %p1354, %s1353, inf
        %v1356 = vstv %s1355
        %vm1357 = vcmp.ge.f32.partialorder %v1341, %v1356
        %vm1358 = vmor %vm1309, %vm1357
        %v1359 = vsel %vm1358, 1, 0
        %s1360 = scalar_lea.vmem %s155, 16 [#allocation9]
        %1361 = vst [vmem:[%s1360] sm:$0xff] %v1359
        %s1362 = sadd.s32 %s167, 3
        %s1363 = smul.u32 %s1362, 32
        %s1364 = sld [smem:[#allocation3 + %s1362]]
        %s1365 = sld [smem:[#allocation4 + %s1363]]
        %s1366 = sadd.s32 %s1363, 1
        %s1367 = sld [smem:[#allocation4 + %s1366]]
        %s1368 = sadd.s32 %s1363, 2
        %s1369 = sld [smem:[#allocation4 + %s1368]]
        %s1370 = sadd.s32 %s1363, 3
        %s1371 = sld [smem:[#allocation4 + %s1370]]
        %v1372 = vld [vmem:[#allocation8] sm:$0xff]
        %v1373 = vld [vmem:[%s163] sm:$0xff]
        %v1374 = vld [vmem:[%s157] sm:$0xff]
        %v1375 = vld [vmem:[%s161] sm:$0xff]
        %v1376 = vstv %s1369
        %v1377 = vmin.f32 %v1374, %v1376
        %v1378 = vstv %s1365
        %v1379 = vmax.f32 %v1372, %v1378
        %v1380 = vsub.f32 %v1377, %v1379
        %v1381 = vmax.f32 %v1380, 0.0
        %v1382 = vstv %s1371
        %v1383 = vmin.f32 %v1375, %v1382
        %v1384 = vstv %s1367
        %v1385 = vmax.f32 %v1373, %v1384
        %v1386 = vsub.f32 %v1383, %v1385
        %v1387 = vmax.f32 %v1386, 0.0
        %v1388 = vmul.f32 %v1381, %v1387
        %s1389 = ssub.f32 %s1369, %s1365
        %s1390 = ssub.f32 %s1371, %s1367
        %s1391 = smul.f32 %s1389, %s1390
        %v1392 = vstv %s1391
        %v1393 = vadd.f32 %v1392, %v166
        %v1394 = vsub.f32 %v1393, %v1388
        %v1395 = vrcp.pop %v1394
        %v1396 = vmul.f32 %v1394, %v1395
        %v1397 = vsub.f32 2.0, %v1396
        %v1398 = vmul.f32 %v1395, %v1397
        %v1399 = vmul.f32 %v1388, %v1398
        %1400 = vmax.xlane.f32.xlu0 %v1399
        %v1401 = vpop.xlane.xlu0 %1400
        %v1402 = vrot.slane %v1401, 4
        %v1403 = vmax.f32 %v1401, %v1402
        %v1404 = vrot.slane %v1403, 2
        %v1405 = vmax.f32 %v1403, %v1404
        %v1406 = vrot.slane %v1405, 1
        %v1407 = vmax.f32 %v1405, %v1406
        %s1408 = vtos %v1407
        %p1409 = scmp.gt.f32.partialorder %s1408, 0.0
        %s1410 = smin.f32 %s1408, 0.5
        %s1411 = scalar_select %p1409, %s1410, 0.5
        %p1412 = scmp.gt.s32.totalorder %s1364, 0
        %s1413 = scalar_select %p1412, %s1411, inf
        %v1414 = vstv %s1413
        %vm1415 = vcmp.ge.f32.partialorder %v1399, %v1414
        %s1416 = sadd.s32 %s1363, 4
        %s1417 = sld [smem:[#allocation4 + %s1416]]
        %s1418 = sadd.s32 %s1363, 5
        %s1419 = sld [smem:[#allocation4 + %s1418]]
        %s1420 = sadd.s32 %s1363, 6
        %s1421 = sld [smem:[#allocation4 + %s1420]]
        %s1422 = sadd.s32 %s1363, 7
        %s1423 = sld [smem:[#allocation4 + %s1422]]
        %v1424 = vstv %s1421
        %v1425 = vmin.f32 %v1374, %v1424
        %v1426 = vstv %s1417
        %v1427 = vmax.f32 %v1372, %v1426
        %v1428 = vsub.f32 %v1425, %v1427
        %v1429 = vmax.f32 %v1428, 0.0
        %v1430 = vstv %s1423
        %v1431 = vmin.f32 %v1375, %v1430
        %v1432 = vstv %s1419
        %v1433 = vmax.f32 %v1373, %v1432
        %v1434 = vsub.f32 %v1431, %v1433
        %v1435 = vmax.f32 %v1434, 0.0
        %v1436 = vmul.f32 %v1429, %v1435
        %s1437 = ssub.f32 %s1421, %s1417
        %s1438 = ssub.f32 %s1423, %s1419
        %s1439 = smul.f32 %s1437, %s1438
        %v1440 = vstv %s1439
        %v1441 = vadd.f32 %v1440, %v166
        %v1442 = vsub.f32 %v1441, %v1436
        %v1443 = vrcp.pop %v1442
        %v1444 = vmul.f32 %v1442, %v1443
        %v1445 = vsub.f32 2.0, %v1444
        %v1446 = vmul.f32 %v1443, %v1445
        %v1447 = vmul.f32 %v1436, %v1446
        %1448 = vmax.xlane.f32.xlu0 %v1447
        %v1449 = vpop.xlane.xlu0 %1448
        %v1450 = vrot.slane %v1449, 4
        %v1451 = vmax.f32 %v1449, %v1450
        %v1452 = vrot.slane %v1451, 2
        %v1453 = vmax.f32 %v1451, %v1452
        %v1454 = vrot.slane %v1453, 1
        %v1455 = vmax.f32 %v1453, %v1454
        %s1456 = vtos %v1455
        %p1457 = scmp.gt.f32.partialorder %s1456, 0.0
        %s1458 = smin.f32 %s1456, 0.5
        %s1459 = scalar_select %p1457, %s1458, 0.5
        %p1460 = scmp.gt.s32.totalorder %s1364, 1
        %s1461 = scalar_select %p1460, %s1459, inf
        %v1462 = vstv %s1461
        %vm1463 = vcmp.ge.f32.partialorder %v1447, %v1462
        %vm1464 = vmor %vm1415, %vm1463
        %s1465 = sadd.s32 %s1363, 8
        %s1466 = sld [smem:[#allocation4 + %s1465]]
        %s1467 = sadd.s32 %s1363, 9
        %s1468 = sld [smem:[#allocation4 + %s1467]]
        %s1469 = sadd.s32 %s1363, 10
        %s1470 = sld [smem:[#allocation4 + %s1469]]
        %s1471 = sadd.s32 %s1363, 11
        %s1472 = sld [smem:[#allocation4 + %s1471]]
        %v1473 = vstv %s1470
        %v1474 = vmin.f32 %v1374, %v1473
        %v1475 = vstv %s1466
        %v1476 = vmax.f32 %v1372, %v1475
        %v1477 = vsub.f32 %v1474, %v1476
        %v1478 = vmax.f32 %v1477, 0.0
        %v1479 = vstv %s1472
        %v1480 = vmin.f32 %v1375, %v1479
        %v1481 = vstv %s1468
        %v1482 = vmax.f32 %v1373, %v1481
        %v1483 = vsub.f32 %v1480, %v1482
        %v1484 = vmax.f32 %v1483, 0.0
        %v1485 = vmul.f32 %v1478, %v1484
        %s1486 = ssub.f32 %s1470, %s1466
        %s1487 = ssub.f32 %s1472, %s1468
        %s1488 = smul.f32 %s1486, %s1487
        %v1489 = vstv %s1488
        %v1490 = vadd.f32 %v1489, %v166
        %v1491 = vsub.f32 %v1490, %v1485
        %v1492 = vrcp.pop %v1491
        %v1493 = vmul.f32 %v1491, %v1492
        %v1494 = vsub.f32 2.0, %v1493
        %v1495 = vmul.f32 %v1492, %v1494
        %v1496 = vmul.f32 %v1485, %v1495
        %1497 = vmax.xlane.f32.xlu0 %v1496
        %v1498 = vpop.xlane.xlu0 %1497
        %v1499 = vrot.slane %v1498, 4
        %v1500 = vmax.f32 %v1498, %v1499
        %v1501 = vrot.slane %v1500, 2
        %v1502 = vmax.f32 %v1500, %v1501
        %v1503 = vrot.slane %v1502, 1
        %v1504 = vmax.f32 %v1502, %v1503
        %s1505 = vtos %v1504
        %p1506 = scmp.gt.f32.partialorder %s1505, 0.0
        %s1507 = smin.f32 %s1505, 0.5
        %s1508 = scalar_select %p1506, %s1507, 0.5
        %p1509 = scmp.gt.s32.totalorder %s1364, 2
        %s1510 = scalar_select %p1509, %s1508, inf
        %v1511 = vstv %s1510
        %vm1512 = vcmp.ge.f32.partialorder %v1496, %v1511
        %vm1513 = vmor %vm1464, %vm1512
        %s1514 = sadd.s32 %s1363, 12
        %s1515 = sld [smem:[#allocation4 + %s1514]]
        %s1516 = sadd.s32 %s1363, 13
        %s1517 = sld [smem:[#allocation4 + %s1516]]
        %s1518 = sadd.s32 %s1363, 14
        %s1519 = sld [smem:[#allocation4 + %s1518]]
        %s1520 = sadd.s32 %s1363, 15
        %s1521 = sld [smem:[#allocation4 + %s1520]]
        %v1522 = vstv %s1519
        %v1523 = vmin.f32 %v1374, %v1522
        %v1524 = vstv %s1515
        %v1525 = vmax.f32 %v1372, %v1524
        %v1526 = vsub.f32 %v1523, %v1525
        %v1527 = vmax.f32 %v1526, 0.0
        %v1528 = vstv %s1521
        %v1529 = vmin.f32 %v1375, %v1528
        %v1530 = vstv %s1517
        %v1531 = vmax.f32 %v1373, %v1530
        %v1532 = vsub.f32 %v1529, %v1531
        %v1533 = vmax.f32 %v1532, 0.0
        %v1534 = vmul.f32 %v1527, %v1533
        %s1535 = ssub.f32 %s1519, %s1515
        %s1536 = ssub.f32 %s1521, %s1517
        %s1537 = smul.f32 %s1535, %s1536
        %v1538 = vstv %s1537
        %v1539 = vadd.f32 %v1538, %v166
        %v1540 = vsub.f32 %v1539, %v1534
        %v1541 = vrcp.pop %v1540
        %v1542 = vmul.f32 %v1540, %v1541
        %v1543 = vsub.f32 2.0, %v1542
        %v1544 = vmul.f32 %v1541, %v1543
        %v1545 = vmul.f32 %v1534, %v1544
        %1546 = vmax.xlane.f32.xlu0 %v1545
        %v1547 = vpop.xlane.xlu0 %1546
        %v1548 = vrot.slane %v1547, 4
        %v1549 = vmax.f32 %v1547, %v1548
        %v1550 = vrot.slane %v1549, 2
        %v1551 = vmax.f32 %v1549, %v1550
        %v1552 = vrot.slane %v1551, 1
        %v1553 = vmax.f32 %v1551, %v1552
        %s1554 = vtos %v1553
        %p1555 = scmp.gt.f32.partialorder %s1554, 0.0
        %s1556 = smin.f32 %s1554, 0.5
        %s1557 = scalar_select %p1555, %s1556, 0.5
        %p1558 = scmp.gt.s32.totalorder %s1364, 3
        %s1559 = scalar_select %p1558, %s1557, inf
        %v1560 = vstv %s1559
        %vm1561 = vcmp.ge.f32.partialorder %v1545, %v1560
        %vm1562 = vmor %vm1513, %vm1561
        %s1563 = sadd.s32 %s1363, 16
        %s1564 = sld [smem:[#allocation4 + %s1563]]
        %s1565 = sadd.s32 %s1363, 17
        %s1566 = sld [smem:[#allocation4 + %s1565]]
        %s1567 = sadd.s32 %s1363, 18
        %s1568 = sld [smem:[#allocation4 + %s1567]]
        %s1569 = sadd.s32 %s1363, 19
        %s1570 = sld [smem:[#allocation4 + %s1569]]
        %v1571 = vstv %s1568
        %v1572 = vmin.f32 %v1374, %v1571
        %v1573 = vstv %s1564
        %v1574 = vmax.f32 %v1372, %v1573
        %v1575 = vsub.f32 %v1572, %v1574
        %v1576 = vmax.f32 %v1575, 0.0
        %v1577 = vstv %s1570
        %v1578 = vmin.f32 %v1375, %v1577
        %v1579 = vstv %s1566
        %v1580 = vmax.f32 %v1373, %v1579
        %v1581 = vsub.f32 %v1578, %v1580
        %v1582 = vmax.f32 %v1581, 0.0
        %v1583 = vmul.f32 %v1576, %v1582
        %s1584 = ssub.f32 %s1568, %s1564
        %s1585 = ssub.f32 %s1570, %s1566
        %s1586 = smul.f32 %s1584, %s1585
        %v1587 = vstv %s1586
        %v1588 = vadd.f32 %v1587, %v166
        %v1589 = vsub.f32 %v1588, %v1583
        %v1590 = vrcp.pop %v1589
        %v1591 = vmul.f32 %v1589, %v1590
        %v1592 = vsub.f32 2.0, %v1591
        %v1593 = vmul.f32 %v1590, %v1592
        %v1594 = vmul.f32 %v1583, %v1593
        %1595 = vmax.xlane.f32.xlu0 %v1594
        %v1596 = vpop.xlane.xlu0 %1595
        %v1597 = vrot.slane %v1596, 4
        %v1598 = vmax.f32 %v1596, %v1597
        %v1599 = vrot.slane %v1598, 2
        %v1600 = vmax.f32 %v1598, %v1599
        %v1601 = vrot.slane %v1600, 1
        %v1602 = vmax.f32 %v1600, %v1601
        %s1603 = vtos %v1602
        %p1604 = scmp.gt.f32.partialorder %s1603, 0.0
        %s1605 = smin.f32 %s1603, 0.5
        %s1606 = scalar_select %p1604, %s1605, 0.5
        %p1607 = scmp.gt.s32.totalorder %s1364, 4
        %s1608 = scalar_select %p1607, %s1606, inf
        %v1609 = vstv %s1608
        %vm1610 = vcmp.ge.f32.partialorder %v1594, %v1609
        %vm1611 = vmor %vm1562, %vm1610
        %s1612 = sadd.s32 %s1363, 20
        %s1613 = sld [smem:[#allocation4 + %s1612]]
        %s1614 = sadd.s32 %s1363, 21
        %s1615 = sld [smem:[#allocation4 + %s1614]]
        %s1616 = sadd.s32 %s1363, 22
        %s1617 = sld [smem:[#allocation4 + %s1616]]
        %s1618 = sadd.s32 %s1363, 23
        %s1619 = sld [smem:[#allocation4 + %s1618]]
        %v1620 = vstv %s1617
        %v1621 = vmin.f32 %v1374, %v1620
        %v1622 = vstv %s1613
        %v1623 = vmax.f32 %v1372, %v1622
        %v1624 = vsub.f32 %v1621, %v1623
        %v1625 = vmax.f32 %v1624, 0.0
        %v1626 = vstv %s1619
        %v1627 = vmin.f32 %v1375, %v1626
        %v1628 = vstv %s1615
        %v1629 = vmax.f32 %v1373, %v1628
        %v1630 = vsub.f32 %v1627, %v1629
        %v1631 = vmax.f32 %v1630, 0.0
        %v1632 = vmul.f32 %v1625, %v1631
        %s1633 = ssub.f32 %s1617, %s1613
        %s1634 = ssub.f32 %s1619, %s1615
        %s1635 = smul.f32 %s1633, %s1634
        %v1636 = vstv %s1635
        %v1637 = vadd.f32 %v1636, %v166
        %v1638 = vsub.f32 %v1637, %v1632
        %v1639 = vrcp.pop %v1638
        %v1640 = vmul.f32 %v1638, %v1639
        %v1641 = vsub.f32 2.0, %v1640
        %v1642 = vmul.f32 %v1639, %v1641
        %v1643 = vmul.f32 %v1632, %v1642
        %1644 = vmax.xlane.f32.xlu0 %v1643
        %v1645 = vpop.xlane.xlu0 %1644
        %v1646 = vrot.slane %v1645, 4
        %v1647 = vmax.f32 %v1645, %v1646
        %v1648 = vrot.slane %v1647, 2
        %v1649 = vmax.f32 %v1647, %v1648
        %v1650 = vrot.slane %v1649, 1
        %v1651 = vmax.f32 %v1649, %v1650
        %s1652 = vtos %v1651
        %p1653 = scmp.gt.f32.partialorder %s1652, 0.0
        %s1654 = smin.f32 %s1652, 0.5
        %s1655 = scalar_select %p1653, %s1654, 0.5
        %p1656 = scmp.gt.s32.totalorder %s1364, 5
        %s1657 = scalar_select %p1656, %s1655, inf
        %v1658 = vstv %s1657
        %vm1659 = vcmp.ge.f32.partialorder %v1643, %v1658
        %vm1660 = vmor %vm1611, %vm1659
        %s1661 = sadd.s32 %s1363, 24
        %s1662 = sld [smem:[#allocation4 + %s1661]]
        %s1663 = sadd.s32 %s1363, 25
        %s1664 = sld [smem:[#allocation4 + %s1663]]
        %s1665 = sadd.s32 %s1363, 26
        %s1666 = sld [smem:[#allocation4 + %s1665]]
        %s1667 = sadd.s32 %s1363, 27
        %s1668 = sld [smem:[#allocation4 + %s1667]]
        %v1669 = vstv %s1666
        %v1670 = vmin.f32 %v1374, %v1669
        %v1671 = vstv %s1662
        %v1672 = vmax.f32 %v1372, %v1671
        %v1673 = vsub.f32 %v1670, %v1672
        %v1674 = vmax.f32 %v1673, 0.0
        %v1675 = vstv %s1668
        %v1676 = vmin.f32 %v1375, %v1675
        %v1677 = vstv %s1664
        %v1678 = vmax.f32 %v1373, %v1677
        %v1679 = vsub.f32 %v1676, %v1678
        %v1680 = vmax.f32 %v1679, 0.0
        %v1681 = vmul.f32 %v1674, %v1680
        %s1682 = ssub.f32 %s1666, %s1662
        %s1683 = ssub.f32 %s1668, %s1664
        %s1684 = smul.f32 %s1682, %s1683
        %v1685 = vstv %s1684
        %v1686 = vadd.f32 %v1685, %v166
        %v1687 = vsub.f32 %v1686, %v1681
        %v1688 = vrcp.pop %v1687
        %v1689 = vmul.f32 %v1687, %v1688
        %v1690 = vsub.f32 2.0, %v1689
        %v1691 = vmul.f32 %v1688, %v1690
        %v1692 = vmul.f32 %v1681, %v1691
        %1693 = vmax.xlane.f32.xlu0 %v1692
        %v1694 = vpop.xlane.xlu0 %1693
        %v1695 = vrot.slane %v1694, 4
        %v1696 = vmax.f32 %v1694, %v1695
        %v1697 = vrot.slane %v1696, 2
        %v1698 = vmax.f32 %v1696, %v1697
        %v1699 = vrot.slane %v1698, 1
        %v1700 = vmax.f32 %v1698, %v1699
        %s1701 = vtos %v1700
        %p1702 = scmp.gt.f32.partialorder %s1701, 0.0
        %s1703 = smin.f32 %s1701, 0.5
        %s1704 = scalar_select %p1702, %s1703, 0.5
        %p1705 = scmp.gt.s32.totalorder %s1364, 6
        %s1706 = scalar_select %p1705, %s1704, inf
        %v1707 = vstv %s1706
        %vm1708 = vcmp.ge.f32.partialorder %v1692, %v1707
        %vm1709 = vmor %vm1660, %vm1708
        %s1710 = sadd.s32 %s1363, 28
        %s1711 = sld [smem:[#allocation4 + %s1710]]
        %s1712 = sadd.s32 %s1363, 29
        %s1713 = sld [smem:[#allocation4 + %s1712]]
        %s1714 = sadd.s32 %s1363, 30
        %s1715 = sld [smem:[#allocation4 + %s1714]]
        %s1716 = sadd.s32 %s1363, 31
        %s1717 = sld [smem:[#allocation4 + %s1716]]
        %v1718 = vstv %s1715
        %v1719 = vmin.f32 %v1374, %v1718
        %v1720 = vstv %s1711
        %v1721 = vmax.f32 %v1372, %v1720
        %v1722 = vsub.f32 %v1719, %v1721
        %v1723 = vmax.f32 %v1722, 0.0
        %v1724 = vstv %s1717
        %v1725 = vmin.f32 %v1375, %v1724
        %v1726 = vstv %s1713
        %v1727 = vmax.f32 %v1373, %v1726
        %v1728 = vsub.f32 %v1725, %v1727
        %v1729 = vmax.f32 %v1728, 0.0
        %v1730 = vmul.f32 %v1723, %v1729
        %s1731 = ssub.f32 %s1715, %s1711
        %s1732 = ssub.f32 %s1717, %s1713
        %s1733 = smul.f32 %s1731, %s1732
        %v1734 = vstv %s1733
        %v1735 = vadd.f32 %v1734, %v166
        %v1736 = vsub.f32 %v1735, %v1730
        %v1737 = vrcp.pop %v1736
        %v1738 = vmul.f32 %v1736, %v1737
        %v1739 = vsub.f32 2.0, %v1738
        %v1740 = vmul.f32 %v1737, %v1739
        %v1741 = vmul.f32 %v1730, %v1740
        %1742 = vmax.xlane.f32.xlu0 %v1741
        %v1743 = vpop.xlane.xlu0 %1742
        %v1744 = vrot.slane %v1743, 4
        %v1745 = vmax.f32 %v1743, %v1744
        %v1746 = vrot.slane %v1745, 2
        %v1747 = vmax.f32 %v1745, %v1746
        %v1748 = vrot.slane %v1747, 1
        %v1749 = vmax.f32 %v1747, %v1748
        %s1750 = vtos %v1749
        %p1751 = scmp.gt.f32.partialorder %s1750, 0.0
        %s1752 = smin.f32 %s1750, 0.5
        %s1753 = scalar_select %p1751, %s1752, 0.5
        %p1754 = scmp.gt.s32.totalorder %s1364, 7
        %s1755 = scalar_select %p1754, %s1753, inf
        %v1756 = vstv %s1755
        %vm1757 = vcmp.ge.f32.partialorder %v1741, %v1756
        %vm1758 = vmor %vm1709, %vm1757
        %v1759 = vsel %vm1758, 1, 0
        %s1760 = scalar_lea.vmem %s155, 24 [#allocation9]
        %1761 = vst [vmem:[%s1760] sm:$0xff] %v1759
        %s1762 = sand.u32 %s73, 1
        %s1763 = scalar_lea.sflag [#allocation6], %s1762
        %s1764 = sand.u32 %s73, 1
        %s1765 = smul.addr %s1764, 32
        %s1766 = scalar_lea.vmem [#allocation9], %s1765
        // Predicated region
        $region37: #{tpu_custom_call.1} parent=27 // pred_check
          %p1767 = pneg %p83
        $region38: #{tpu_custom_call.1} parent=27 // pred_check_branch
          %1769 = sbr.rel (%p1767) target = $region40
        $region39: #{tpu_custom_call.1} parent=27 // pred_region
          %s1770 = smul.u32 4, %s23
          %s1772 = ssub.s32 512, 512
          %1773 = vsyncadd %s1763, %s1772
          %s1774 = smul.addr %s1770, 128
          %s1775 = scalar_lea.hbm %s3, %s1774
          %s1776 = sshll.u32 %s1766, 4
          %s1777 = int_to_ptr.vmem [resolvable:$true] %s1776
          %1782 = dma.vmem_to_hbm [thread:$0]  %s1777, 512, %s1775, %s1763, 128, 128, 8
        $region40: #{tpu_custom_call.1} parent=27 // pred_fallthru
          _
      $region28: #{tpu_custom_call.1} parent=5 // pred_fallthru
        _
      %p1783 = scmp.le.s32.totalorder 2, %s18
      // Predicated region
      $region41: #{tpu_custom_call.1} parent=5 // pred_check
        %p1784 = pneg %p1783
      $region42: #{tpu_custom_call.1} parent=5 // pred_check_branch
        %1786 = sbr.rel (%p1784) target = $region44
      $region43: #{tpu_custom_call.1} parent=5 // pred_region
        %s1787 = ssub.s32 %s18, 2
        // Predicated region
        $region45: #{tpu_custom_call.1} parent=43 // pred_check
          %p1788 = pneg %p89
        $region46: #{tpu_custom_call.1} parent=43 // pred_check_branch
          %1790 = sbr.rel (%p1788) target = $region48
        $region47: #{tpu_custom_call.1} parent=43 // pred_region
          %s1791 = sand.u32 %s74, 1
          %s1792 = scalar_lea.sflag [#allocation6], %s1791
          %s1793 = sand.u32 %s74, 1
          %s1794 = smul.addr %s1793, 32
          %s1795 = scalar_lea.vmem [#allocation9], %s1794
          %1796 = dma.done %s1792, 512
        $region48: #{tpu_custom_call.1} parent=43 // pred_fallthru
          _
      $region44: #{tpu_custom_call.1} parent=5 // pred_fallthru
        _
    $region6: #{tpu_custom_call.1} parent=1 // loop_footer
      %s22 = sadd.s32 1, %s18
    $region7: #{tpu_custom_call.1} parent=1 // loop_footer_branch
      %17 = sbr.rel target = $region3
    $region8: #{tpu_custom_call.1} parent=1 // loop_exit
      _
    %1797 = vsyncpa [#allocation5], 1
    %s1798 = scalar_lea.sflag [#allocation5], 1
    %1799 = vsyncpa %s1798, 1
    %1800 = vsyncpa [#allocation6], 1
    %s1801 = scalar_lea.sflag [#allocation6], 1
    %1802 = vsyncpa %s1801, 1
    %1803 = vsyncpa [#allocation7], 1
    %s1804 = scalar_lea.sflag [#allocation7], 1
    %1805 = vsyncpa %s1804, 1

</llo_original>
